<compile_context>
chip_gen: v6e
topology: v6e:2x2x1
jax: 0.10.0
libtpu: 0.0.40
codegen_flags: <defaults>
</compile_context>

<pallas_src>
import math
from functools import partial

import jax
import jax.numpy as jnp
from jax import lax
from jax.experimental import pallas as pl
from jax.experimental.pallas import tpu as pltpu


# ----------------------------------------------------------------------------
# Config
# ----------------------------------------------------------------------------

class Config:
    hidden_size = 32
    num_heads = 4
    num_layers = 2
    max_sequence_length = 64
    layer_norm_eps = 1e-12
    initializer_range = 0.02
    state_decay_rate = 0.9


# ----------------------------------------------------------------------------
# Fused whole-model Pallas kernel (one grid step == one batch element)
# ----------------------------------------------------------------------------

def _layernorm(x, g, b, eps):
    mean = jnp.mean(x, axis=-1, keepdims=True)
    var = jnp.mean((x - mean) ** 2, axis=-1, keepdims=True)
    return (x - mean) * lax.rsqrt(var + eps) * g + b


def _gelu(y):
    # exact GELU (torch nn.GELU default)
    return 0.5 * y * (1.0 + lax.erf(y * (1.0 / math.sqrt(2.0))))


def _dala_kernel(pos_ref, x_ref,
                 wqkv_ref, bqkv_ref, wo_ref, bo_ref,
                 w1_ref, b1_ref, w2_ref, b2_ref,
                 lng_ref, lnb_ref, flng_ref, flnb_ref,
                 out_ref, *, num_layers, num_heads, eps, decay):
    S = x_ref.shape[1]
    H = x_ref.shape[2]
    dH = H // num_heads

    # hidden_states = input + pos_encoder[:, :S]
    h = x_ref[0].astype(jnp.float32) + pos_ref[0].astype(jnp.float32)   # [S, H]
    state = jnp.zeros((1, H), jnp.float32)                              # per-batch state

    for l in range(num_layers):                    # static unroll over layers
        # ---- fused QKV projection (scale pre-folded into Q weights) --------
        qkv = jnp.dot(h, wqkv_ref[l], preferred_element_type=jnp.float32)
        qkv = qkv + bqkv_ref[l]                    # [S, 3H]
        q = qkv[:, 0 * H:1 * H]
        k = qkv[:, 1 * H:2 * H]
        v = qkv[:, 2 * H:3 * H]

        # ---- multi-head attention (heads statically unrolled) --------------
        head_outs = []
        for hh in range(num_heads):
            qh = q[:, hh * dH:(hh + 1) * dH]       # [S, dH]
            kh = k[:, hh * dH:(hh + 1) * dH]
            vh = v[:, hh * dH:(hh + 1) * dH]
            # q @ k^T without an explicit transpose (contract last dims)
            s = lax.dot_general(qh, kh, (((1,), (1,)), ((), ())),
                                preferred_element_type=jnp.float32)      # [S, S]
            m = jnp.max(s, axis=-1, keepdims=True)
            p = jnp.exp(s - m)
            denom = jnp.sum(p, axis=-1, keepdims=True)
            p = p * pl.reciprocal(denom, approx=True)   # EUP reciprocal
            head_outs.append(jnp.dot(p, vh, preferred_element_type=jnp.float32))
        o = jnp.concatenate(head_outs, axis=-1)    # [S, H]

        attn = jnp.dot(o, wo_ref[l], preferred_element_type=jnp.float32)
        attn = attn + bo_ref[l]                    # [S, H]

        # ---- recurrent state update (InfiniteAttention approximation) ------
        new_state = decay * state + jnp.mean(attn, axis=0, keepdims=True)   # [1, H]
        attn = attn + new_state
        state = new_state

        # ---- feed-forward: Linear -> GELU -> Linear -------------------------
        ffh = jnp.dot(attn, w1_ref[l], preferred_element_type=jnp.float32)
        ffh = _gelu(ffh + b1_ref[l])               # [S, 4H]
        ff = jnp.dot(ffh, w2_ref[l], preferred_element_type=jnp.float32)
        ff = ff + b2_ref[l]                        # [S, H]

        # ---- residual add + LayerNorm ---------------------------------------
        h = _layernorm(ff + attn, lng_ref[l], lnb_ref[l], eps)

    # ---- final LayerNorm (no dummy zeros operand) ---------------------------
    out = _layernorm(h, flng_ref[...], flnb_ref[...], eps)
    out_ref[0] = out.astype(out_ref.dtype)


def dala_forward(params, x, cfg):
    B, S, H = x.shape
    L = cfg.num_layers

    kernel = partial(_dala_kernel,
                     num_layers=L,
                     num_heads=cfg.num_heads,
                     eps=cfg.layer_norm_eps,
                     decay=cfg.state_decay_rate)

    def resident(shape):
        # same block index every grid step -> fetched into VMEM once, stays resident
        return pl.BlockSpec(shape, lambda b, _n=len(shape): (0,) * _n)

    per_batch = pl.BlockSpec((1, S, H), lambda b: (b, 0, 0))

    return pl.pallas_call(
        kernel,
        out_shape=jax.ShapeDtypeStruct((B, S, H), x.dtype),
        grid=(B,),
        in_specs=[
            resident((1, S, H)),                   # pos_encoder[:, :S]
            per_batch,                             # x
            resident((L, H, 3 * H)),               # wqkv (scale folded into Q)
            resident((L, 1, 3 * H)),               # bqkv
            resident((L, H, H)),                   # wo
            resident((L, 1, H)),                   # bo
            resident((L, H, 4 * H)),               # w1
            resident((L, 1, 4 * H)),               # b1
            resident((L, 4 * H, H)),               # w2
            resident((L, 1, H)),                   # b2
            resident((L, 1, H)),                   # per-layer LN gamma
            resident((L, 1, H)),                   # per-layer LN beta
            resident((1, H)),                      # final LN gamma
            resident((1, H)),                      # final LN beta
        ],
        out_specs=per_batch,
        compiler_params=pltpu.CompilerParams(
            dimension_semantics=("parallel",)),    # batch axis across TCs (v7x)
    )(params["pos"][:, :S, :], x,
      params["wqkv"], params["bqkv"], params["wo"], params["bo"],
      params["w1"], params["b1"], params["w2"], params["b2"],
      params["ln_g"], params["ln_b"], params["fln_g"], params["fln_b"])


# ----------------------------------------------------------------------------
# Parameters (deterministic synthetic init, matching torch _init_weights)
# ----------------------------------------------------------------------------

def init_params(key, cfg):
    H = cfg.hidden_size
    L = cfg.num_layers
    scale = 1.0 / math.sqrt(H // cfg.num_heads)

    def lin(k, din, dout):
        # torch: weight ~ N(0, initializer_range), bias = 0; stored as [in, out]
        w = cfg.initializer_range * jax.random.normal(k, (din, dout), jnp.float32)
        b = jnp.zeros((dout,), jnp.float32)
        return w, b

    wqkv, bqkv, wo, bo, w1, b1, w2, b2, lng, lnb = ([] for _ in range(10))
    for _ in range(L):
        key, *ks = jax.random.split(key, 7)
        wq, bq = lin(ks[0], H, H)
        wk, bk = lin(ks[1], H, H)
        wv, bv = lin(ks[2], H, H)
        # fuse QKV and fold the 1/sqrt(dH) attention scale into the Q slice
        wqkv.append(jnp.concatenate([wq * scale, wk, wv], axis=1))
        bqkv.append(jnp.concatenate([bq * scale, bk, bv]))
        w, b = lin(ks[3], H, H);      wo.append(w); bo.append(b)
        w, b = lin(ks[4], H, 4 * H);  w1.append(w); b1.append(b)
        w, b = lin(ks[5], 4 * H, H);  w2.append(w); b2.append(b)
        lng.append(jnp.ones((H,), jnp.float32))
        lnb.append(jnp.zeros((H,), jnp.float32))

    stack = lambda xs: jnp.stack(xs, axis=0)
    return {
        "pos":  jnp.zeros((1, cfg.max_sequence_length, H), jnp.float32),
        "wqkv": stack(wqkv), "bqkv": stack(bqkv)[:, None, :],
        "wo":   stack(wo),   "bo":   stack(bo)[:, None, :],
        "w1":   stack(w1),   "b1":   stack(b1)[:, None, :],
        "w2":   stack(w2),   "b2":   stack(b2)[:, None, :],
        "ln_g": stack(lng)[:, None, :], "ln_b": stack(lnb)[:, None, :],
        "fln_g": jnp.ones((1, H), jnp.float32),
        "fln_b": jnp.zeros((1, H), jnp.float32),
    }


# ----------------------------------------------------------------------------

if __name__ == "__main__":
    cfg = Config()
    key = jax.random.PRNGKey(0)
    kp, kx = jax.random.split(key)

    params = init_params(kp, cfg)

    B, S, H = 2, 8, cfg.hidden_size
    # "input_ids" are already hidden-dim float embeddings in the reference forward.
    x = jax.random.normal(kx, (B, S, H), jnp.float32)

    fwd = jax.jit(partial(dala_forward, cfg=cfg))
    out = fwd(params, x)
    jax.block_until_ready(out)

    assert out.shape == (B, S, H)
    assert jnp.all(jnp.isfinite(out))
    print("KERNEL_OK")
</pallas_src>

<mosaic_0001>
module attributes {stable_mosaic.version = 11 : i64} {
  func.func @_dala_kernel(%arg0: i32, %arg1: memref<1x8x32xf32, #tpu.memory_space<vmem>>, %arg2: memref<1x8x32xf32, #tpu.memory_space<vmem>>, %arg3: memref<2x32x96xf32, #tpu.memory_space<vmem>>, %arg4: memref<2x1x96xf32, #tpu.memory_space<vmem>>, %arg5: memref<2x32x32xf32, #tpu.memory_space<vmem>>, %arg6: memref<2x1x32xf32, #tpu.memory_space<vmem>>, %arg7: memref<2x32x128xf32, #tpu.memory_space<vmem>>, %arg8: memref<2x1x128xf32, #tpu.memory_space<vmem>>, %arg9: memref<2x128x32xf32, #tpu.memory_space<vmem>>, %arg10: memref<2x1x32xf32, #tpu.memory_space<vmem>>, %arg11: memref<2x1x32xf32, #tpu.memory_space<vmem>>, %arg12: memref<2x1x32xf32, #tpu.memory_space<vmem>>, %arg13: memref<1x32xf32, #tpu.memory_space<vmem>>, %arg14: memref<1x32xf32, #tpu.memory_space<vmem>>, %arg15: memref<1x8x32xf32, #tpu.memory_space<vmem>>) attributes {dimension_semantics = [#tpu.dimension_semantics<parallel>], iteration_bounds = array<i64: 2>, scalar_prefetch = 0 : i64, scratch_operands = 0 : i64, tpu.core_type = #tpu.core_type<tc>, window_params = [{pipeline_mode = #tpu.pipeline_mode<synchronous>, transform_indices = @transform_0, window_bounds = array<i64: 1, 8, 32>}, {transform_indices = @transform_1, window_bounds = array<i64: 1, 8, 32>}, {pipeline_mode = #tpu.pipeline_mode<synchronous>, transform_indices = @transform_2, window_bounds = array<i64: 2, 32, 96>}, {pipeline_mode = #tpu.pipeline_mode<synchronous>, transform_indices = @transform_3, window_bounds = array<i64: 2, 1, 96>}, {pipeline_mode = #tpu.pipeline_mode<synchronous>, transform_indices = @transform_4, window_bounds = array<i64: 2, 32, 32>}, {pipeline_mode = #tpu.pipeline_mode<synchronous>, transform_indices = @transform_5, window_bounds = array<i64: 2, 1, 32>}, {pipeline_mode = #tpu.pipeline_mode<synchronous>, transform_indices = @transform_6, window_bounds = array<i64: 2, 32, 128>}, {pipeline_mode = #tpu.pipeline_mode<synchronous>, transform_indices = @transform_7, window_bounds = array<i64: 2, 1, 128>}, {pipeline_mode = #tpu.pipeline_mode<synchronous>, transform_indices = @transform_8, window_bounds = array<i64: 2, 128, 32>}, {pipeline_mode = #tpu.pipeline_mode<synchronous>, transform_indices = @transform_9, window_bounds = array<i64: 2, 1, 32>}, {pipeline_mode = #tpu.pipeline_mode<synchronous>, transform_indices = @transform_10, window_bounds = array<i64: 2, 1, 32>}, {pipeline_mode = #tpu.pipeline_mode<synchronous>, transform_indices = @transform_11, window_bounds = array<i64: 2, 1, 32>}, {pipeline_mode = #tpu.pipeline_mode<synchronous>, transform_indices = @transform_12, window_bounds = array<i64: 1, 32>}, {pipeline_mode = #tpu.pipeline_mode<synchronous>, transform_indices = @transform_13, window_bounds = array<i64: 1, 32>}, {transform_indices = @transform_14, window_bounds = array<i64: 1, 8, 32>}]} {
    %c0 = arith.constant 0 : index
    %c0_0 = arith.constant 0 : index
    %c0_1 = arith.constant 0 : index
    %0 = vector.load %arg2[%c0, %c0_0, %c0_1] : memref<1x8x32xf32, #tpu.memory_space<vmem>>, vector<1x8x32xf32>
    %1 = vector.shape_cast %0 : vector<1x8x32xf32> to vector<8x32xf32>
    %c0_2 = arith.constant 0 : index
    %c0_3 = arith.constant 0 : index
    %c0_4 = arith.constant 0 : index
    %2 = vector.load %arg1[%c0_2, %c0_3, %c0_4] : memref<1x8x32xf32, #tpu.memory_space<vmem>>, vector<1x8x32xf32>
    %3 = vector.shape_cast %2 : vector<1x8x32xf32> to vector<8x32xf32>
    %4 = arith.addf %1, %3 : vector<8x32xf32>
    %cst = arith.constant 0.000000e+00 : f32
    %5 = vector.broadcast %cst : f32 to vector<1x32xf32>
    %c0_5 = arith.constant 0 : index
    %c0_6 = arith.constant 0 : index
    %c0_7 = arith.constant 0 : index
    %6 = vector.load %arg3[%c0_5, %c0_6, %c0_7] : memref<2x32x96xf32, #tpu.memory_space<vmem>>, vector<1x32x96xf32>
    %7 = vector.shape_cast %6 : vector<1x32x96xf32> to vector<32x96xf32>
    %cst_8 = arith.constant dense<0.000000e+00> : vector<8x96xf32>
    %8 = tpu.matmul %4, %7, %cst_8 {dimension_numbers = #tpu.dot_dimension_numbers<[1], [0], [0], [1], [0, 0, 1, 1], [], []>} : vector<8x32xf32>, vector<32x96xf32>, vector<8x96xf32> -> vector<8x96xf32>
    %c0_9 = arith.constant 0 : index
    %c0_10 = arith.constant 0 : index
    %c0_11 = arith.constant 0 : index
    %9 = vector.load %arg4[%c0_9, %c0_10, %c0_11] : memref<2x1x96xf32, #tpu.memory_space<vmem>>, vector<1x1x96xf32>
    %10 = vector.shape_cast %9 : vector<1x1x96xf32> to vector<1x96xf32>
    %11 = vector.broadcast %10 : vector<1x96xf32> to vector<8x96xf32>
    %12 = arith.addf %8, %11 : vector<8x96xf32>
    %13 = vector.extract_strided_slice %12 {offsets = [0, 0], sizes = [8, 32], strides = [1, 1]} : vector<8x96xf32> to vector<8x32xf32>
    %14 = vector.extract_strided_slice %12 {offsets = [0, 32], sizes = [8, 32], strides = [1, 1]} : vector<8x96xf32> to vector<8x32xf32>
    %15 = vector.extract_strided_slice %12 {offsets = [0, 64], sizes = [8, 32], strides = [1, 1]} : vector<8x96xf32> to vector<8x32xf32>
    %16 = vector.extract_strided_slice %13 {offsets = [0, 0], sizes = [8, 8], strides = [1, 1]} : vector<8x32xf32> to vector<8x8xf32>
    %17 = vector.extract_strided_slice %14 {offsets = [0, 0], sizes = [8, 8], strides = [1, 1]} : vector<8x32xf32> to vector<8x8xf32>
    %18 = vector.extract_strided_slice %15 {offsets = [0, 0], sizes = [8, 8], strides = [1, 1]} : vector<8x32xf32> to vector<8x8xf32>
    %cst_12 = arith.constant dense<0.000000e+00> : vector<8x8xf32>
    %19 = tpu.matmul %16, %17, %cst_12 {dimension_numbers = #tpu.dot_dimension_numbers<[1], [1], [0], [0], [0, 0, 1, 0], [], []>} : vector<8x8xf32>, vector<8x8xf32>, vector<8x8xf32> -> vector<8x8xf32>
    %cst_13 = arith.constant dense<0xFF800000> : vector<8xf32>
    %20 = vector.multi_reduction <maximumf>, %19, %cst_13 [1] : vector<8x8xf32> to vector<8xf32>
    %21 = vector.shape_cast %20 : vector<8xf32> to vector<8x1xf32>
    %22 = vector.broadcast %21 : vector<8x1xf32> to vector<8x8xf32>
    %23 = arith.subf %19, %22 : vector<8x8xf32>
    %24 = math.exp %23 : vector<8x8xf32>
    %cst_14 = arith.constant dense<0.000000e+00> : vector<8xf32>
    %25 = vector.multi_reduction <add>, %24, %cst_14 [1] : vector<8x8xf32> to vector<8xf32>
    %26 = vector.shape_cast %25 : vector<8xf32> to vector<8x1xf32>
    %27 = tpu.reciprocal %26 {approx = true} : vector<8x1xf32> -> vector<8x1xf32>
    %28 = vector.broadcast %27 : vector<8x1xf32> to vector<8x8xf32>
    %29 = arith.mulf %24, %28 : vector<8x8xf32>
    %cst_15 = arith.constant dense<0.000000e+00> : vector<8x8xf32>
    %30 = tpu.matmul %29, %18, %cst_15 {dimension_numbers = #tpu.dot_dimension_numbers<[1], [0], [0], [1], [0, 0, 1, 1], [], []>} : vector<8x8xf32>, vector<8x8xf32>, vector<8x8xf32> -> vector<8x8xf32>
    %31 = vector.extract_strided_slice %13 {offsets = [0, 8], sizes = [8, 8], strides = [1, 1]} : vector<8x32xf32> to vector<8x8xf32>
    %32 = vector.extract_strided_slice %14 {offsets = [0, 8], sizes = [8, 8], strides = [1, 1]} : vector<8x32xf32> to vector<8x8xf32>
    %33 = vector.extract_strided_slice %15 {offsets = [0, 8], sizes = [8, 8], strides = [1, 1]} : vector<8x32xf32> to vector<8x8xf32>
    %cst_16 = arith.constant dense<0.000000e+00> : vector<8x8xf32>
    %34 = tpu.matmul %31, %32, %cst_16 {dimension_numbers = #tpu.dot_dimension_numbers<[1], [1], [0], [0], [0, 0, 1, 0], [], []>} : vector<8x8xf32>, vector<8x8xf32>, vector<8x8xf32> -> vector<8x8xf32>
    %cst_17 = arith.constant dense<0xFF800000> : vector<8xf32>
    %35 = vector.multi_reduction <maximumf>, %34, %cst_17 [1] : vector<8x8xf32> to vector<8xf32>
    %36 = vector.shape_cast %35 : vector<8xf32> to vector<8x1xf32>
    %37 = vector.broadcast %36 : vector<8x1xf32> to vector<8x8xf32>
    %38 = arith.subf %34, %37 : vector<8x8xf32>
    %39 = math.exp %38 : vector<8x8xf32>
    %cst_18 = arith.constant dense<0.000000e+00> : vector<8xf32>
    %40 = vector.multi_reduction <add>, %39, %cst_18 [1] : vector<8x8xf32> to vector<8xf32>
    %41 = vector.shape_cast %40 : vector<8xf32> to vector<8x1xf32>
    %42 = tpu.reciprocal %41 {approx = true} : vector<8x1xf32> -> vector<8x1xf32>
    %43 = vector.broadcast %42 : vector<8x1xf32> to vector<8x8xf32>
    %44 = arith.mulf %39, %43 : vector<8x8xf32>
    %cst_19 = arith.constant dense<0.000000e+00> : vector<8x8xf32>
    %45 = tpu.matmul %44, %33, %cst_19 {dimension_numbers = #tpu.dot_dimension_numbers<[1], [0], [0], [1], [0, 0, 1, 1], [], []>} : vector<8x8xf32>, vector<8x8xf32>, vector<8x8xf32> -> vector<8x8xf32>
    %46 = vector.extract_strided_slice %13 {offsets = [0, 16], sizes = [8, 8], strides = [1, 1]} : vector<8x32xf32> to vector<8x8xf32>
    %47 = vector.extract_strided_slice %14 {offsets = [0, 16], sizes = [8, 8], strides = [1, 1]} : vector<8x32xf32> to vector<8x8xf32>
    %48 = vector.extract_strided_slice %15 {offsets = [0, 16], sizes = [8, 8], strides = [1, 1]} : vector<8x32xf32> to vector<8x8xf32>
    %cst_20 = arith.constant dense<0.000000e+00> : vector<8x8xf32>
    %49 = tpu.matmul %46, %47, %cst_20 {dimension_numbers = #tpu.dot_dimension_numbers<[1], [1], [0], [0], [0, 0, 1, 0], [], []>} : vector<8x8xf32>, vector<8x8xf32>, vector<8x8xf32> -> vector<8x8xf32>
    %cst_21 = arith.constant dense<0xFF800000> : vector<8xf32>
    %50 = vector.multi_reduction <maximumf>, %49, %cst_21 [1] : vector<8x8xf32> to vector<8xf32>
    %51 = vector.shape_cast %50 : vector<8xf32> to vector<8x1xf32>
    %52 = vector.broadcast %51 : vector<8x1xf32> to vector<8x8xf32>
    %53 = arith.subf %49, %52 : vector<8x8xf32>
    %54 = math.exp %53 : vector<8x8xf32>
    %cst_22 = arith.constant dense<0.000000e+00> : vector<8xf32>
    %55 = vector.multi_reduction <add>, %54, %cst_22 [1] : vector<8x8xf32> to vector<8xf32>
    %56 = vector.shape_cast %55 : vector<8xf32> to vector<8x1xf32>
    %57 = tpu.reciprocal %56 {approx = true} : vector<8x1xf32> -> vector<8x1xf32>
    %58 = vector.broadcast %57 : vector<8x1xf32> to vector<8x8xf32>
    %59 = arith.mulf %54, %58 : vector<8x8xf32>
    %cst_23 = arith.constant dense<0.000000e+00> : vector<8x8xf32>
    %60 = tpu.matmul %59, %48, %cst_23 {dimension_numbers = #tpu.dot_dimension_numbers<[1], [0], [0], [1], [0, 0, 1, 1], [], []>} : vector<8x8xf32>, vector<8x8xf32>, vector<8x8xf32> -> vector<8x8xf32>
    %61 = vector.extract_strided_slice %13 {offsets = [0, 24], sizes = [8, 8], strides = [1, 1]} : vector<8x32xf32> to vector<8x8xf32>
    %62 = vector.extract_strided_slice %14 {offsets = [0, 24], sizes = [8, 8], strides = [1, 1]} : vector<8x32xf32> to vector<8x8xf32>
    %63 = vector.extract_strided_slice %15 {offsets = [0, 24], sizes = [8, 8], strides = [1, 1]} : vector<8x32xf32> to vector<8x8xf32>
    %cst_24 = arith.constant dense<0.000000e+00> : vector<8x8xf32>
    %64 = tpu.matmul %61, %62, %cst_24 {dimension_numbers = #tpu.dot_dimension_numbers<[1], [1], [0], [0], [0, 0, 1, 0], [], []>} : vector<8x8xf32>, vector<8x8xf32>, vector<8x8xf32> -> vector<8x8xf32>
    %cst_25 = arith.constant dense<0xFF800000> : vector<8xf32>
    %65 = vector.multi_reduction <maximumf>, %64, %cst_25 [1] : vector<8x8xf32> to vector<8xf32>
    %66 = vector.shape_cast %65 : vector<8xf32> to vector<8x1xf32>
    %67 = vector.broadcast %66 : vector<8x1xf32> to vector<8x8xf32>
    %68 = arith.subf %64, %67 : vector<8x8xf32>
    %69 = math.exp %68 : vector<8x8xf32>
    %cst_26 = arith.constant dense<0.000000e+00> : vector<8xf32>
    %70 = vector.multi_reduction <add>, %69, %cst_26 [1] : vector<8x8xf32> to vector<8xf32>
    %71 = vector.shape_cast %70 : vector<8xf32> to vector<8x1xf32>
    %72 = tpu.reciprocal %71 {approx = true} : vector<8x1xf32> -> vector<8x1xf32>
    %73 = vector.broadcast %72 : vector<8x1xf32> to vector<8x8xf32>
    %74 = arith.mulf %69, %73 : vector<8x8xf32>
    %cst_27 = arith.constant dense<0.000000e+00> : vector<8x8xf32>
    %75 = tpu.matmul %74, %63, %cst_27 {dimension_numbers = #tpu.dot_dimension_numbers<[1], [0], [0], [1], [0, 0, 1, 1], [], []>} : vector<8x8xf32>, vector<8x8xf32>, vector<8x8xf32> -> vector<8x8xf32>
    %76 = tpu.concatenate %30, %45, %60, %75 in 1 : vector<8x8xf32>, vector<8x8xf32>, vector<8x8xf32>, vector<8x8xf32> -> vector<8x32xf32>
    %c0_28 = arith.constant 0 : index
    %c0_29 = arith.constant 0 : index
    %c0_30 = arith.constant 0 : index
    %77 = vector.load %arg5[%c0_28, %c0_29, %c0_30] : memref<2x32x32xf32, #tpu.memory_space<vmem>>, vector<1x32x32xf32>
    %78 = vector.shape_cast %77 : vector<1x32x32xf32> to vector<32x32xf32>
    %cst_31 = arith.constant dense<0.000000e+00> : vector<8x32xf32>
    %79 = tpu.matmul %76, %78, %cst_31 {dimension_numbers = #tpu.dot_dimension_numbers<[1], [0], [0], [1], [0, 0, 1, 1], [], []>} : vector<8x32xf32>, vector<32x32xf32>, vector<8x32xf32> -> vector<8x32xf32>
    %c0_32 = arith.constant 0 : index
    %c0_33 = arith.constant 0 : index
    %c0_34 = arith.constant 0 : index
    %80 = vector.load %arg6[%c0_32, %c0_33, %c0_34] : memref<2x1x32xf32, #tpu.memory_space<vmem>>, vector<1x1x32xf32>
    %81 = vector.shape_cast %80 : vector<1x1x32xf32> to vector<1x32xf32>
    %82 = vector.broadcast %81 : vector<1x32xf32> to vector<8x32xf32>
    %83 = arith.addf %79, %82 : vector<8x32xf32>
    %cst_35 = arith.constant 0.899999976 : f32
    %84 = vector.broadcast %cst_35 : f32 to vector<1x32xf32>
    %85 = arith.mulf %84, %5 : vector<1x32xf32>
    %cst_36 = arith.constant dense<0.000000e+00> : vector<32xf32>
    %86 = vector.multi_reduction <add>, %83, %cst_36 [0] : vector<8x32xf32> to vector<32xf32>
    %87 = vector.shape_cast %86 : vector<32xf32> to vector<1x32xf32>
    %cst_37 = arith.constant 8.000000e+00 : f32
    %88 = vector.broadcast %cst_37 : f32 to vector<1x32xf32>
    %89 = arith.divf %87, %88 : vector<1x32xf32>
    %90 = arith.addf %85, %89 : vector<1x32xf32>
    %91 = vector.broadcast %90 : vector<1x32xf32> to vector<8x32xf32>
    %92 = arith.addf %83, %91 : vector<8x32xf32>
    %c0_38 = arith.constant 0 : index
    %c0_39 = arith.constant 0 : index
    %c0_40 = arith.constant 0 : index
    %93 = vector.load %arg7[%c0_38, %c0_39, %c0_40] : memref<2x32x128xf32, #tpu.memory_space<vmem>>, vector<1x32x128xf32>
    %94 = vector.shape_cast %93 : vector<1x32x128xf32> to vector<32x128xf32>
    %cst_41 = arith.constant dense<0.000000e+00> : vector<8x128xf32>
    %95 = tpu.matmul %92, %94, %cst_41 {dimension_numbers = #tpu.dot_dimension_numbers<[1], [0], [0], [1], [0, 0, 1, 1], [], []>} : vector<8x32xf32>, vector<32x128xf32>, vector<8x128xf32> -> vector<8x128xf32>
    %c0_42 = arith.constant 0 : index
    %c0_43 = arith.constant 0 : index
    %c0_44 = arith.constant 0 : index
    %96 = vector.load %arg8[%c0_42, %c0_43, %c0_44] : memref<2x1x128xf32, #tpu.memory_space<vmem>>, vector<1x1x128xf32>
    %97 = vector.shape_cast %96 : vector<1x1x128xf32> to vector<1x128xf32>
    %98 = vector.broadcast %97 : vector<1x128xf32> to vector<8x128xf32>
    %99 = arith.addf %95, %98 : vector<8x128xf32>
    %cst_45 = arith.constant 5.000000e-01 : f32
    %100 = vector.broadcast %cst_45 : f32 to vector<8x128xf32>
    %101 = arith.mulf %100, %99 : vector<8x128xf32>
    %cst_46 = arith.constant 0.707106769 : f32
    %102 = vector.broadcast %cst_46 : f32 to vector<8x128xf32>
    %103 = arith.mulf %99, %102 : vector<8x128xf32>
    %104 = math.erf %103 : vector<8x128xf32>
    %cst_47 = arith.constant 1.000000e+00 : f32
    %105 = vector.broadcast %cst_47 : f32 to vector<8x128xf32>
    %106 = arith.addf %105, %104 : vector<8x128xf32>
    %107 = arith.mulf %101, %106 : vector<8x128xf32>
    %c0_48 = arith.constant 0 : index
    %c0_49 = arith.constant 0 : index
    %c0_50 = arith.constant 0 : index
    %108 = vector.load %arg9[%c0_48, %c0_49, %c0_50] : memref<2x128x32xf32, #tpu.memory_space<vmem>>, vector<1x128x32xf32>
    %109 = vector.shape_cast %108 : vector<1x128x32xf32> to vector<128x32xf32>
    %cst_51 = arith.constant dense<0.000000e+00> : vector<8x32xf32>
    %110 = tpu.matmul %107, %109, %cst_51 {dimension_numbers = #tpu.dot_dimension_numbers<[1], [0], [0], [1], [0, 0, 1, 1], [], []>} : vector<8x128xf32>, vector<128x32xf32>, vector<8x32xf32> -> vector<8x32xf32>
    %c0_52 = arith.constant 0 : index
    %c0_53 = arith.constant 0 : index
    %c0_54 = arith.constant 0 : index
    %111 = vector.load %arg10[%c0_52, %c0_53, %c0_54] : memref<2x1x32xf32, #tpu.memory_space<vmem>>, vector<1x1x32xf32>
    %112 = vector.shape_cast %111 : vector<1x1x32xf32> to vector<1x32xf32>
    %113 = vector.broadcast %112 : vector<1x32xf32> to vector<8x32xf32>
    %114 = arith.addf %110, %113 : vector<8x32xf32>
    %115 = arith.addf %114, %92 : vector<8x32xf32>
    %c0_55 = arith.constant 0 : index
    %c0_56 = arith.constant 0 : index
    %c0_57 = arith.constant 0 : index
    %116 = vector.load %arg11[%c0_55, %c0_56, %c0_57] : memref<2x1x32xf32, #tpu.memory_space<vmem>>, vector<1x1x32xf32>
    %117 = vector.shape_cast %116 : vector<1x1x32xf32> to vector<1x32xf32>
    %c0_58 = arith.constant 0 : index
    %c0_59 = arith.constant 0 : index
    %c0_60 = arith.constant 0 : index
    %118 = vector.load %arg12[%c0_58, %c0_59, %c0_60] : memref<2x1x32xf32, #tpu.memory_space<vmem>>, vector<1x1x32xf32>
    %119 = vector.shape_cast %118 : vector<1x1x32xf32> to vector<1x32xf32>
    %cst_61 = arith.constant dense<0.000000e+00> : vector<8xf32>
    %120 = vector.multi_reduction <add>, %115, %cst_61 [1] : vector<8x32xf32> to vector<8xf32>
    %121 = vector.shape_cast %120 : vector<8xf32> to vector<8x1xf32>
    %cst_62 = arith.constant 3.200000e+01 : f32
    %122 = vector.broadcast %cst_62 : f32 to vector<8x1xf32>
    %123 = arith.divf %121, %122 : vector<8x1xf32>
    %124 = vector.broadcast %123 : vector<8x1xf32> to vector<8x32xf32>
    %125 = arith.subf %115, %124 : vector<8x32xf32>
    %126 = arith.mulf %125, %125 : vector<8x32xf32>
    %cst_63 = arith.constant dense<0.000000e+00> : vector<8xf32>
    %127 = vector.multi_reduction <add>, %126, %cst_63 [1] : vector<8x32xf32> to vector<8xf32>
    %128 = vector.shape_cast %127 : vector<8xf32> to vector<8x1xf32>
    %cst_64 = arith.constant 3.200000e+01 : f32
    %129 = vector.broadcast %cst_64 : f32 to vector<8x1xf32>
    %130 = arith.divf %128, %129 : vector<8x1xf32>
    %131 = vector.broadcast %123 : vector<8x1xf32> to vector<8x32xf32>
    %132 = arith.subf %115, %131 : vector<8x32xf32>
    %cst_65 = arith.constant 9.99999996E-13 : f32
    %133 = vector.broadcast %cst_65 : f32 to vector<8x1xf32>
    %134 = arith.addf %130, %133 : vector<8x1xf32>
    %135 = math.rsqrt %134 : vector<8x1xf32>
    %136 = vector.broadcast %135 : vector<8x1xf32> to vector<8x32xf32>
    %137 = arith.mulf %132, %136 : vector<8x32xf32>
    %138 = vector.broadcast %117 : vector<1x32xf32> to vector<8x32xf32>
    %139 = arith.mulf %137, %138 : vector<8x32xf32>
    %140 = vector.broadcast %119 : vector<1x32xf32> to vector<8x32xf32>
    %141 = arith.addf %139, %140 : vector<8x32xf32>
    %c1 = arith.constant 1 : index
    %c0_66 = arith.constant 0 : index
    %c0_67 = arith.constant 0 : index
    %142 = vector.load %arg3[%c1, %c0_66, %c0_67] : memref<2x32x96xf32, #tpu.memory_space<vmem>>, vector<1x32x96xf32>
    %143 = vector.shape_cast %142 : vector<1x32x96xf32> to vector<32x96xf32>
    %cst_68 = arith.constant dense<0.000000e+00> : vector<8x96xf32>
    %144 = tpu.matmul %141, %143, %cst_68 {dimension_numbers = #tpu.dot_dimension_numbers<[1], [0], [0], [1], [0, 0, 1, 1], [], []>} : vector<8x32xf32>, vector<32x96xf32>, vector<8x96xf32> -> vector<8x96xf32>
    %c1_69 = arith.constant 1 : index
    %c0_70 = arith.constant 0 : index
    %c0_71 = arith.constant 0 : index
    %145 = vector.load %arg4[%c1_69, %c0_70, %c0_71] : memref<2x1x96xf32, #tpu.memory_space<vmem>>, vector<1x1x96xf32>
    %146 = vector.shape_cast %145 : vector<1x1x96xf32> to vector<1x96xf32>
    %147 = vector.broadcast %146 : vector<1x96xf32> to vector<8x96xf32>
    %148 = arith.addf %144, %147 : vector<8x96xf32>
    %149 = vector.extract_strided_slice %148 {offsets = [0, 0], sizes = [8, 32], strides = [1, 1]} : vector<8x96xf32> to vector<8x32xf32>
    %150 = vector.extract_strided_slice %148 {offsets = [0, 32], sizes = [8, 32], strides = [1, 1]} : vector<8x96xf32> to vector<8x32xf32>
    %151 = vector.extract_strided_slice %148 {offsets = [0, 64], sizes = [8, 32], strides = [1, 1]} : vector<8x96xf32> to vector<8x32xf32>
    %152 = vector.extract_strided_slice %149 {offsets = [0, 0], sizes = [8, 8], strides = [1, 1]} : vector<8x32xf32> to vector<8x8xf32>
    %153 = vector.extract_strided_slice %150 {offsets = [0, 0], sizes = [8, 8], strides = [1, 1]} : vector<8x32xf32> to vector<8x8xf32>
    %154 = vector.extract_strided_slice %151 {offsets = [0, 0], sizes = [8, 8], strides = [1, 1]} : vector<8x32xf32> to vector<8x8xf32>
    %cst_72 = arith.constant dense<0.000000e+00> : vector<8x8xf32>
    %155 = tpu.matmul %152, %153, %cst_72 {dimension_numbers = #tpu.dot_dimension_numbers<[1], [1], [0], [0], [0, 0, 1, 0], [], []>} : vector<8x8xf32>, vector<8x8xf32>, vector<8x8xf32> -> vector<8x8xf32>
    %cst_73 = arith.constant dense<0xFF800000> : vector<8xf32>
    %156 = vector.multi_reduction <maximumf>, %155, %cst_73 [1] : vector<8x8xf32> to vector<8xf32>
    %157 = vector.shape_cast %156 : vector<8xf32> to vector<8x1xf32>
    %158 = vector.broadcast %157 : vector<8x1xf32> to vector<8x8xf32>
    %159 = arith.subf %155, %158 : vector<8x8xf32>
    %160 = math.exp %159 : vector<8x8xf32>
    %cst_74 = arith.constant dense<0.000000e+00> : vector<8xf32>
    %161 = vector.multi_reduction <add>, %160, %cst_74 [1] : vector<8x8xf32> to vector<8xf32>
    %162 = vector.shape_cast %161 : vector<8xf32> to vector<8x1xf32>
    %163 = tpu.reciprocal %162 {approx = true} : vector<8x1xf32> -> vector<8x1xf32>
    %164 = vector.broadcast %163 : vector<8x1xf32> to vector<8x8xf32>
    %165 = arith.mulf %160, %164 : vector<8x8xf32>
    %cst_75 = arith.constant dense<0.000000e+00> : vector<8x8xf32>
    %166 = tpu.matmul %165, %154, %cst_75 {dimension_numbers = #tpu.dot_dimension_numbers<[1], [0], [0], [1], [0, 0, 1, 1], [], []>} : vector<8x8xf32>, vector<8x8xf32>, vector<8x8xf32> -> vector<8x8xf32>
    %167 = vector.extract_strided_slice %149 {offsets = [0, 8], sizes = [8, 8], strides = [1, 1]} : vector<8x32xf32> to vector<8x8xf32>
    %168 = vector.extract_strided_slice %150 {offsets = [0, 8], sizes = [8, 8], strides = [1, 1]} : vector<8x32xf32> to vector<8x8xf32>
    %169 = vector.extract_strided_slice %151 {offsets = [0, 8], sizes = [8, 8], strides = [1, 1]} : vector<8x32xf32> to vector<8x8xf32>
    %cst_76 = arith.constant dense<0.000000e+00> : vector<8x8xf32>
    %170 = tpu.matmul %167, %168, %cst_76 {dimension_numbers = #tpu.dot_dimension_numbers<[1], [1], [0], [0], [0, 0, 1, 0], [], []>} : vector<8x8xf32>, vector<8x8xf32>, vector<8x8xf32> -> vector<8x8xf32>
    %cst_77 = arith.constant dense<0xFF800000> : vector<8xf32>
    %171 = vector.multi_reduction <maximumf>, %170, %cst_77 [1] : vector<8x8xf32> to vector<8xf32>
    %172 = vector.shape_cast %171 : vector<8xf32> to vector<8x1xf32>
    %173 = vector.broadcast %172 : vector<8x1xf32> to vector<8x8xf32>
    %174 = arith.subf %170, %173 : vector<8x8xf32>
    %175 = math.exp %174 : vector<8x8xf32>
    %cst_78 = arith.constant dense<0.000000e+00> : vector<8xf32>
    %176 = vector.multi_reduction <add>, %175, %cst_78 [1] : vector<8x8xf32> to vector<8xf32>
    %177 = vector.shape_cast %176 : vector<8xf32> to vector<8x1xf32>
    %178 = tpu.reciprocal %177 {approx = true} : vector<8x1xf32> -> vector<8x1xf32>
    %179 = vector.broadcast %178 : vector<8x1xf32> to vector<8x8xf32>
    %180 = arith.mulf %175, %179 : vector<8x8xf32>
    %cst_79 = arith.constant dense<0.000000e+00> : vector<8x8xf32>
    %181 = tpu.matmul %180, %169, %cst_79 {dimension_numbers = #tpu.dot_dimension_numbers<[1], [0], [0], [1], [0, 0, 1, 1], [], []>} : vector<8x8xf32>, vector<8x8xf32>, vector<8x8xf32> -> vector<8x8xf32>
    %182 = vector.extract_strided_slice %149 {offsets = [0, 16], sizes = [8, 8], strides = [1, 1]} : vector<8x32xf32> to vector<8x8xf32>
    %183 = vector.extract_strided_slice %150 {offsets = [0, 16], sizes = [8, 8], strides = [1, 1]} : vector<8x32xf32> to vector<8x8xf32>
    %184 = vector.extract_strided_slice %151 {offsets = [0, 16], sizes = [8, 8], strides = [1, 1]} : vector<8x32xf32> to vector<8x8xf32>
    %cst_80 = arith.constant dense<0.000000e+00> : vector<8x8xf32>
    %185 = tpu.matmul %182, %183, %cst_80 {dimension_numbers = #tpu.dot_dimension_numbers<[1], [1], [0], [0], [0, 0, 1, 0], [], []>} : vector<8x8xf32>, vector<8x8xf32>, vector<8x8xf32> -> vector<8x8xf32>
    %cst_81 = arith.constant dense<0xFF800000> : vector<8xf32>
    %186 = vector.multi_reduction <maximumf>, %185, %cst_81 [1] : vector<8x8xf32> to vector<8xf32>
    %187 = vector.shape_cast %186 : vector<8xf32> to vector<8x1xf32>
    %188 = vector.broadcast %187 : vector<8x1xf32> to vector<8x8xf32>
    %189 = arith.subf %185, %188 : vector<8x8xf32>
    %190 = math.exp %189 : vector<8x8xf32>
    %cst_82 = arith.constant dense<0.000000e+00> : vector<8xf32>
    %191 = vector.multi_reduction <add>, %190, %cst_82 [1] : vector<8x8xf32> to vector<8xf32>
    %192 = vector.shape_cast %191 : vector<8xf32> to vector<8x1xf32>
    %193 = tpu.reciprocal %192 {approx = true} : vector<8x1xf32> -> vector<8x1xf32>
    %194 = vector.broadcast %193 : vector<8x1xf32> to vector<8x8xf32>
    %195 = arith.mulf %190, %194 : vector<8x8xf32>
    %cst_83 = arith.constant dense<0.000000e+00> : vector<8x8xf32>
    %196 = tpu.matmul %195, %184, %cst_83 {dimension_numbers = #tpu.dot_dimension_numbers<[1], [0], [0], [1], [0, 0, 1, 1], [], []>} : vector<8x8xf32>, vector<8x8xf32>, vector<8x8xf32> -> vector<8x8xf32>
    %197 = vector.extract_strided_slice %149 {offsets = [0, 24], sizes = [8, 8], strides = [1, 1]} : vector<8x32xf32> to vector<8x8xf32>
    %198 = vector.extract_strided_slice %150 {offsets = [0, 24], sizes = [8, 8], strides = [1, 1]} : vector<8x32xf32> to vector<8x8xf32>
    %199 = vector.extract_strided_slice %151 {offsets = [0, 24], sizes = [8, 8], strides = [1, 1]} : vector<8x32xf32> to vector<8x8xf32>
    %cst_84 = arith.constant dense<0.000000e+00> : vector<8x8xf32>
    %200 = tpu.matmul %197, %198, %cst_84 {dimension_numbers = #tpu.dot_dimension_numbers<[1], [1], [0], [0], [0, 0, 1, 0], [], []>} : vector<8x8xf32>, vector<8x8xf32>, vector<8x8xf32> -> vector<8x8xf32>
    %cst_85 = arith.constant dense<0xFF800000> : vector<8xf32>
    %201 = vector.multi_reduction <maximumf>, %200, %cst_85 [1] : vector<8x8xf32> to vector<8xf32>
    %202 = vector.shape_cast %201 : vector<8xf32> to vector<8x1xf32>
    %203 = vector.broadcast %202 : vector<8x1xf32> to vector<8x8xf32>
    %204 = arith.subf %200, %203 : vector<8x8xf32>
    %205 = math.exp %204 : vector<8x8xf32>
    %cst_86 = arith.constant dense<0.000000e+00> : vector<8xf32>
    %206 = vector.multi_reduction <add>, %205, %cst_86 [1] : vector<8x8xf32> to vector<8xf32>
    %207 = vector.shape_cast %206 : vector<8xf32> to vector<8x1xf32>
    %208 = tpu.reciprocal %207 {approx = true} : vector<8x1xf32> -> vector<8x1xf32>
    %209 = vector.broadcast %208 : vector<8x1xf32> to vector<8x8xf32>
    %210 = arith.mulf %205, %209 : vector<8x8xf32>
    %cst_87 = arith.constant dense<0.000000e+00> : vector<8x8xf32>
    %211 = tpu.matmul %210, %199, %cst_87 {dimension_numbers = #tpu.dot_dimension_numbers<[1], [0], [0], [1], [0, 0, 1, 1], [], []>} : vector<8x8xf32>, vector<8x8xf32>, vector<8x8xf32> -> vector<8x8xf32>
    %212 = tpu.concatenate %166, %181, %196, %211 in 1 : vector<8x8xf32>, vector<8x8xf32>, vector<8x8xf32>, vector<8x8xf32> -> vector<8x32xf32>
    %c1_88 = arith.constant 1 : index
    %c0_89 = arith.constant 0 : index
    %c0_90 = arith.constant 0 : index
    %213 = vector.load %arg5[%c1_88, %c0_89, %c0_90] : memref<2x32x32xf32, #tpu.memory_space<vmem>>, vector<1x32x32xf32>
    %214 = vector.shape_cast %213 : vector<1x32x32xf32> to vector<32x32xf32>
    %cst_91 = arith.constant dense<0.000000e+00> : vector<8x32xf32>
    %215 = tpu.matmul %212, %214, %cst_91 {dimension_numbers = #tpu.dot_dimension_numbers<[1], [0], [0], [1], [0, 0, 1, 1], [], []>} : vector<8x32xf32>, vector<32x32xf32>, vector<8x32xf32> -> vector<8x32xf32>
    %c1_92 = arith.constant 1 : index
    %c0_93 = arith.constant 0 : index
    %c0_94 = arith.constant 0 : index
    %216 = vector.load %arg6[%c1_92, %c0_93, %c0_94] : memref<2x1x32xf32, #tpu.memory_space<vmem>>, vector<1x1x32xf32>
    %217 = vector.shape_cast %216 : vector<1x1x32xf32> to vector<1x32xf32>
    %218 = vector.broadcast %217 : vector<1x32xf32> to vector<8x32xf32>
    %219 = arith.addf %215, %218 : vector<8x32xf32>
    %cst_95 = arith.constant 0.899999976 : f32
    %220 = vector.broadcast %cst_95 : f32 to vector<1x32xf32>
    %221 = arith.mulf %220, %90 : vector<1x32xf32>
    %cst_96 = arith.constant dense<0.000000e+00> : vector<32xf32>
    %222 = vector.multi_reduction <add>, %219, %cst_96 [0] : vector<8x32xf32> to vector<32xf32>
    %223 = vector.shape_cast %222 : vector<32xf32> to vector<1x32xf32>
    %cst_97 = arith.constant 8.000000e+00 : f32
    %224 = vector.broadcast %cst_97 : f32 to vector<1x32xf32>
    %225 = arith.divf %223, %224 : vector<1x32xf32>
    %226 = arith.addf %221, %225 : vector<1x32xf32>
    %227 = vector.broadcast %226 : vector<1x32xf32> to vector<8x32xf32>
    %228 = arith.addf %219, %227 : vector<8x32xf32>
    %c1_98 = arith.constant 1 : index
    %c0_99 = arith.constant 0 : index
    %c0_100 = arith.constant 0 : index
    %229 = vector.load %arg7[%c1_98, %c0_99, %c0_100] : memref<2x32x128xf32, #tpu.memory_space<vmem>>, vector<1x32x128xf32>
    %230 = vector.shape_cast %229 : vector<1x32x128xf32> to vector<32x128xf32>
    %cst_101 = arith.constant dense<0.000000e+00> : vector<8x128xf32>
    %231 = tpu.matmul %228, %230, %cst_101 {dimension_numbers = #tpu.dot_dimension_numbers<[1], [0], [0], [1], [0, 0, 1, 1], [], []>} : vector<8x32xf32>, vector<32x128xf32>, vector<8x128xf32> -> vector<8x128xf32>
    %c1_102 = arith.constant 1 : index
    %c0_103 = arith.constant 0 : index
    %c0_104 = arith.constant 0 : index
    %232 = vector.load %arg8[%c1_102, %c0_103, %c0_104] : memref<2x1x128xf32, #tpu.memory_space<vmem>>, vector<1x1x128xf32>
    %233 = vector.shape_cast %232 : vector<1x1x128xf32> to vector<1x128xf32>
    %234 = vector.broadcast %233 : vector<1x128xf32> to vector<8x128xf32>
    %235 = arith.addf %231, %234 : vector<8x128xf32>
    %cst_105 = arith.constant 5.000000e-01 : f32
    %236 = vector.broadcast %cst_105 : f32 to vector<8x128xf32>
    %237 = arith.mulf %236, %235 : vector<8x128xf32>
    %cst_106 = arith.constant 0.707106769 : f32
    %238 = vector.broadcast %cst_106 : f32 to vector<8x128xf32>
    %239 = arith.mulf %235, %238 : vector<8x128xf32>
    %240 = math.erf %239 : vector<8x128xf32>
    %cst_107 = arith.constant 1.000000e+00 : f32
    %241 = vector.broadcast %cst_107 : f32 to vector<8x128xf32>
    %242 = arith.addf %241, %240 : vector<8x128xf32>
    %243 = arith.mulf %237, %242 : vector<8x128xf32>
    %c1_108 = arith.constant 1 : index
    %c0_109 = arith.constant 0 : index
    %c0_110 = arith.constant 0 : index
    %244 = vector.load %arg9[%c1_108, %c0_109, %c0_110] : memref<2x128x32xf32, #tpu.memory_space<vmem>>, vector<1x128x32xf32>
    %245 = vector.shape_cast %244 : vector<1x128x32xf32> to vector<128x32xf32>
    %cst_111 = arith.constant dense<0.000000e+00> : vector<8x32xf32>
    %246 = tpu.matmul %243, %245, %cst_111 {dimension_numbers = #tpu.dot_dimension_numbers<[1], [0], [0], [1], [0, 0, 1, 1], [], []>} : vector<8x128xf32>, vector<128x32xf32>, vector<8x32xf32> -> vector<8x32xf32>
    %c1_112 = arith.constant 1 : index
    %c0_113 = arith.constant 0 : index
    %c0_114 = arith.constant 0 : index
    %247 = vector.load %arg10[%c1_112, %c0_113, %c0_114] : memref<2x1x32xf32, #tpu.memory_space<vmem>>, vector<1x1x32xf32>
    %248 = vector.shape_cast %247 : vector<1x1x32xf32> to vector<1x32xf32>
    %249 = vector.broadcast %248 : vector<1x32xf32> to vector<8x32xf32>
    %250 = arith.addf %246, %249 : vector<8x32xf32>
    %251 = arith.addf %250, %228 : vector<8x32xf32>
    %c1_115 = arith.constant 1 : index
    %c0_116 = arith.constant 0 : index
    %c0_117 = arith.constant 0 : index
    %252 = vector.load %arg11[%c1_115, %c0_116, %c0_117] : memref<2x1x32xf32, #tpu.memory_space<vmem>>, vector<1x1x32xf32>
    %253 = vector.shape_cast %252 : vector<1x1x32xf32> to vector<1x32xf32>
    %c1_118 = arith.constant 1 : index
    %c0_119 = arith.constant 0 : index
    %c0_120 = arith.constant 0 : index
    %254 = vector.load %arg12[%c1_118, %c0_119, %c0_120] : memref<2x1x32xf32, #tpu.memory_space<vmem>>, vector<1x1x32xf32>
    %255 = vector.shape_cast %254 : vector<1x1x32xf32> to vector<1x32xf32>
    %cst_121 = arith.constant dense<0.000000e+00> : vector<8xf32>
    %256 = vector.multi_reduction <add>, %251, %cst_121 [1] : vector<8x32xf32> to vector<8xf32>
    %257 = vector.shape_cast %256 : vector<8xf32> to vector<8x1xf32>
    %cst_122 = arith.constant 3.200000e+01 : f32
    %258 = vector.broadcast %cst_122 : f32 to vector<8x1xf32>
    %259 = arith.divf %257, %258 : vector<8x1xf32>
    %260 = vector.broadcast %259 : vector<8x1xf32> to vector<8x32xf32>
    %261 = arith.subf %251, %260 : vector<8x32xf32>
    %262 = arith.mulf %261, %261 : vector<8x32xf32>
    %cst_123 = arith.constant dense<0.000000e+00> : vector<8xf32>
    %263 = vector.multi_reduction <add>, %262, %cst_123 [1] : vector<8x32xf32> to vector<8xf32>
    %264 = vector.shape_cast %263 : vector<8xf32> to vector<8x1xf32>
    %cst_124 = arith.constant 3.200000e+01 : f32
    %265 = vector.broadcast %cst_124 : f32 to vector<8x1xf32>
    %266 = arith.divf %264, %265 : vector<8x1xf32>
    %267 = vector.broadcast %259 : vector<8x1xf32> to vector<8x32xf32>
    %268 = arith.subf %251, %267 : vector<8x32xf32>
    %cst_125 = arith.constant 9.99999996E-13 : f32
    %269 = vector.broadcast %cst_125 : f32 to vector<8x1xf32>
    %270 = arith.addf %266, %269 : vector<8x1xf32>
    %271 = math.rsqrt %270 : vector<8x1xf32>
    %272 = vector.broadcast %271 : vector<8x1xf32> to vector<8x32xf32>
    %273 = arith.mulf %268, %272 : vector<8x32xf32>
    %274 = vector.broadcast %253 : vector<1x32xf32> to vector<8x32xf32>
    %275 = arith.mulf %273, %274 : vector<8x32xf32>
    %276 = vector.broadcast %255 : vector<1x32xf32> to vector<8x32xf32>
    %277 = arith.addf %275, %276 : vector<8x32xf32>
    %c0_126 = arith.constant 0 : index
    %c0_127 = arith.constant 0 : index
    %278 = vector.load %arg13[%c0_126, %c0_127] : memref<1x32xf32, #tpu.memory_space<vmem>>, vector<1x32xf32>
    %c0_128 = arith.constant 0 : index
    %c0_129 = arith.constant 0 : index
    %279 = vector.load %arg14[%c0_128, %c0_129] : memref<1x32xf32, #tpu.memory_space<vmem>>, vector<1x32xf32>
    %cst_130 = arith.constant dense<0.000000e+00> : vector<8xf32>
    %280 = vector.multi_reduction <add>, %277, %cst_130 [1] : vector<8x32xf32> to vector<8xf32>
    %281 = vector.shape_cast %280 : vector<8xf32> to vector<8x1xf32>
    %cst_131 = arith.constant 3.200000e+01 : f32
    %282 = vector.broadcast %cst_131 : f32 to vector<8x1xf32>
    %283 = arith.divf %281, %282 : vector<8x1xf32>
    %284 = vector.broadcast %283 : vector<8x1xf32> to vector<8x32xf32>
    %285 = arith.subf %277, %284 : vector<8x32xf32>
    %286 = arith.mulf %285, %285 : vector<8x32xf32>
    %cst_132 = arith.constant dense<0.000000e+00> : vector<8xf32>
    %287 = vector.multi_reduction <add>, %286, %cst_132 [1] : vector<8x32xf32> to vector<8xf32>
    %288 = vector.shape_cast %287 : vector<8xf32> to vector<8x1xf32>
    %cst_133 = arith.constant 3.200000e+01 : f32
    %289 = vector.broadcast %cst_133 : f32 to vector<8x1xf32>
    %290 = arith.divf %288, %289 : vector<8x1xf32>
    %291 = vector.broadcast %283 : vector<8x1xf32> to vector<8x32xf32>
    %292 = arith.subf %277, %291 : vector<8x32xf32>
    %cst_134 = arith.constant 9.99999996E-13 : f32
    %293 = vector.broadcast %cst_134 : f32 to vector<8x1xf32>
    %294 = arith.addf %290, %293 : vector<8x1xf32>
    %295 = math.rsqrt %294 : vector<8x1xf32>
    %296 = vector.broadcast %295 : vector<8x1xf32> to vector<8x32xf32>
    %297 = arith.mulf %292, %296 : vector<8x32xf32>
    %298 = vector.broadcast %278 : vector<1x32xf32> to vector<8x32xf32>
    %299 = arith.mulf %297, %298 : vector<8x32xf32>
    %300 = vector.broadcast %279 : vector<1x32xf32> to vector<8x32xf32>
    %301 = arith.addf %299, %300 : vector<8x32xf32>
    %c0_135 = arith.constant 0 : index
    %c0_136 = arith.constant 0 : index
    %c0_137 = arith.constant 0 : index
    %302 = vector.load %arg15[%c0_135, %c0_136, %c0_137] : memref<1x8x32xf32, #tpu.memory_space<vmem>>, vector<1x8x32xf32>
    %303 = vector.shape_cast %302 : vector<1x8x32xf32> to vector<8x32xf32>
    %304 = vector.shape_cast %301 : vector<8x32xf32> to vector<1x8x32xf32>
    tpu.vector_store %arg15[%c0_135, %c0_136, %c0_137], %304 {strides = array<i32>} : memref<1x8x32xf32, #tpu.memory_space<vmem>>, vector<1x8x32xf32>,
    return
  }
  func.func @transform_0(%arg0: i32) -> (i32, i32, i32) {
    %c0_i32 = arith.constant 0 : i32
    %c0_i32_0 = arith.constant 0 : i32
    %c0_i32_1 = arith.constant 0 : i32
    %c0_i32_2 = arith.constant 0 : i32
    return %c0_i32, %c0_i32_0, %c0_i32_1 : i32, i32, i32
  }
  func.func @transform_1(%arg0: i32) -> (i32, i32, i32) {
    %c0_i32 = arith.constant 0 : i32
    %c0_i32_0 = arith.constant 0 : i32
    %c0_i32_1 = arith.constant 0 : i32
    return %arg0, %c0_i32, %c0_i32_0 : i32, i32, i32
  }
  func.func @transform_2(%arg0: i32) -> (i32, i32, i32) {
    %c0_i32 = arith.constant 0 : i32
    %c0_i32_0 = arith.constant 0 : i32
    %c0_i32_1 = arith.constant 0 : i32
    %c0_i32_2 = arith.constant 0 : i32
    return %c0_i32, %c0_i32_0, %c0_i32_1 : i32, i32, i32
  }
  func.func @transform_3(%arg0: i32) -> (i32, i32, i32) {
    %c0_i32 = arith.constant 0 : i32
    %c0_i32_0 = arith.constant 0 : i32
    %c0_i32_1 = arith.constant 0 : i32
    %c0_i32_2 = arith.constant 0 : i32
    return %c0_i32, %c0_i32_0, %c0_i32_1 : i32, i32, i32
  }
  func.func @transform_4(%arg0: i32) -> (i32, i32, i32) {
    %c0_i32 = arith.constant 0 : i32
    %c0_i32_0 = arith.constant 0 : i32
    %c0_i32_1 = arith.constant 0 : i32
    %c0_i32_2 = arith.constant 0 : i32
    return %c0_i32, %c0_i32_0, %c0_i32_1 : i32, i32, i32
  }
  func.func @transform_5(%arg0: i32) -> (i32, i32, i32) {
    %c0_i32 = arith.constant 0 : i32
    %c0_i32_0 = arith.constant 0 : i32
    %c0_i32_1 = arith.constant 0 : i32
    %c0_i32_2 = arith.constant 0 : i32
    return %c0_i32, %c0_i32_0, %c0_i32_1 : i32, i32, i32
  }
  func.func @transform_6(%arg0: i32) -> (i32, i32, i32) {
    %c0_i32 = arith.constant 0 : i32
    %c0_i32_0 = arith.constant 0 : i32
    %c0_i32_1 = arith.constant 0 : i32
    %c0_i32_2 = arith.constant 0 : i32
    return %c0_i32, %c0_i32_0, %c0_i32_1 : i32, i32, i32
  }
  func.func @transform_7(%arg0: i32) -> (i32, i32, i32) {
    %c0_i32 = arith.constant 0 : i32
    %c0_i32_0 = arith.constant 0 : i32
    %c0_i32_1 = arith.constant 0 : i32
    %c0_i32_2 = arith.constant 0 : i32
    return %c0_i32, %c0_i32_0, %c0_i32_1 : i32, i32, i32
  }
  func.func @transform_8(%arg0: i32) -> (i32, i32, i32) {
    %c0_i32 = arith.constant 0 : i32
    %c0_i32_0 = arith.constant 0 : i32
    %c0_i32_1 = arith.constant 0 : i32
    %c0_i32_2 = arith.constant 0 : i32
    return %c0_i32, %c0_i32_0, %c0_i32_1 : i32, i32, i32
  }
  func.func @transform_9(%arg0: i32) -> (i32, i32, i32) {
    %c0_i32 = arith.constant 0 : i32
    %c0_i32_0 = arith.constant 0 : i32
    %c0_i32_1 = arith.constant 0 : i32
    %c0_i32_2 = arith.constant 0 : i32
    return %c0_i32, %c0_i32_0, %c0_i32_1 : i32, i32, i32
  }
  func.func @transform_10(%arg0: i32) -> (i32, i32, i32) {
    %c0_i32 = arith.constant 0 : i32
    %c0_i32_0 = arith.constant 0 : i32
    %c0_i32_1 = arith.constant 0 : i32
    %c0_i32_2 = arith.constant 0 : i32
    return %c0_i32, %c0_i32_0, %c0_i32_1 : i32, i32, i32
  }
  func.func @transform_11(%arg0: i32) -> (i32, i32, i32) {
    %c0_i32 = arith.constant 0 : i32
    %c0_i32_0 = arith.constant 0 : i32
    %c0_i32_1 = arith.constant 0 : i32
    %c0_i32_2 = arith.constant 0 : i32
    return %c0_i32, %c0_i32_0, %c0_i32_1 : i32, i32, i32
  }
  func.func @transform_12(%arg0: i32) -> (i32, i32) {
    %c0_i32 = arith.constant 0 : i32
    %c0_i32_0 = arith.constant 0 : i32
    %c0_i32_1 = arith.constant 0 : i32
    return %c0_i32, %c0_i32_0 : i32, i32
  }
  func.func @transform_13(%arg0: i32) -> (i32, i32) {
    %c0_i32 = arith.constant 0 : i32
    %c0_i32_0 = arith.constant 0 : i32
    %c0_i32_1 = arith.constant 0 : i32
    return %c0_i32, %c0_i32_0 : i32, i32
  }
  func.func @transform_14(%arg0: i32) -> (i32, i32, i32) {
    %c0_i32 = arith.constant 0 : i32
    %c0_i32_0 = arith.constant 0 : i32
    %c0_i32_1 = arith.constant 0 : i32
    return %arg0, %c0_i32, %c0_i32_0 : i32, i32, i32
  }
}

</mosaic_0001>

<llo_original>
// kernel: dala_forward.1
$region0: #{dala_forward.1}
  #allocation0 [shape = 'u32[]', space=smem, size = 0x4, offset = 0x4, fixed_abs, tag = 'smem constant byte address 0x4 - core index']
  #allocation1 [shape = 'u32[144,128]{1,0:T(1,128)}', space=vmem, size = 0x12000, scoped, tag = 'internal scratch']
  %s0 = inlined_call_operand.vmem [shape: f32[1,8,32], index: 0, kind: input, shape index: {}]
  %s1 = inlined_call_operand.vmem [shape: f32[2,8,32], index: 1, kind: input, shape index: {}]
  %s2 = inlined_call_operand.vmem [shape: f32[2,32,96], index: 2, kind: input, shape index: {}]
  %s3 = inlined_call_operand.vmem [shape: f32[2,1,96], index: 3, kind: input, shape index: {}]
  %s4 = inlined_call_operand.vmem [shape: f32[2,32,32], index: 4, kind: input, shape index: {}]
  %s5 = inlined_call_operand.vmem [shape: f32[2,1,32], index: 5, kind: input, shape index: {}]
  %s6 = inlined_call_operand.vmem [shape: f32[2,32,128], index: 6, kind: input, shape index: {}]
  %s7 = inlined_call_operand.vmem [shape: f32[2,1,128], index: 7, kind: input, shape index: {}]
  %s8 = inlined_call_operand.vmem [shape: f32[2,128,32], index: 8, kind: input, shape index: {}]
  %s9 = inlined_call_operand.vmem [shape: f32[2,1,32], index: 9, kind: input, shape index: {}]
  %s10 = inlined_call_operand.vmem [shape: f32[2,1,32], index: 10, kind: input, shape index: {}]
  %s11 = inlined_call_operand.vmem [shape: f32[2,1,32], index: 11, kind: input, shape index: {}]
  %s12 = inlined_call_operand.vmem [shape: f32[1,32], index: 12, kind: input, shape index: {}]
  %s13 = inlined_call_operand.vmem [shape: f32[1,32], index: 13, kind: input, shape index: {}]
  %s14 = inlined_call_operand.hbm [shape: f32[2,8,32], index: 14, kind: output, shape index: {}]
  %s15 = sld [smem:[#allocation0]]
  $region89: #{dala_forward.1} parent=0
    _
  %s17 = ssub.s32 1, %s15
  %s18 = scalar_select 0, %s17, %s15
  $region1: #{dala_forward.1} parent=0
    #allocation2 [shape = 'u8[8192]{0}', space=vmem, size = 0x2000, scoped, tag = 'output window, operand 0']
    #allocation3 [shape = 's32[2]{0}', space=sflag, size = 0x8, scoped, tag = 'scoped memory for dala_forward.1']
    %19 = vsyncpa [#allocation3], 0
    %s20 = scalar_lea.sflag [#allocation3], 1
    %21 = vsyncpa %s20, 0
    loop: start=0, step=1, limit=4
    $region2: #{dala_forward.1} parent=1 // loop_pre_header
      _
    $region3: #{dala_forward.1} parent=1 // loop_header
      %s23 = sphi 0, %s27
      %p24 = scmp.ge.s32.totalorder %s23, 4
      %s31 = sphi 0, %s31
      %s33 = sphi 0, %s31
      %s34 = sphi 0, %s33
      %s48 = sphi 0, %s34
      %s54 = sphi 0, %s56
      %s57 = sphi 0, %s54
      %s58 = sphi 0, %s57
      %s74 = sphi 0, %s58
      %s78 = sphi 0, %s78
      %s80 = sphi 0, %s78
      %s81 = sphi 0, %s80
      %s95 = sphi 0, %s81
      %s99 = sphi 0, %s99
      %s101 = sphi 0, %s99
      %s102 = sphi 0, %s101
      %s116 = sphi 0, %s102
      %s120 = sphi 0, %s120
      %s122 = sphi 0, %s120
      %s123 = sphi 0, %s122
      %s137 = sphi 0, %s123
      %s141 = sphi 0, %s141
      %s143 = sphi 0, %s141
      %s144 = sphi 0, %s143
      %s158 = sphi 0, %s144
      %s162 = sphi 0, %s162
      %s164 = sphi 0, %s162
      %s165 = sphi 0, %s164
      %s179 = sphi 0, %s165
      %s183 = sphi 0, %s183
      %s185 = sphi 0, %s183
      %s186 = sphi 0, %s185
      %s200 = sphi 0, %s186
      %s204 = sphi 0, %s204
      %s206 = sphi 0, %s204
      %s207 = sphi 0, %s206
      %s221 = sphi 0, %s207
      %s225 = sphi 0, %s225
      %s227 = sphi 0, %s225
      %s228 = sphi 0, %s227
      %s242 = sphi 0, %s228
      %s246 = sphi 0, %s246
      %s248 = sphi 0, %s246
      %s249 = sphi 0, %s248
      %s263 = sphi 0, %s249
      %s267 = sphi 0, %s267
      %s269 = sphi 0, %s267
      %s270 = sphi 0, %s269
      %s284 = sphi 0, %s270
      %s288 = sphi 0, %s288
      %s290 = sphi 0, %s288
      %s291 = sphi 0, %s290
      %s305 = sphi 0, %s291
      %s309 = sphi 0, %s309
      %s311 = sphi 0, %s309
      %s312 = sphi 0, %s311
      %s326 = sphi 0, %s312
      %s332 = sphi 0, %s334
      %s335 = sphi 0, %s332
      %s336 = sphi 0, %s335
      %s352 = sphi 0, %s336
    $region4: #{dala_forward.1} parent=1 // loop_header_branch
      %26 = sbr.rel (%p24) target = $region8
    $region5: #{dala_forward.1} parent=1 // loop_body
      %s28 = ssub.s32 %s23, 1
      %s29 = ssub.s32 %s23, 2
      %s30 = sadd.s32 %s23, 1
      %s32 = sadd.s32 %s31, 1
      %p35 = scmp.eq.s32.totalorder %s23, 1
      %p36 = scmp.ne.s32.totalorder %s31, %s33
      %p37 = scmp.eq.s32.totalorder %s23, 0
      %p38 = por %p36, %p37
      %p39 = scmp.ne.s32.totalorder %s31, %s33
      %p40 = scmp.eq.s32.totalorder %s28, 1
      %p41 = por %p39, %p40
      %p42 = scmp.ne.s32.totalorder %s33, %s34
      %p43 = scmp.eq.s32.totalorder %s28, 0
      %p44 = por %p42, %p43
      %p45 = scmp.ne.s32.totalorder %s33, %s34
      %p46 = scmp.eq.s32.totalorder %s29, 1
      %p47 = por %p45, %p46
      %p49 = scmp.ne.s32.totalorder %s34, %s48
      %p50 = scmp.eq.s32.totalorder %s29, 0
      %p51 = por %p49, %p50
      %s52 = ssub.s32 %s23, %s30
      %p53 = scmp.eq.s32.totalorder %s52, 0
      %s55 = sadd.s32 %s54, 1
      %s56 = scalar_select %p53, %s54, %s55
      %p59 = pneg %p53
      %p60 = scmp.eq.s32.totalorder %s23, 1
      %p61 = por %p59, %p60
      %p62 = scmp.ne.s32.totalorder %s54, %s57
      %p63 = scmp.eq.s32.totalorder %s23, 0
      %p64 = por %p62, %p63
      %p65 = scmp.ne.s32.totalorder %s54, %s57
      %p66 = scmp.eq.s32.totalorder %s28, 1
      %p67 = por %p65, %p66
      %p68 = scmp.ne.s32.totalorder %s57, %s58
      %p69 = scmp.eq.s32.totalorder %s28, 0
      %p70 = por %p68, %p69
      %p71 = scmp.ne.s32.totalorder %s57, %s58
      %p72 = scmp.eq.s32.totalorder %s29, 1
      %p73 = por %p71, %p72
      %p75 = scmp.ne.s32.totalorder %s58, %s74
      %p76 = scmp.eq.s32.totalorder %s29, 0
      %p77 = por %p75, %p76
      %s79 = sadd.s32 %s78, 1
      %p82 = scmp.eq.s32.totalorder %s23, 1
      %p83 = scmp.ne.s32.totalorder %s78, %s80
      %p84 = scmp.eq.s32.totalorder %s23, 0
      %p85 = por %p83, %p84
      %p86 = scmp.ne.s32.totalorder %s78, %s80
      %p87 = scmp.eq.s32.totalorder %s28, 1
      %p88 = por %p86, %p87
      %p89 = scmp.ne.s32.totalorder %s80, %s81
      %p90 = scmp.eq.s32.totalorder %s28, 0
      %p91 = por %p89, %p90
      %p92 = scmp.ne.s32.totalorder %s80, %s81
      %p93 = scmp.eq.s32.totalorder %s29, 1
      %p94 = por %p92, %p93
      %p96 = scmp.ne.s32.totalorder %s81, %s95
      %p97 = scmp.eq.s32.totalorder %s29, 0
      %p98 = por %p96, %p97
      %s100 = sadd.s32 %s99, 1
      %p103 = scmp.eq.s32.totalorder %s23, 1
      %p104 = scmp.ne.s32.totalorder %s99, %s101
      %p105 = scmp.eq.s32.totalorder %s23, 0
      %p106 = por %p104, %p105
      %p107 = scmp.ne.s32.totalorder %s99, %s101
      %p108 = scmp.eq.s32.totalorder %s28, 1
      %p109 = por %p107, %p108
      %p110 = scmp.ne.s32.totalorder %s101, %s102
      %p111 = scmp.eq.s32.totalorder %s28, 0
      %p112 = por %p110, %p111
      %p113 = scmp.ne.s32.totalorder %s101, %s102
      %p114 = scmp.eq.s32.totalorder %s29, 1
      %p115 = por %p113, %p114
      %p117 = scmp.ne.s32.totalorder %s102, %s116
      %p118 = scmp.eq.s32.totalorder %s29, 0
      %p119 = por %p117, %p118
      %s121 = sadd.s32 %s120, 1
      %p124 = scmp.eq.s32.totalorder %s23, 1
      %p125 = scmp.ne.s32.totalorder %s120, %s122
      %p126 = scmp.eq.s32.totalorder %s23, 0
      %p127 = por %p125, %p126
      %p128 = scmp.ne.s32.totalorder %s120, %s122
      %p129 = scmp.eq.s32.totalorder %s28, 1
      %p130 = por %p128, %p129
      %p131 = scmp.ne.s32.totalorder %s122, %s123
      %p132 = scmp.eq.s32.totalorder %s28, 0
      %p133 = por %p131, %p132
      %p134 = scmp.ne.s32.totalorder %s122, %s123
      %p135 = scmp.eq.s32.totalorder %s29, 1
      %p136 = por %p134, %p135
      %p138 = scmp.ne.s32.totalorder %s123, %s137
      %p139 = scmp.eq.s32.totalorder %s29, 0
      %p140 = por %p138, %p139
      %s142 = sadd.s32 %s141, 1
      %p145 = scmp.eq.s32.totalorder %s23, 1
      %p146 = scmp.ne.s32.totalorder %s141, %s143
      %p147 = scmp.eq.s32.totalorder %s23, 0
      %p148 = por %p146, %p147
      %p149 = scmp.ne.s32.totalorder %s141, %s143
      %p150 = scmp.eq.s32.totalorder %s28, 1
      %p151 = por %p149, %p150
      %p152 = scmp.ne.s32.totalorder %s143, %s144
      %p153 = scmp.eq.s32.totalorder %s28, 0
      %p154 = por %p152, %p153
      %p155 = scmp.ne.s32.totalorder %s143, %s144
      %p156 = scmp.eq.s32.totalorder %s29, 1
      %p157 = por %p155, %p156
      %p159 = scmp.ne.s32.totalorder %s144, %s158
      %p160 = scmp.eq.s32.totalorder %s29, 0
      %p161 = por %p159, %p160
      %s163 = sadd.s32 %s162, 1
      %p166 = scmp.eq.s32.totalorder %s23, 1
      %p167 = scmp.ne.s32.totalorder %s162, %s164
      %p168 = scmp.eq.s32.totalorder %s23, 0
      %p169 = por %p167, %p168
      %p170 = scmp.ne.s32.totalorder %s162, %s164
      %p171 = scmp.eq.s32.totalorder %s28, 1
      %p172 = por %p170, %p171
      %p173 = scmp.ne.s32.totalorder %s164, %s165
      %p174 = scmp.eq.s32.totalorder %s28, 0
      %p175 = por %p173, %p174
      %p176 = scmp.ne.s32.totalorder %s164, %s165
      %p177 = scmp.eq.s32.totalorder %s29, 1
      %p178 = por %p176, %p177
      %p180 = scmp.ne.s32.totalorder %s165, %s179
      %p181 = scmp.eq.s32.totalorder %s29, 0
      %p182 = por %p180, %p181
      %s184 = sadd.s32 %s183, 1
      %p187 = scmp.eq.s32.totalorder %s23, 1
      %p188 = scmp.ne.s32.totalorder %s183, %s185
      %p189 = scmp.eq.s32.totalorder %s23, 0
      %p190 = por %p188, %p189
      %p191 = scmp.ne.s32.totalorder %s183, %s185
      %p192 = scmp.eq.s32.totalorder %s28, 1
      %p193 = por %p191, %p192
      %p194 = scmp.ne.s32.totalorder %s185, %s186
      %p195 = scmp.eq.s32.totalorder %s28, 0
      %p196 = por %p194, %p195
      %p197 = scmp.ne.s32.totalorder %s185, %s186
      %p198 = scmp.eq.s32.totalorder %s29, 1
      %p199 = por %p197, %p198
      %p201 = scmp.ne.s32.totalorder %s186, %s200
      %p202 = scmp.eq.s32.totalorder %s29, 0
      %p203 = por %p201, %p202
      %s205 = sadd.s32 %s204, 1
      %p208 = scmp.eq.s32.totalorder %s23, 1
      %p209 = scmp.ne.s32.totalorder %s204, %s206
      %p210 = scmp.eq.s32.totalorder %s23, 0
      %p211 = por %p209, %p210
      %p212 = scmp.ne.s32.totalorder %s204, %s206
      %p213 = scmp.eq.s32.totalorder %s28, 1
      %p214 = por %p212, %p213
      %p215 = scmp.ne.s32.totalorder %s206, %s207
      %p216 = scmp.eq.s32.totalorder %s28, 0
      %p217 = por %p215, %p216
      %p218 = scmp.ne.s32.totalorder %s206, %s207
      %p219 = scmp.eq.s32.totalorder %s29, 1
      %p220 = por %p218, %p219
      %p222 = scmp.ne.s32.totalorder %s207, %s221
      %p223 = scmp.eq.s32.totalorder %s29, 0
      %p224 = por %p222, %p223
      %s226 = sadd.s32 %s225, 1
      %p229 = scmp.eq.s32.totalorder %s23, 1
      %p230 = scmp.ne.s32.totalorder %s225, %s227
      %p231 = scmp.eq.s32.totalorder %s23, 0
      %p232 = por %p230, %p231
      %p233 = scmp.ne.s32.totalorder %s225, %s227
      %p234 = scmp.eq.s32.totalorder %s28, 1
      %p235 = por %p233, %p234
      %p236 = scmp.ne.s32.totalorder %s227, %s228
      %p237 = scmp.eq.s32.totalorder %s28, 0
      %p238 = por %p236, %p237
      %p239 = scmp.ne.s32.totalorder %s227, %s228
      %p240 = scmp.eq.s32.totalorder %s29, 1
      %p241 = por %p239, %p240
      %p243 = scmp.ne.s32.totalorder %s228, %s242
      %p244 = scmp.eq.s32.totalorder %s29, 0
      %p245 = por %p243, %p244
      %s247 = sadd.s32 %s246, 1
      %p250 = scmp.eq.s32.totalorder %s23, 1
      %p251 = scmp.ne.s32.totalorder %s246, %s248
      %p252 = scmp.eq.s32.totalorder %s23, 0
      %p253 = por %p251, %p252
      %p254 = scmp.ne.s32.totalorder %s246, %s248
      %p255 = scmp.eq.s32.totalorder %s28, 1
      %p256 = por %p254, %p255
      %p257 = scmp.ne.s32.totalorder %s248, %s249
      %p258 = scmp.eq.s32.totalorder %s28, 0
      %p259 = por %p257, %p258
      %p260 = scmp.ne.s32.totalorder %s248, %s249
      %p261 = scmp.eq.s32.totalorder %s29, 1
      %p262 = por %p260, %p261
      %p264 = scmp.ne.s32.totalorder %s249, %s263
      %p265 = scmp.eq.s32.totalorder %s29, 0
      %p266 = por %p264, %p265
      %s268 = sadd.s32 %s267, 1
      %p271 = scmp.eq.s32.totalorder %s23, 1
      %p272 = scmp.ne.s32.totalorder %s267, %s269
      %p273 = scmp.eq.s32.totalorder %s23, 0
      %p274 = por %p272, %p273
      %p275 = scmp.ne.s32.totalorder %s267, %s269
      %p276 = scmp.eq.s32.totalorder %s28, 1
      %p277 = por %p275, %p276
      %p278 = scmp.ne.s32.totalorder %s269, %s270
      %p279 = scmp.eq.s32.totalorder %s28, 0
      %p280 = por %p278, %p279
      %p281 = scmp.ne.s32.totalorder %s269, %s270
      %p282 = scmp.eq.s32.totalorder %s29, 1
      %p283 = por %p281, %p282
      %p285 = scmp.ne.s32.totalorder %s270, %s284
      %p286 = scmp.eq.s32.totalorder %s29, 0
      %p287 = por %p285, %p286
      %s289 = sadd.s32 %s288, 1
      %p292 = scmp.eq.s32.totalorder %s23, 1
      %p293 = scmp.ne.s32.totalorder %s288, %s290
      %p294 = scmp.eq.s32.totalorder %s23, 0
      %p295 = por %p293, %p294
      %p296 = scmp.ne.s32.totalorder %s288, %s290
      %p297 = scmp.eq.s32.totalorder %s28, 1
      %p298 = por %p296, %p297
      %p299 = scmp.ne.s32.totalorder %s290, %s291
      %p300 = scmp.eq.s32.totalorder %s28, 0
      %p301 = por %p299, %p300
      %p302 = scmp.ne.s32.totalorder %s290, %s291
      %p303 = scmp.eq.s32.totalorder %s29, 1
      %p304 = por %p302, %p303
      %p306 = scmp.ne.s32.totalorder %s291, %s305
      %p307 = scmp.eq.s32.totalorder %s29, 0
      %p308 = por %p306, %p307
      %s310 = sadd.s32 %s309, 1
      %p313 = scmp.eq.s32.totalorder %s23, 1
      %p314 = scmp.ne.s32.totalorder %s309, %s311
      %p315 = scmp.eq.s32.totalorder %s23, 0
      %p316 = por %p314, %p315
      %p317 = scmp.ne.s32.totalorder %s309, %s311
      %p318 = scmp.eq.s32.totalorder %s28, 1
      %p319 = por %p317, %p318
      %p320 = scmp.ne.s32.totalorder %s311, %s312
      %p321 = scmp.eq.s32.totalorder %s28, 0
      %p322 = por %p320, %p321
      %p323 = scmp.ne.s32.totalorder %s311, %s312
      %p324 = scmp.eq.s32.totalorder %s29, 1
      %p325 = por %p323, %p324
      %p327 = scmp.ne.s32.totalorder %s312, %s326
      %p328 = scmp.eq.s32.totalorder %s29, 0
      %p329 = por %p327, %p328
      %s330 = ssub.s32 %s23, %s30
      %p331 = scmp.eq.s32.totalorder %s330, 0
      %s333 = sadd.s32 %s332, 1
      %s334 = scalar_select %p331, %s332, %s333
      %p337 = pneg %p331
      %p338 = scmp.eq.s32.totalorder %s23, 1
      %p339 = por %p337, %p338
      %p340 = scmp.ne.s32.totalorder %s332, %s335
      %p341 = scmp.eq.s32.totalorder %s23, 0
      %p342 = por %p340, %p341
      %p343 = scmp.ne.s32.totalorder %s332, %s335
      %p344 = scmp.eq.s32.totalorder %s28, 1
      %p345 = por %p343, %p344
      %p346 = scmp.ne.s32.totalorder %s335, %s336
      %p347 = scmp.eq.s32.totalorder %s28, 0
      %p348 = por %p346, %p347
      %p349 = scmp.ne.s32.totalorder %s335, %s336
      %p350 = scmp.eq.s32.totalorder %s29, 1
      %p351 = por %p349, %p350
      %p353 = scmp.ne.s32.totalorder %s336, %s352
      %p354 = scmp.eq.s32.totalorder %s29, 0
      %p355 = por %p353, %p354
      %p356 = scmp.le.s32.totalorder 1, %s23
      %p357 = scmp.lt.s32.totalorder %s23, 3
      %p358 = pnand %p356, %p357
      %p359 = pneg %p358
      // Predicated region
      $region9: #{dala_forward.1} parent=5 // pred_check
        _
      $region10: #{dala_forward.1} parent=5 // pred_check_branch
        %361 = sbr.rel (%p358) target = $region12
      $region11: #{dala_forward.1} parent=5 // pred_region
        %s362 = ssub.s32 %s23, 1
        // Predicated region
        $region13: #{dala_forward.1} parent=11 // pred_check
          %p363 = pneg %p44
        $region14: #{dala_forward.1} parent=11 // pred_check_branch
          %365 = sbr.rel (%p363) target = $region16
        $region15: #{dala_forward.1} parent=11 // pred_region
          _
        $region16: #{dala_forward.1} parent=11 // pred_fallthru
          _
        // Predicated region
        $region17: #{dala_forward.1} parent=11 // pred_check
          %p366 = pneg %p91
        $region18: #{dala_forward.1} parent=11 // pred_check_branch
          %368 = sbr.rel (%p366) target = $region20
        $region19: #{dala_forward.1} parent=11 // pred_region
          _
        $region20: #{dala_forward.1} parent=11 // pred_fallthru
          _
        // Predicated region
        $region21: #{dala_forward.1} parent=11 // pred_check
          %p369 = pneg %p112
        $region22: #{dala_forward.1} parent=11 // pred_check_branch
          %371 = sbr.rel (%p369) target = $region24
        $region23: #{dala_forward.1} parent=11 // pred_region
          _
        $region24: #{dala_forward.1} parent=11 // pred_fallthru
          _
        // Predicated region
        $region25: #{dala_forward.1} parent=11 // pred_check
          %p372 = pneg %p133
        $region26: #{dala_forward.1} parent=11 // pred_check_branch
          %374 = sbr.rel (%p372) target = $region28
        $region27: #{dala_forward.1} parent=11 // pred_region
          _
        $region28: #{dala_forward.1} parent=11 // pred_fallthru
          _
        // Predicated region
        $region29: #{dala_forward.1} parent=11 // pred_check
          %p375 = pneg %p154
        $region30: #{dala_forward.1} parent=11 // pred_check_branch
          %377 = sbr.rel (%p375) target = $region32
        $region31: #{dala_forward.1} parent=11 // pred_region
          _
        $region32: #{dala_forward.1} parent=11 // pred_fallthru
          _
        // Predicated region
        $region33: #{dala_forward.1} parent=11 // pred_check
          %p378 = pneg %p175
        $region34: #{dala_forward.1} parent=11 // pred_check_branch
          %380 = sbr.rel (%p378) target = $region36
        $region35: #{dala_forward.1} parent=11 // pred_region
          _
        $region36: #{dala_forward.1} parent=11 // pred_fallthru
          _
        // Predicated region
        $region37: #{dala_forward.1} parent=11 // pred_check
          %p381 = pneg %p196
        $region38: #{dala_forward.1} parent=11 // pred_check_branch
          %383 = sbr.rel (%p381) target = $region40
        $region39: #{dala_forward.1} parent=11 // pred_region
          _
        $region40: #{dala_forward.1} parent=11 // pred_fallthru
          _
        // Predicated region
        $region41: #{dala_forward.1} parent=11 // pred_check
          %p384 = pneg %p217
        $region42: #{dala_forward.1} parent=11 // pred_check_branch
          %386 = sbr.rel (%p384) target = $region44
        $region43: #{dala_forward.1} parent=11 // pred_region
          _
        $region44: #{dala_forward.1} parent=11 // pred_fallthru
          _
        // Predicated region
        $region45: #{dala_forward.1} parent=11 // pred_check
          %p387 = pneg %p238
        $region46: #{dala_forward.1} parent=11 // pred_check_branch
          %389 = sbr.rel (%p387) target = $region48
        $region47: #{dala_forward.1} parent=11 // pred_region
          _
        $region48: #{dala_forward.1} parent=11 // pred_fallthru
          _
        // Predicated region
        $region49: #{dala_forward.1} parent=11 // pred_check
          %p390 = pneg %p259
        $region50: #{dala_forward.1} parent=11 // pred_check_branch
          %392 = sbr.rel (%p390) target = $region52
        $region51: #{dala_forward.1} parent=11 // pred_region
          _
        $region52: #{dala_forward.1} parent=11 // pred_fallthru
          _
        // Predicated region
        $region53: #{dala_forward.1} parent=11 // pred_check
          %p393 = pneg %p280
        $region54: #{dala_forward.1} parent=11 // pred_check_branch
          %395 = sbr.rel (%p393) target = $region56
        $region55: #{dala_forward.1} parent=11 // pred_region
          _
        $region56: #{dala_forward.1} parent=11 // pred_fallthru
          _
        // Predicated region
        $region57: #{dala_forward.1} parent=11 // pred_check
          %p396 = pneg %p301
        $region58: #{dala_forward.1} parent=11 // pred_check_branch
          %398 = sbr.rel (%p396) target = $region60
        $region59: #{dala_forward.1} parent=11 // pred_region
          _
        $region60: #{dala_forward.1} parent=11 // pred_fallthru
          _
        // Predicated region
        $region61: #{dala_forward.1} parent=11 // pred_check
          %p399 = pneg %p322
        $region62: #{dala_forward.1} parent=11 // pred_check_branch
          %401 = sbr.rel (%p399) target = $region64
        $region63: #{dala_forward.1} parent=11 // pred_region
          _
        $region64: #{dala_forward.1} parent=11 // pred_fallthru
          _
      $region12: #{dala_forward.1} parent=5 // pred_fallthru
        _
      %p402 = scmp.lt.s32.totalorder %s23, 2
      // Predicated region
      $region65: #{dala_forward.1} parent=5 // pred_check
        %p403 = pneg %p402
      $region66: #{dala_forward.1} parent=5 // pred_check_branch
        %405 = sbr.rel (%p403) target = $region68
      $region67: #{dala_forward.1} parent=5 // pred_region
        // Predicated region
        $region69: #{dala_forward.1} parent=67 // pred_check
          %p406 = pneg %p64
        $region70: #{dala_forward.1} parent=67 // pred_check_branch
          %408 = sbr.rel (%p406) target = $region72
        $region71: #{dala_forward.1} parent=67 // pred_region
          %p409 = scmp.lt.s32.totalorder %s23, 1
          %s410 = scalar_select %p409, %s23, 1
          %s411 = smul.addr %s410, 8
          %s412 = scalar_lea.vmem %s1, %s411
        $region72: #{dala_forward.1} parent=67 // pred_fallthru
          _
      $region68: #{dala_forward.1} parent=5 // pred_fallthru
        _
      %p413 = scmp.le.s32.totalorder 1, %s23
      %p414 = scmp.lt.s32.totalorder %s23, 3
      %p415 = pnand %p413, %p414
      %p416 = pneg %p415
      // Predicated region
      $region73: #{dala_forward.1} parent=5 // pred_check
        _
      $region74: #{dala_forward.1} parent=5 // pred_check_branch
        %418 = sbr.rel (%p415) target = $region76
      $region75: #{dala_forward.1} parent=5 // pred_region
        %s419 = ssub.s32 %s23, 1
        %p420 = pneg %p44
        %p421 = pneg %p41
        %p422 = scmp.lt.s32.totalorder %s28, 1
        %s423 = scalar_select %p422, %s28, 1
        %s424 = smul.addr %s423, 8
        %s425 = scalar_lea.vmem %s1, %s424
        %p426 = pneg %p70
        %p427 = pneg %p67
        %p428 = pneg %p91
        %p429 = pneg %p88
        %p430 = pneg %p112
        %p431 = pneg %p109
        %p432 = pneg %p133
        %p433 = pneg %p130
        %p434 = pneg %p154
        %p435 = pneg %p151
        %p436 = pneg %p175
        %p437 = pneg %p172
        %p438 = pneg %p196
        %p439 = pneg %p193
        %p440 = pneg %p217
        %p441 = pneg %p214
        %p442 = pneg %p238
        %p443 = pneg %p235
        %p444 = pneg %p259
        %p445 = pneg %p256
        %p446 = pneg %p280
        %p447 = pneg %p277
        %p448 = pneg %p301
        %p449 = pneg %p298
        %p450 = pneg %p322
        %p451 = pneg %p319
        %p452 = pneg %p348
        %p453 = pneg %p345
        %s454 = sand.u32 %s335, 1
        %s455 = scalar_lea.sflag [#allocation3], %s454
        %s456 = sand.u32 %s335, 1
        %s457 = smul.addr %s456, 8
        %s458 = scalar_lea.vmem [#allocation2], %s457
        %p459 = scmp.lt.s32.totalorder %s28, 1
        %s460 = scalar_select %p459, %s28, 1
        %s461 = smul.addr %s460, 8
        %s462 = scalar_lea.vmem %s1, %s461
        %v463 = vld [vmem:[%s462] sm:$0xff]
        %v464 = vld [vmem:[%s0] sm:$0xff]
        %v465 = vadd.f32 %v463, %v464
        %v466 = vld [vmem:[%s2] sm:$0xff]
        %v467 = vld [vmem:[%s2 + $0x8] sm:$0xff]
        %v468 = vld [vmem:[%s2 + $0x10] sm:$0xff]
        %v469 = vld [vmem:[%s2 + $0x18] sm:$0xff]
        %v470 = vld [vmem:[%s3] sm:$0x1]
        %v472 = vlaneseq
        %v473 = vshrl.u32 %v472, 7
        %v474 = vsub.s32 0, %v473
        %v475 = vrot.slane %v470, %v474
        %vm477 = vcmask 261120
        %v479 = vsel %vm477, %v465, 0
        %481 = vmatprep.subr.mxu0 0.0
        %482 = vmatpush1.msra.mxu0 0.0
        %483 = vmatprep.subr.mxu0 0.0
        %484 = vmatpush1.msra.mxu0 0.0
        %485 = vmatprep.subr.mxu0 0.0
        %486 = vmatpush1.msra.mxu0 0.0
        %487 = vmatprep.subr.mxu0 0.0
        %488 = vmatpush1.msra.mxu0 0.0
        %489 = vmatprep.subr.mxu0 0.0
        %490 = vmatpush1.msra.mxu0 0.0
        %491 = vmatprep.subr.mxu0 0.0
        %492 = vmatpush1.msra.mxu0 0.0
        %493 = vmatprep.subr.mxu0 0.0
        %494 = vmatpush1.msra.mxu0 0.0
        %495 = vmatprep.subr.mxu0 0.0
        %496 = vmatpush1.msra.mxu0 0.0
        %497 = vmatprep.subr.mxu0 0.0
        %498 = vmatpush1.msra.mxu0 0.0
        %499 = vmatprep.subr.mxu0 0.0
        %500 = vmatpush1.msra.mxu0 0.0
        %501 = vmatprep.subr.mxu0 0.0
        %502 = vmatpush1.msra.mxu0 0.0
        %503 = vmatprep.subr.mxu0 0.0
        %504 = vmatpush1.msra.mxu0 0.0
        %505 = vmatprep.subr.mxu0 0.0
        %506 = vmatpush1.msra.mxu0 %v469
        %507 = vmatprep.subr.mxu0 0.0
        %508 = vmatpush1.msra.mxu0 %v468
        %509 = vmatprep.subr.mxu0 0.0
        %510 = vmatpush1.msra.mxu0 %v467
        %511 = vmatprep.subr.mxu0 0.0
        %512 = vmatpush1.msra.mxu0 %v466
        %513 = vmatprep.subr.mxu0 0.0
        %514 = vmatpush2.msra.mxu0 0.0
        %515 = vmatprep.subr.mxu0 0.0
        %516 = vmatpush2.msra.mxu0 0.0
        %517 = vmatprep.subr.mxu0 0.0
        %518 = vmatpush2.msra.mxu0 0.0
        %519 = vmatprep.subr.mxu0 0.0
        %520 = vmatpush2.msra.mxu0 0.0
        %521 = vmatprep.subr.mxu0 0.0
        %522 = vmatpush2.msra.mxu0 0.0
        %523 = vmatprep.subr.mxu0 0.0
        %524 = vmatpush2.msra.mxu0 0.0
        %525 = vmatprep.subr.mxu0 0.0
        %526 = vmatpush2.msra.mxu0 0.0
        %527 = vmatprep.subr.mxu0 0.0
        %528 = vmatpush2.msra.mxu0 0.0
        %529 = vmatprep.subr.mxu0 0.0
        %530 = vmatpush2.msra.mxu0 0.0
        %531 = vmatprep.subr.mxu0 0.0
        %532 = vmatpush2.msra.mxu0 0.0
        %533 = vmatprep.subr.mxu0 0.0
        %534 = vmatpush2.msra.mxu0 0.0
        %535 = vmatprep.subr.mxu0 0.0
        %536 = vmatpush2.msra.mxu0 0.0
        %537 = vmatprep.subr.mxu0 0.0
        %538 = vmatpush2.msra.mxu0 0.0
        %539 = vmatprep.subr.mxu0 0.0
        %540 = vmatpush2.msra.mxu0 0.0
        %541 = vmatprep.subr.mxu0 0.0
        %542 = vmatpush2.msra.mxu0 0.0
        %543 = vmatprep.subr.mxu0 0.0
        %544 = vmatpush2.msra.mxu0 0.0
        %545 = vmatprep.mubr.f32.mxu0 0.0
        %546 = vmatmul.mubr.f32.gmra.mxu0 %v479
        %v547 = vpop.f32.mrf.mxu0
        %v548 = vadd.f32 %v475, %v547
        %v549 = vpop.f32.mrf.mxu0
        %550 = vdwg.mxu0
        %552 = vrot.lane.b32.xlu0 %v548, 96
        %v553 = vpop.permute.xlu0 %552
        %vm554 = vcmask 64512
        %v555 = vsel %vm554, %v548, 0
        %v557 = vsel %vm554, %v553, 0
        %559 = vmatprep.subr.mxu0 0.0
        %560 = vmatpush1.xpose.msra.mxu0 0.0
        %561 = vmatprep.subr.mxu0 0.0
        %562 = vmatpush1.xpose.msra.mxu0 0.0
        %563 = vmatprep.subr.mxu0 0.0
        %564 = vmatpush1.xpose.msra.mxu0 0.0
        %565 = vmatprep.subr.mxu0 0.0
        %566 = vmatpush1.xpose.msra.mxu0 0.0
        %567 = vmatprep.subr.mxu0 0.0
        %568 = vmatpush1.xpose.msra.mxu0 0.0
        %569 = vmatprep.subr.mxu0 0.0
        %570 = vmatpush1.xpose.msra.mxu0 0.0
        %571 = vmatprep.subr.mxu0 0.0
        %572 = vmatpush1.xpose.msra.mxu0 0.0
        %573 = vmatprep.subr.mxu0 0.0
        %574 = vmatpush1.xpose.msra.mxu0 0.0
        %575 = vmatprep.subr.mxu0 0.0
        %576 = vmatpush1.xpose.msra.mxu0 0.0
        %577 = vmatprep.subr.mxu0 0.0
        %578 = vmatpush1.xpose.msra.mxu0 0.0
        %579 = vmatprep.subr.mxu0 0.0
        %580 = vmatpush1.xpose.msra.mxu0 0.0
        %581 = vmatprep.subr.mxu0 0.0
        %582 = vmatpush1.xpose.msra.mxu0 0.0
        %583 = vmatprep.subr.mxu0 0.0
        %584 = vmatpush1.xpose.msra.mxu0 0.0
        %585 = vmatprep.subr.mxu0 0.0
        %586 = vmatpush1.xpose.msra.mxu0 0.0
        %587 = vmatprep.subr.mxu0 0.0
        %588 = vmatpush1.xpose.msra.mxu0 0.0
        %589 = vmatprep.subr.mxu0 0.0
        %590 = vmatpush1.xpose.msra.mxu0 %v557
        %591 = vmatprep.subr.mxu0 0.0
        %592 = vmatpush2.xpose.msra.mxu0 0.0
        %593 = vmatprep.subr.mxu0 0.0
        %594 = vmatpush2.xpose.msra.mxu0 0.0
        %595 = vmatprep.subr.mxu0 0.0
        %596 = vmatpush2.xpose.msra.mxu0 0.0
        %597 = vmatprep.subr.mxu0 0.0
        %598 = vmatpush2.xpose.msra.mxu0 0.0
        %599 = vmatprep.subr.mxu0 0.0
        %600 = vmatpush2.xpose.msra.mxu0 0.0
        %601 = vmatprep.subr.mxu0 0.0
        %602 = vmatpush2.xpose.msra.mxu0 0.0
        %603 = vmatprep.subr.mxu0 0.0
        %604 = vmatpush2.xpose.msra.mxu0 0.0
        %605 = vmatprep.subr.mxu0 0.0
        %606 = vmatpush2.xpose.msra.mxu0 0.0
        %607 = vmatprep.subr.mxu0 0.0
        %608 = vmatpush2.xpose.msra.mxu0 0.0
        %609 = vmatprep.subr.mxu0 0.0
        %610 = vmatpush2.xpose.msra.mxu0 0.0
        %611 = vmatprep.subr.mxu0 0.0
        %612 = vmatpush2.xpose.msra.mxu0 0.0
        %613 = vmatprep.subr.mxu0 0.0
        %614 = vmatpush2.xpose.msra.mxu0 0.0
        %615 = vmatprep.subr.mxu0 0.0
        %616 = vmatpush2.xpose.msra.mxu0 0.0
        %617 = vmatprep.subr.mxu0 0.0
        %618 = vmatpush2.xpose.msra.mxu0 0.0
        %619 = vmatprep.subr.mxu0 0.0
        %620 = vmatpush2.xpose.msra.mxu0 0.0
        %621 = vmatprep.subr.mxu0 0.0
        %622 = vmatpush2.xpose.msra.mxu0 0.0
        %623 = vmatprep.mubr.f32.mxu0 0.0
        %624 = vmatmul.mubr.f32.gmra.mxu0 %v555
        %v625 = vpop.f32.mrf.mxu0
        %v626 = vadd.f32 0.0, %v625
        %v627 = vpop.f32.mrf.mxu0
        %628 = vdwg.mxu0
        %v629 = vsel %vm554, %v626, -inf
        %630 = vmax.xlane.f32.xlu0 %v629
        %v631 = vpop.xlane.xlu0 %630
        %v632 = vsub.f32 %v626, %v631
        %v633 = vmul.f32 %v632, 1.442695
        %v634 = vpow.pop %v633
        %v635 = vsel %vm554, %v634, 0.0
        %636 = vadd.xlane.f32.xlu0 %v635
        %v637 = vpop.xlane.xlu0 %636
        %v638 = vrcp.pop %v637
        %v639 = vmul.f32 %v634, %v638
        %640 = vrot.lane.b32.xlu0 %v548, 64
        %v641 = vpop.permute.xlu0 %640
        %v644 = vsel %vm554, %v639, 0
        %646 = vmatprep.subr.mxu0 0.0
        %647 = vmatpush1.msra.mxu0 0.0
        %648 = vmatprep.subr.mxu0 0.0
        %649 = vmatpush1.msra.mxu0 0.0
        %650 = vmatprep.subr.mxu0 0.0
        %651 = vmatpush1.msra.mxu0 0.0
        %652 = vmatprep.subr.mxu0 0.0
        %653 = vmatpush1.msra.mxu0 0.0
        %654 = vmatprep.subr.mxu0 0.0
        %655 = vmatpush1.msra.mxu0 0.0
        %656 = vmatprep.subr.mxu0 0.0
        %657 = vmatpush1.msra.mxu0 0.0
        %658 = vmatprep.subr.mxu0 0.0
        %659 = vmatpush1.msra.mxu0 0.0
        %660 = vmatprep.subr.mxu0 0.0
        %661 = vmatpush1.msra.mxu0 0.0
        %662 = vmatprep.subr.mxu0 0.0
        %663 = vmatpush1.msra.mxu0 0.0
        %664 = vmatprep.subr.mxu0 0.0
        %665 = vmatpush1.msra.mxu0 0.0
        %666 = vmatprep.subr.mxu0 0.0
        %667 = vmatpush1.msra.mxu0 0.0
        %668 = vmatprep.subr.mxu0 0.0
        %669 = vmatpush1.msra.mxu0 0.0
        %670 = vmatprep.subr.mxu0 0.0
        %671 = vmatpush1.msra.mxu0 0.0
        %672 = vmatprep.subr.mxu0 0.0
        %673 = vmatpush1.msra.mxu0 0.0
        %674 = vmatprep.subr.mxu0 0.0
        %675 = vmatpush1.msra.mxu0 0.0
        %676 = vmatprep.subr.mxu0 0.0
        %677 = vmatpush1.msra.mxu0 %v641
        %678 = vmatprep.subr.mxu0 0.0
        %679 = vmatpush2.msra.mxu0 0.0
        %680 = vmatprep.subr.mxu0 0.0
        %681 = vmatpush2.msra.mxu0 0.0
        %682 = vmatprep.subr.mxu0 0.0
        %683 = vmatpush2.msra.mxu0 0.0
        %684 = vmatprep.subr.mxu0 0.0
        %685 = vmatpush2.msra.mxu0 0.0
        %686 = vmatprep.subr.mxu0 0.0
        %687 = vmatpush2.msra.mxu0 0.0
        %688 = vmatprep.subr.mxu0 0.0
        %689 = vmatpush2.msra.mxu0 0.0
        %690 = vmatprep.subr.mxu0 0.0
        %691 = vmatpush2.msra.mxu0 0.0
        %692 = vmatprep.subr.mxu0 0.0
        %693 = vmatpush2.msra.mxu0 0.0
        %694 = vmatprep.subr.mxu0 0.0
        %695 = vmatpush2.msra.mxu0 0.0
        %696 = vmatprep.subr.mxu0 0.0
        %697 = vmatpush2.msra.mxu0 0.0
        %698 = vmatprep.subr.mxu0 0.0
        %699 = vmatpush2.msra.mxu0 0.0
        %700 = vmatprep.subr.mxu0 0.0
        %701 = vmatpush2.msra.mxu0 0.0
        %702 = vmatprep.subr.mxu0 0.0
        %703 = vmatpush2.msra.mxu0 0.0
        %704 = vmatprep.subr.mxu0 0.0
        %705 = vmatpush2.msra.mxu0 0.0
        %706 = vmatprep.subr.mxu0 0.0
        %707 = vmatpush2.msra.mxu0 0.0
        %708 = vmatprep.subr.mxu0 0.0
        %709 = vmatpush2.msra.mxu0 0.0
        %710 = vmatprep.mubr.f32.mxu0 0.0
        %711 = vmatmul.mubr.f32.gmra.mxu0 %v644
        %v712 = vpop.f32.mrf.mxu0
        %v713 = vadd.f32 0.0, %v712
        %v714 = vpop.f32.mrf.mxu0
        %715 = vdwg.mxu0
        %716 = vrot.lane.b32.xlu0 %v548, 120
        %v717 = vpop.permute.xlu0 %716
        %718 = vrot.lane.b32.xlu0 %v548, 88
        %v719 = vpop.permute.xlu0 %718
        %v720 = vsel %vm554, %v717, 0
        %v722 = vsel %vm554, %v719, 0
        %724 = vmatprep.subr.mxu0 0.0
        %725 = vmatpush1.xpose.msra.mxu0 0.0
        %726 = vmatprep.subr.mxu0 0.0
        %727 = vmatpush1.xpose.msra.mxu0 0.0
        %728 = vmatprep.subr.mxu0 0.0
        %729 = vmatpush1.xpose.msra.mxu0 0.0
        %730 = vmatprep.subr.mxu0 0.0
        %731 = vmatpush1.xpose.msra.mxu0 0.0
        %732 = vmatprep.subr.mxu0 0.0
        %733 = vmatpush1.xpose.msra.mxu0 0.0
        %734 = vmatprep.subr.mxu0 0.0
        %735 = vmatpush1.xpose.msra.mxu0 0.0
        %736 = vmatprep.subr.mxu0 0.0
        %737 = vmatpush1.xpose.msra.mxu0 0.0
        %738 = vmatprep.subr.mxu0 0.0
        %739 = vmatpush1.xpose.msra.mxu0 0.0
        %740 = vmatprep.subr.mxu0 0.0
        %741 = vmatpush1.xpose.msra.mxu0 0.0
        %742 = vmatprep.subr.mxu0 0.0
        %743 = vmatpush1.xpose.msra.mxu0 0.0
        %744 = vmatprep.subr.mxu0 0.0
        %745 = vmatpush1.xpose.msra.mxu0 0.0
        %746 = vmatprep.subr.mxu0 0.0
        %747 = vmatpush1.xpose.msra.mxu0 0.0
        %748 = vmatprep.subr.mxu0 0.0
        %749 = vmatpush1.xpose.msra.mxu0 0.0
        %750 = vmatprep.subr.mxu0 0.0
        %751 = vmatpush1.xpose.msra.mxu0 0.0
        %752 = vmatprep.subr.mxu0 0.0
        %753 = vmatpush1.xpose.msra.mxu0 0.0
        %754 = vmatprep.subr.mxu0 0.0
        %755 = vmatpush1.xpose.msra.mxu0 %v722
        %756 = vmatprep.subr.mxu0 0.0
        %757 = vmatpush2.xpose.msra.mxu0 0.0
        %758 = vmatprep.subr.mxu0 0.0
        %759 = vmatpush2.xpose.msra.mxu0 0.0
        %760 = vmatprep.subr.mxu0 0.0
        %761 = vmatpush2.xpose.msra.mxu0 0.0
        %762 = vmatprep.subr.mxu0 0.0
        %763 = vmatpush2.xpose.msra.mxu0 0.0
        %764 = vmatprep.subr.mxu0 0.0
        %765 = vmatpush2.xpose.msra.mxu0 0.0
        %766 = vmatprep.subr.mxu0 0.0
        %767 = vmatpush2.xpose.msra.mxu0 0.0
        %768 = vmatprep.subr.mxu0 0.0
        %769 = vmatpush2.xpose.msra.mxu0 0.0
        %770 = vmatprep.subr.mxu0 0.0
        %771 = vmatpush2.xpose.msra.mxu0 0.0
        %772 = vmatprep.subr.mxu0 0.0
        %773 = vmatpush2.xpose.msra.mxu0 0.0
        %774 = vmatprep.subr.mxu0 0.0
        %775 = vmatpush2.xpose.msra.mxu0 0.0
        %776 = vmatprep.subr.mxu0 0.0
        %777 = vmatpush2.xpose.msra.mxu0 0.0
        %778 = vmatprep.subr.mxu0 0.0
        %779 = vmatpush2.xpose.msra.mxu0 0.0
        %780 = vmatprep.subr.mxu0 0.0
        %781 = vmatpush2.xpose.msra.mxu0 0.0
        %782 = vmatprep.subr.mxu0 0.0
        %783 = vmatpush2.xpose.msra.mxu0 0.0
        %784 = vmatprep.subr.mxu0 0.0
        %785 = vmatpush2.xpose.msra.mxu0 0.0
        %786 = vmatprep.subr.mxu0 0.0
        %787 = vmatpush2.xpose.msra.mxu0 0.0
        %788 = vmatprep.mubr.f32.mxu0 0.0
        %789 = vmatmul.mubr.f32.gmra.mxu0 %v720
        %v790 = vpop.f32.mrf.mxu0
        %v791 = vadd.f32 0.0, %v790
        %v792 = vpop.f32.mrf.mxu0
        %793 = vdwg.mxu0
        %v794 = vsel %vm554, %v791, -inf
        %795 = vmax.xlane.f32.xlu0 %v794
        %v796 = vpop.xlane.xlu0 %795
        %v797 = vsub.f32 %v791, %v796
        %v798 = vmul.f32 %v797, 1.442695
        %v799 = vpow.pop %v798
        %v800 = vsel %vm554, %v799, 0.0
        %801 = vadd.xlane.f32.xlu0 %v800
        %v802 = vpop.xlane.xlu0 %801
        %v803 = vrcp.pop %v802
        %v804 = vmul.f32 %v799, %v803
        %805 = vrot.lane.b32.xlu0 %v548, 56
        %v806 = vpop.permute.xlu0 %805
        %v809 = vsel %vm554, %v804, 0
        %811 = vmatprep.subr.mxu0 0.0
        %812 = vmatpush1.msra.mxu0 0.0
        %813 = vmatprep.subr.mxu0 0.0
        %814 = vmatpush1.msra.mxu0 0.0
        %815 = vmatprep.subr.mxu0 0.0
        %816 = vmatpush1.msra.mxu0 0.0
        %817 = vmatprep.subr.mxu0 0.0
        %818 = vmatpush1.msra.mxu0 0.0
        %819 = vmatprep.subr.mxu0 0.0
        %820 = vmatpush1.msra.mxu0 0.0
        %821 = vmatprep.subr.mxu0 0.0
        %822 = vmatpush1.msra.mxu0 0.0
        %823 = vmatprep.subr.mxu0 0.0
        %824 = vmatpush1.msra.mxu0 0.0
        %825 = vmatprep.subr.mxu0 0.0
        %826 = vmatpush1.msra.mxu0 0.0
        %827 = vmatprep.subr.mxu0 0.0
        %828 = vmatpush1.msra.mxu0 0.0
        %829 = vmatprep.subr.mxu0 0.0
        %830 = vmatpush1.msra.mxu0 0.0
        %831 = vmatprep.subr.mxu0 0.0
        %832 = vmatpush1.msra.mxu0 0.0
        %833 = vmatprep.subr.mxu0 0.0
        %834 = vmatpush1.msra.mxu0 0.0
        %835 = vmatprep.subr.mxu0 0.0
        %836 = vmatpush1.msra.mxu0 0.0
        %837 = vmatprep.subr.mxu0 0.0
        %838 = vmatpush1.msra.mxu0 0.0
        %839 = vmatprep.subr.mxu0 0.0
        %840 = vmatpush1.msra.mxu0 0.0
        %841 = vmatprep.subr.mxu0 0.0
        %842 = vmatpush1.msra.mxu0 %v806
        %843 = vmatprep.subr.mxu0 0.0
        %844 = vmatpush2.msra.mxu0 0.0
        %845 = vmatprep.subr.mxu0 0.0
        %846 = vmatpush2.msra.mxu0 0.0
        %847 = vmatprep.subr.mxu0 0.0
        %848 = vmatpush2.msra.mxu0 0.0
        %849 = vmatprep.subr.mxu0 0.0
        %850 = vmatpush2.msra.mxu0 0.0
        %851 = vmatprep.subr.mxu0 0.0
        %852 = vmatpush2.msra.mxu0 0.0
        %853 = vmatprep.subr.mxu0 0.0
        %854 = vmatpush2.msra.mxu0 0.0
        %855 = vmatprep.subr.mxu0 0.0
        %856 = vmatpush2.msra.mxu0 0.0
        %857 = vmatprep.subr.mxu0 0.0
        %858 = vmatpush2.msra.mxu0 0.0
        %859 = vmatprep.subr.mxu0 0.0
        %860 = vmatpush2.msra.mxu0 0.0
        %861 = vmatprep.subr.mxu0 0.0
        %862 = vmatpush2.msra.mxu0 0.0
        %863 = vmatprep.subr.mxu0 0.0
        %864 = vmatpush2.msra.mxu0 0.0
        %865 = vmatprep.subr.mxu0 0.0
        %866 = vmatpush2.msra.mxu0 0.0
        %867 = vmatprep.subr.mxu0 0.0
        %868 = vmatpush2.msra.mxu0 0.0
        %869 = vmatprep.subr.mxu0 0.0
        %870 = vmatpush2.msra.mxu0 0.0
        %871 = vmatprep.subr.mxu0 0.0
        %872 = vmatpush2.msra.mxu0 0.0
        %873 = vmatprep.subr.mxu0 0.0
        %874 = vmatpush2.msra.mxu0 0.0
        %875 = vmatprep.mubr.f32.mxu0 0.0
        %876 = vmatmul.mubr.f32.gmra.mxu0 %v809
        %v877 = vpop.f32.mrf.mxu0
        %v878 = vadd.f32 0.0, %v877
        %v879 = vpop.f32.mrf.mxu0
        %880 = vdwg.mxu0
        %881 = vrot.lane.b32.xlu0 %v548, 112
        %v882 = vpop.permute.xlu0 %881
        %883 = vrot.lane.b32.xlu0 %v548, 80
        %v884 = vpop.permute.xlu0 %883
        %v885 = vsel %vm554, %v882, 0
        %v887 = vsel %vm554, %v884, 0
        %889 = vmatprep.subr.mxu0 0.0
        %890 = vmatpush1.xpose.msra.mxu0 0.0
        %891 = vmatprep.subr.mxu0 0.0
        %892 = vmatpush1.xpose.msra.mxu0 0.0
        %893 = vmatprep.subr.mxu0 0.0
        %894 = vmatpush1.xpose.msra.mxu0 0.0
        %895 = vmatprep.subr.mxu0 0.0
        %896 = vmatpush1.xpose.msra.mxu0 0.0
        %897 = vmatprep.subr.mxu0 0.0
        %898 = vmatpush1.xpose.msra.mxu0 0.0
        %899 = vmatprep.subr.mxu0 0.0
        %900 = vmatpush1.xpose.msra.mxu0 0.0
        %901 = vmatprep.subr.mxu0 0.0
        %902 = vmatpush1.xpose.msra.mxu0 0.0
        %903 = vmatprep.subr.mxu0 0.0
        %904 = vmatpush1.xpose.msra.mxu0 0.0
        %905 = vmatprep.subr.mxu0 0.0
        %906 = vmatpush1.xpose.msra.mxu0 0.0
        %907 = vmatprep.subr.mxu0 0.0
        %908 = vmatpush1.xpose.msra.mxu0 0.0
        %909 = vmatprep.subr.mxu0 0.0
        %910 = vmatpush1.xpose.msra.mxu0 0.0
        %911 = vmatprep.subr.mxu0 0.0
        %912 = vmatpush1.xpose.msra.mxu0 0.0
        %913 = vmatprep.subr.mxu0 0.0
        %914 = vmatpush1.xpose.msra.mxu0 0.0
        %915 = vmatprep.subr.mxu0 0.0
        %916 = vmatpush1.xpose.msra.mxu0 0.0
        %917 = vmatprep.subr.mxu0 0.0
        %918 = vmatpush1.xpose.msra.mxu0 0.0
        %919 = vmatprep.subr.mxu0 0.0
        %920 = vmatpush1.xpose.msra.mxu0 %v887
        %921 = vmatprep.subr.mxu0 0.0
        %922 = vmatpush2.xpose.msra.mxu0 0.0
        %923 = vmatprep.subr.mxu0 0.0
        %924 = vmatpush2.xpose.msra.mxu0 0.0
        %925 = vmatprep.subr.mxu0 0.0
        %926 = vmatpush2.xpose.msra.mxu0 0.0
        %927 = vmatprep.subr.mxu0 0.0
        %928 = vmatpush2.xpose.msra.mxu0 0.0
        %929 = vmatprep.subr.mxu0 0.0
        %930 = vmatpush2.xpose.msra.mxu0 0.0
        %931 = vmatprep.subr.mxu0 0.0
        %932 = vmatpush2.xpose.msra.mxu0 0.0
        %933 = vmatprep.subr.mxu0 0.0
        %934 = vmatpush2.xpose.msra.mxu0 0.0
        %935 = vmatprep.subr.mxu0 0.0
        %936 = vmatpush2.xpose.msra.mxu0 0.0
        %937 = vmatprep.subr.mxu0 0.0
        %938 = vmatpush2.xpose.msra.mxu0 0.0
        %939 = vmatprep.subr.mxu0 0.0
        %940 = vmatpush2.xpose.msra.mxu0 0.0
        %941 = vmatprep.subr.mxu0 0.0
        %942 = vmatpush2.xpose.msra.mxu0 0.0
        %943 = vmatprep.subr.mxu0 0.0
        %944 = vmatpush2.xpose.msra.mxu0 0.0
        %945 = vmatprep.subr.mxu0 0.0
        %946 = vmatpush2.xpose.msra.mxu0 0.0
        %947 = vmatprep.subr.mxu0 0.0
        %948 = vmatpush2.xpose.msra.mxu0 0.0
        %949 = vmatprep.subr.mxu0 0.0
        %950 = vmatpush2.xpose.msra.mxu0 0.0
        %951 = vmatprep.subr.mxu0 0.0
        %952 = vmatpush2.xpose.msra.mxu0 0.0
        %953 = vmatprep.mubr.f32.mxu0 0.0
        %954 = vmatmul.mubr.f32.gmra.mxu0 %v885
        %v955 = vpop.f32.mrf.mxu0
        %v956 = vadd.f32 0.0, %v955
        %v957 = vpop.f32.mrf.mxu0
        %958 = vdwg.mxu0
        %v959 = vsel %vm554, %v956, -inf
        %960 = vmax.xlane.f32.xlu0 %v959
        %v961 = vpop.xlane.xlu0 %960
        %v962 = vsub.f32 %v956, %v961
        %v963 = vmul.f32 %v962, 1.442695
        %v964 = vpow.pop %v963
        %v965 = vsel %vm554, %v964, 0.0
        %966 = vadd.xlane.f32.xlu0 %v965
        %v967 = vpop.xlane.xlu0 %966
        %v968 = vrcp.pop %v967
        %v969 = vmul.f32 %v964, %v968
        %970 = vrot.lane.b32.xlu0 %v548, 48
        %v971 = vpop.permute.xlu0 %970
        %v974 = vsel %vm554, %v969, 0
        %976 = vmatprep.subr.mxu0 0.0
        %977 = vmatpush1.msra.mxu0 0.0
        %978 = vmatprep.subr.mxu0 0.0
        %979 = vmatpush1.msra.mxu0 0.0
        %980 = vmatprep.subr.mxu0 0.0
        %981 = vmatpush1.msra.mxu0 0.0
        %982 = vmatprep.subr.mxu0 0.0
        %983 = vmatpush1.msra.mxu0 0.0
        %984 = vmatprep.subr.mxu0 0.0
        %985 = vmatpush1.msra.mxu0 0.0
        %986 = vmatprep.subr.mxu0 0.0
        %987 = vmatpush1.msra.mxu0 0.0
        %988 = vmatprep.subr.mxu0 0.0
        %989 = vmatpush1.msra.mxu0 0.0
        %990 = vmatprep.subr.mxu0 0.0
        %991 = vmatpush1.msra.mxu0 0.0
        %992 = vmatprep.subr.mxu0 0.0
        %993 = vmatpush1.msra.mxu0 0.0
        %994 = vmatprep.subr.mxu0 0.0
        %995 = vmatpush1.msra.mxu0 0.0
        %996 = vmatprep.subr.mxu0 0.0
        %997 = vmatpush1.msra.mxu0 0.0
        %998 = vmatprep.subr.mxu0 0.0
        %999 = vmatpush1.msra.mxu0 0.0
        %1000 = vmatprep.subr.mxu0 0.0
        %1001 = vmatpush1.msra.mxu0 0.0
        %1002 = vmatprep.subr.mxu0 0.0
        %1003 = vmatpush1.msra.mxu0 0.0
        %1004 = vmatprep.subr.mxu0 0.0
        %1005 = vmatpush1.msra.mxu0 0.0
        %1006 = vmatprep.subr.mxu0 0.0
        %1007 = vmatpush1.msra.mxu0 %v971
        %1008 = vmatprep.subr.mxu0 0.0
        %1009 = vmatpush2.msra.mxu0 0.0
        %1010 = vmatprep.subr.mxu0 0.0
        %1011 = vmatpush2.msra.mxu0 0.0
        %1012 = vmatprep.subr.mxu0 0.0
        %1013 = vmatpush2.msra.mxu0 0.0
        %1014 = vmatprep.subr.mxu0 0.0
        %1015 = vmatpush2.msra.mxu0 0.0
        %1016 = vmatprep.subr.mxu0 0.0
        %1017 = vmatpush2.msra.mxu0 0.0
        %1018 = vmatprep.subr.mxu0 0.0
        %1019 = vmatpush2.msra.mxu0 0.0
        %1020 = vmatprep.subr.mxu0 0.0
        %1021 = vmatpush2.msra.mxu0 0.0
        %1022 = vmatprep.subr.mxu0 0.0
        %1023 = vmatpush2.msra.mxu0 0.0
        %1024 = vmatprep.subr.mxu0 0.0
        %1025 = vmatpush2.msra.mxu0 0.0
        %1026 = vmatprep.subr.mxu0 0.0
        %1027 = vmatpush2.msra.mxu0 0.0
        %1028 = vmatprep.subr.mxu0 0.0
        %1029 = vmatpush2.msra.mxu0 0.0
        %1030 = vmatprep.subr.mxu0 0.0
        %1031 = vmatpush2.msra.mxu0 0.0
        %1032 = vmatprep.subr.mxu0 0.0
        %1033 = vmatpush2.msra.mxu0 0.0
        %1034 = vmatprep.subr.mxu0 0.0
        %1035 = vmatpush2.msra.mxu0 0.0
        %1036 = vmatprep.subr.mxu0 0.0
        %1037 = vmatpush2.msra.mxu0 0.0
        %1038 = vmatprep.subr.mxu0 0.0
        %1039 = vmatpush2.msra.mxu0 0.0
        %1040 = vmatprep.mubr.f32.mxu0 0.0
        %1041 = vmatmul.mubr.f32.gmra.mxu0 %v974
        %v1042 = vpop.f32.mrf.mxu0
        %v1043 = vadd.f32 0.0, %v1042
        %v1044 = vpop.f32.mrf.mxu0
        %1045 = vdwg.mxu0
        %1046 = vrot.lane.b32.xlu0 %v548, 104
        %v1047 = vpop.permute.xlu0 %1046
        %1048 = vrot.lane.b32.xlu0 %v548, 72
        %v1049 = vpop.permute.xlu0 %1048
        %v1050 = vsel %vm554, %v1047, 0
        %v1052 = vsel %vm554, %v1049, 0
        %1054 = vmatprep.subr.mxu0 0.0
        %1055 = vmatpush1.xpose.msra.mxu0 0.0
        %1056 = vmatprep.subr.mxu0 0.0
        %1057 = vmatpush1.xpose.msra.mxu0 0.0
        %1058 = vmatprep.subr.mxu0 0.0
        %1059 = vmatpush1.xpose.msra.mxu0 0.0
        %1060 = vmatprep.subr.mxu0 0.0
        %1061 = vmatpush1.xpose.msra.mxu0 0.0
        %1062 = vmatprep.subr.mxu0 0.0
        %1063 = vmatpush1.xpose.msra.mxu0 0.0
        %1064 = vmatprep.subr.mxu0 0.0
        %1065 = vmatpush1.xpose.msra.mxu0 0.0
        %1066 = vmatprep.subr.mxu0 0.0
        %1067 = vmatpush1.xpose.msra.mxu0 0.0
        %1068 = vmatprep.subr.mxu0 0.0
        %1069 = vmatpush1.xpose.msra.mxu0 0.0
        %1070 = vmatprep.subr.mxu0 0.0
        %1071 = vmatpush1.xpose.msra.mxu0 0.0
        %1072 = vmatprep.subr.mxu0 0.0
        %1073 = vmatpush1.xpose.msra.mxu0 0.0
        %1074 = vmatprep.subr.mxu0 0.0
        %1075 = vmatpush1.xpose.msra.mxu0 0.0
        %1076 = vmatprep.subr.mxu0 0.0
        %1077 = vmatpush1.xpose.msra.mxu0 0.0
        %1078 = vmatprep.subr.mxu0 0.0
        %1079 = vmatpush1.xpose.msra.mxu0 0.0
        %1080 = vmatprep.subr.mxu0 0.0
        %1081 = vmatpush1.xpose.msra.mxu0 0.0
        %1082 = vmatprep.subr.mxu0 0.0
        %1083 = vmatpush1.xpose.msra.mxu0 0.0
        %1084 = vmatprep.subr.mxu0 0.0
        %1085 = vmatpush1.xpose.msra.mxu0 %v1052
        %1086 = vmatprep.subr.mxu0 0.0
        %1087 = vmatpush2.xpose.msra.mxu0 0.0
        %1088 = vmatprep.subr.mxu0 0.0
        %1089 = vmatpush2.xpose.msra.mxu0 0.0
        %1090 = vmatprep.subr.mxu0 0.0
        %1091 = vmatpush2.xpose.msra.mxu0 0.0
        %1092 = vmatprep.subr.mxu0 0.0
        %1093 = vmatpush2.xpose.msra.mxu0 0.0
        %1094 = vmatprep.subr.mxu0 0.0
        %1095 = vmatpush2.xpose.msra.mxu0 0.0
        %1096 = vmatprep.subr.mxu0 0.0
        %1097 = vmatpush2.xpose.msra.mxu0 0.0
        %1098 = vmatprep.subr.mxu0 0.0
        %1099 = vmatpush2.xpose.msra.mxu0 0.0
        %1100 = vmatprep.subr.mxu0 0.0
        %1101 = vmatpush2.xpose.msra.mxu0 0.0
        %1102 = vmatprep.subr.mxu0 0.0
        %1103 = vmatpush2.xpose.msra.mxu0 0.0
        %1104 = vmatprep.subr.mxu0 0.0
        %1105 = vmatpush2.xpose.msra.mxu0 0.0
        %1106 = vmatprep.subr.mxu0 0.0
        %1107 = vmatpush2.xpose.msra.mxu0 0.0
        %1108 = vmatprep.subr.mxu0 0.0
        %1109 = vmatpush2.xpose.msra.mxu0 0.0
        %1110 = vmatprep.subr.mxu0 0.0
        %1111 = vmatpush2.xpose.msra.mxu0 0.0
        %1112 = vmatprep.subr.mxu0 0.0
        %1113 = vmatpush2.xpose.msra.mxu0 0.0
        %1114 = vmatprep.subr.mxu0 0.0
        %1115 = vmatpush2.xpose.msra.mxu0 0.0
        %1116 = vmatprep.subr.mxu0 0.0
        %1117 = vmatpush2.xpose.msra.mxu0 0.0
        %1118 = vmatprep.mubr.f32.mxu0 0.0
        %1119 = vmatmul.mubr.f32.gmra.mxu0 %v1050
        %v1120 = vpop.f32.mrf.mxu0
        %v1121 = vadd.f32 0.0, %v1120
        %v1122 = vpop.f32.mrf.mxu0
        %1123 = vdwg.mxu0
        %v1124 = vsel %vm554, %v1121, -inf
        %1125 = vmax.xlane.f32.xlu0 %v1124
        %v1126 = vpop.xlane.xlu0 %1125
        %v1127 = vsub.f32 %v1121, %v1126
        %v1128 = vmul.f32 %v1127, 1.442695
        %v1129 = vpow.pop %v1128
        %v1130 = vsel %vm554, %v1129, 0.0
        %1131 = vadd.xlane.f32.xlu0 %v1130
        %v1132 = vpop.xlane.xlu0 %1131
        %v1133 = vrcp.pop %v1132
        %v1134 = vmul.f32 %v1129, %v1133
        %1135 = vrot.lane.b32.xlu0 %v548, 40
        %v1136 = vpop.permute.xlu0 %1135
        %v1139 = vsel %vm554, %v1134, 0
        %1141 = vmatprep.subr.mxu0 0.0
        %1142 = vmatpush1.msra.mxu0 0.0
        %1143 = vmatprep.subr.mxu0 0.0
        %1144 = vmatpush1.msra.mxu0 0.0
        %1145 = vmatprep.subr.mxu0 0.0
        %1146 = vmatpush1.msra.mxu0 0.0
        %1147 = vmatprep.subr.mxu0 0.0
        %1148 = vmatpush1.msra.mxu0 0.0
        %1149 = vmatprep.subr.mxu0 0.0
        %1150 = vmatpush1.msra.mxu0 0.0
        %1151 = vmatprep.subr.mxu0 0.0
        %1152 = vmatpush1.msra.mxu0 0.0
        %1153 = vmatprep.subr.mxu0 0.0
        %1154 = vmatpush1.msra.mxu0 0.0
        %1155 = vmatprep.subr.mxu0 0.0
        %1156 = vmatpush1.msra.mxu0 0.0
        %1157 = vmatprep.subr.mxu0 0.0
        %1158 = vmatpush1.msra.mxu0 0.0
        %1159 = vmatprep.subr.mxu0 0.0
        %1160 = vmatpush1.msra.mxu0 0.0
        %1161 = vmatprep.subr.mxu0 0.0
        %1162 = vmatpush1.msra.mxu0 0.0
        %1163 = vmatprep.subr.mxu0 0.0
        %1164 = vmatpush1.msra.mxu0 0.0
        %1165 = vmatprep.subr.mxu0 0.0
        %1166 = vmatpush1.msra.mxu0 0.0
        %1167 = vmatprep.subr.mxu0 0.0
        %1168 = vmatpush1.msra.mxu0 0.0
        %1169 = vmatprep.subr.mxu0 0.0
        %1170 = vmatpush1.msra.mxu0 0.0
        %1171 = vmatprep.subr.mxu0 0.0
        %1172 = vmatpush1.msra.mxu0 %v1136
        %1173 = vmatprep.subr.mxu0 0.0
        %1174 = vmatpush2.msra.mxu0 0.0
        %1175 = vmatprep.subr.mxu0 0.0
        %1176 = vmatpush2.msra.mxu0 0.0
        %1177 = vmatprep.subr.mxu0 0.0
        %1178 = vmatpush2.msra.mxu0 0.0
        %1179 = vmatprep.subr.mxu0 0.0
        %1180 = vmatpush2.msra.mxu0 0.0
        %1181 = vmatprep.subr.mxu0 0.0
        %1182 = vmatpush2.msra.mxu0 0.0
        %1183 = vmatprep.subr.mxu0 0.0
        %1184 = vmatpush2.msra.mxu0 0.0
        %1185 = vmatprep.subr.mxu0 0.0
        %1186 = vmatpush2.msra.mxu0 0.0
        %1187 = vmatprep.subr.mxu0 0.0
        %1188 = vmatpush2.msra.mxu0 0.0
        %1189 = vmatprep.subr.mxu0 0.0
        %1190 = vmatpush2.msra.mxu0 0.0
        %1191 = vmatprep.subr.mxu0 0.0
        %1192 = vmatpush2.msra.mxu0 0.0
        %1193 = vmatprep.subr.mxu0 0.0
        %1194 = vmatpush2.msra.mxu0 0.0
        %1195 = vmatprep.subr.mxu0 0.0
        %1196 = vmatpush2.msra.mxu0 0.0
        %1197 = vmatprep.subr.mxu0 0.0
        %1198 = vmatpush2.msra.mxu0 0.0
        %1199 = vmatprep.subr.mxu0 0.0
        %1200 = vmatpush2.msra.mxu0 0.0
        %1201 = vmatprep.subr.mxu0 0.0
        %1202 = vmatpush2.msra.mxu0 0.0
        %1203 = vmatprep.subr.mxu0 0.0
        %1204 = vmatpush2.msra.mxu0 0.0
        %1205 = vmatprep.mubr.f32.mxu0 0.0
        %1206 = vmatmul.mubr.f32.gmra.mxu0 %v1139
        %v1207 = vpop.f32.mrf.mxu0
        %v1208 = vadd.f32 0.0, %v1207
        %v1209 = vpop.f32.mrf.mxu0
        %1210 = vdwg.mxu0
        %1212 = vrot.lane.b32.xlu0 %v878, 8
        %v1213 = vpop.permute.xlu0 %1212
        %1216 = vrot.lane.b32.xlu0 %v1043, 16
        %v1217 = vpop.permute.xlu0 %1216
        %1220 = vrot.lane.b32.xlu0 %v1208, 24
        %v1221 = vpop.permute.xlu0 %1220
        %v1223 = vsel %vm554, %v713, %v1213
        %vm1224 = vcmask 130048
        %v1225 = vsel %vm1224, %v1223, %v1217
        %vm1226 = vcmask 195584
        %v1227 = vsel %vm1226, %v1225, %v1221
        %v1228 = vld [vmem:[%s4] sm:$0xff]
        %v1229 = vld [vmem:[%s4 + $0x8] sm:$0xff]
        %v1230 = vld [vmem:[%s4 + $0x10] sm:$0xff]
        %v1231 = vld [vmem:[%s4 + $0x18] sm:$0xff]
        %v1232 = vld [vmem:[%s5] sm:$0x1]
        %v1234 = vlaneseq
        %v1235 = vshrl.u32 %v1234, 7
        %v1236 = vsub.s32 0, %v1235
        %v1237 = vrot.slane %v1232, %v1236
        %v1240 = vsel %vm477, %v1227, 0
        %1242 = vmatprep.subr.mxu0 0.0
        %1243 = vmatpush1.msra.mxu0 0.0
        %1244 = vmatprep.subr.mxu0 0.0
        %1245 = vmatpush1.msra.mxu0 0.0
        %1246 = vmatprep.subr.mxu0 0.0
        %1247 = vmatpush1.msra.mxu0 0.0
        %1248 = vmatprep.subr.mxu0 0.0
        %1249 = vmatpush1.msra.mxu0 0.0
        %1250 = vmatprep.subr.mxu0 0.0
        %1251 = vmatpush1.msra.mxu0 0.0
        %1252 = vmatprep.subr.mxu0 0.0
        %1253 = vmatpush1.msra.mxu0 0.0
        %1254 = vmatprep.subr.mxu0 0.0
        %1255 = vmatpush1.msra.mxu0 0.0
        %1256 = vmatprep.subr.mxu0 0.0
        %1257 = vmatpush1.msra.mxu0 0.0
        %1258 = vmatprep.subr.mxu0 0.0
        %1259 = vmatpush1.msra.mxu0 0.0
        %1260 = vmatprep.subr.mxu0 0.0
        %1261 = vmatpush1.msra.mxu0 0.0
        %1262 = vmatprep.subr.mxu0 0.0
        %1263 = vmatpush1.msra.mxu0 0.0
        %1264 = vmatprep.subr.mxu0 0.0
        %1265 = vmatpush1.msra.mxu0 0.0
        %1266 = vmatprep.subr.mxu0 0.0
        %1267 = vmatpush1.msra.mxu0 %v1231
        %1268 = vmatprep.subr.mxu0 0.0
        %1269 = vmatpush1.msra.mxu0 %v1230
        %1270 = vmatprep.subr.mxu0 0.0
        %1271 = vmatpush1.msra.mxu0 %v1229
        %1272 = vmatprep.subr.mxu0 0.0
        %1273 = vmatpush1.msra.mxu0 %v1228
        %1274 = vmatprep.subr.mxu0 0.0
        %1275 = vmatpush2.msra.mxu0 0.0
        %1276 = vmatprep.subr.mxu0 0.0
        %1277 = vmatpush2.msra.mxu0 0.0
        %1278 = vmatprep.subr.mxu0 0.0
        %1279 = vmatpush2.msra.mxu0 0.0
        %1280 = vmatprep.subr.mxu0 0.0
        %1281 = vmatpush2.msra.mxu0 0.0
        %1282 = vmatprep.subr.mxu0 0.0
        %1283 = vmatpush2.msra.mxu0 0.0
        %1284 = vmatprep.subr.mxu0 0.0
        %1285 = vmatpush2.msra.mxu0 0.0
        %1286 = vmatprep.subr.mxu0 0.0
        %1287 = vmatpush2.msra.mxu0 0.0
        %1288 = vmatprep.subr.mxu0 0.0
        %1289 = vmatpush2.msra.mxu0 0.0
        %1290 = vmatprep.subr.mxu0 0.0
        %1291 = vmatpush2.msra.mxu0 0.0
        %1292 = vmatprep.subr.mxu0 0.0
        %1293 = vmatpush2.msra.mxu0 0.0
        %1294 = vmatprep.subr.mxu0 0.0
        %1295 = vmatpush2.msra.mxu0 0.0
        %1296 = vmatprep.subr.mxu0 0.0
        %1297 = vmatpush2.msra.mxu0 0.0
        %1298 = vmatprep.subr.mxu0 0.0
        %1299 = vmatpush2.msra.mxu0 0.0
        %1300 = vmatprep.subr.mxu0 0.0
        %1301 = vmatpush2.msra.mxu0 0.0
        %1302 = vmatprep.subr.mxu0 0.0
        %1303 = vmatpush2.msra.mxu0 0.0
        %1304 = vmatprep.subr.mxu0 0.0
        %1305 = vmatpush2.msra.mxu0 0.0
        %1306 = vmatprep.mubr.f32.mxu0 0.0
        %1307 = vmatmul.mubr.f32.gmra.mxu0 %v1240
        %v1308 = vpop.f32.mrf.mxu0
        %v1309 = vadd.f32 %v1237, %v1308
        %v1310 = vpop.f32.mrf.mxu0
        %1311 = vdwg.mxu0
        %v1312 = vsel %vm477, %v1309, 0.0
        %v1313 = vrot.slane %v1312, 4
        %v1314 = vadd.f32 %v1312, %v1313
        %v1315 = vrot.slane %v1314, 2
        %v1316 = vadd.f32 %v1314, %v1315
        %v1317 = vrot.slane %v1316, 1
        %v1318 = vadd.f32 %v1316, %v1317
        %v1319 = vrcp.pop 8.0
        %v1320 = vmul.f32 %v1318, %v1319
        %v1321 = vadd.f32 %v1320, 0.0
        %v1322 = vadd.f32 %v1309, %v1321
        %v1323 = vld [vmem:[%s6] sm:$0xff]
        %v1324 = vld [vmem:[%s6 + $0x8] sm:$0xff]
        %v1325 = vld [vmem:[%s6 + $0x10] sm:$0xff]
        %v1326 = vld [vmem:[%s6 + $0x18] sm:$0xff]
        %v1327 = vld [vmem:[%s7] sm:$0x1]
        %v1329 = vlaneseq
        %v1330 = vshrl.u32 %v1329, 7
        %v1331 = vsub.s32 0, %v1330
        %v1332 = vrot.slane %v1327, %v1331
        %v1335 = vsel %vm477, %v1322, 0
        %1337 = vmatprep.subr.mxu0 0.0
        %1338 = vmatpush1.msra.mxu0 0.0
        %1339 = vmatprep.subr.mxu0 0.0
        %1340 = vmatpush1.msra.mxu0 0.0
        %1341 = vmatprep.subr.mxu0 0.0
        %1342 = vmatpush1.msra.mxu0 0.0
        %1343 = vmatprep.subr.mxu0 0.0
        %1344 = vmatpush1.msra.mxu0 0.0
        %1345 = vmatprep.subr.mxu0 0.0
        %1346 = vmatpush1.msra.mxu0 0.0
        %1347 = vmatprep.subr.mxu0 0.0
        %1348 = vmatpush1.msra.mxu0 0.0
        %1349 = vmatprep.subr.mxu0 0.0
        %1350 = vmatpush1.msra.mxu0 0.0
        %1351 = vmatprep.subr.mxu0 0.0
        %1352 = vmatpush1.msra.mxu0 0.0
        %1353 = vmatprep.subr.mxu0 0.0
        %1354 = vmatpush1.msra.mxu0 0.0
        %1355 = vmatprep.subr.mxu0 0.0
        %1356 = vmatpush1.msra.mxu0 0.0
        %1357 = vmatprep.subr.mxu0 0.0
        %1358 = vmatpush1.msra.mxu0 0.0
        %1359 = vmatprep.subr.mxu0 0.0
        %1360 = vmatpush1.msra.mxu0 0.0
        %1361 = vmatprep.subr.mxu0 0.0
        %1362 = vmatpush1.msra.mxu0 %v1326
        %1363 = vmatprep.subr.mxu0 0.0
        %1364 = vmatpush1.msra.mxu0 %v1325
        %1365 = vmatprep.subr.mxu0 0.0
        %1366 = vmatpush1.msra.mxu0 %v1324
        %1367 = vmatprep.subr.mxu0 0.0
        %1368 = vmatpush1.msra.mxu0 %v1323
        %1369 = vmatprep.subr.mxu0 0.0
        %1370 = vmatpush2.msra.mxu0 0.0
        %1371 = vmatprep.subr.mxu0 0.0
        %1372 = vmatpush2.msra.mxu0 0.0
        %1373 = vmatprep.subr.mxu0 0.0
        %1374 = vmatpush2.msra.mxu0 0.0
        %1375 = vmatprep.subr.mxu0 0.0
        %1376 = vmatpush2.msra.mxu0 0.0
        %1377 = vmatprep.subr.mxu0 0.0
        %1378 = vmatpush2.msra.mxu0 0.0
        %1379 = vmatprep.subr.mxu0 0.0
        %1380 = vmatpush2.msra.mxu0 0.0
        %1381 = vmatprep.subr.mxu0 0.0
        %1382 = vmatpush2.msra.mxu0 0.0
        %1383 = vmatprep.subr.mxu0 0.0
        %1384 = vmatpush2.msra.mxu0 0.0
        %1385 = vmatprep.subr.mxu0 0.0
        %1386 = vmatpush2.msra.mxu0 0.0
        %1387 = vmatprep.subr.mxu0 0.0
        %1388 = vmatpush2.msra.mxu0 0.0
        %1389 = vmatprep.subr.mxu0 0.0
        %1390 = vmatpush2.msra.mxu0 0.0
        %1391 = vmatprep.subr.mxu0 0.0
        %1392 = vmatpush2.msra.mxu0 0.0
        %1393 = vmatprep.subr.mxu0 0.0
        %1394 = vmatpush2.msra.mxu0 0.0
        %1395 = vmatprep.subr.mxu0 0.0
        %1396 = vmatpush2.msra.mxu0 0.0
        %1397 = vmatprep.subr.mxu0 0.0
        %1398 = vmatpush2.msra.mxu0 0.0
        %1399 = vmatprep.subr.mxu0 0.0
        %1400 = vmatpush2.msra.mxu0 0.0
        %1401 = vmatprep.mubr.f32.mxu0 0.0
        %1402 = vmatmul.mubr.f32.gmra.mxu0 %v1335
        %v1403 = vpop.f32.mrf.mxu0
        %v1404 = vadd.f32 %v1332, %v1403
        %v1405 = vpop.f32.mrf.mxu0
        %1406 = vdwg.mxu0
        %v1407 = vmul.f32 %v1404, 0.5
        %v1408 = vmul.f32 %v1404, 0.70710677
        %v1409 = verf.f32.pop %v1408
        %v1410 = vadd.f32 %v1409, 1.0
        %v1411 = vmul.f32 %v1407, %v1410
        %v1412 = vld [vmem:[%s8] sm:$0xff]
        %v1413 = vld [vmem:[%s8 + $0x8] sm:$0xff]
        %v1414 = vld [vmem:[%s8 + $0x10] sm:$0xff]
        %v1415 = vld [vmem:[%s8 + $0x18] sm:$0xff]
        %v1416 = vld [vmem:[%s8 + $0x20] sm:$0xff]
        %v1417 = vld [vmem:[%s8 + $0x28] sm:$0xff]
        %v1418 = vld [vmem:[%s8 + $0x30] sm:$0xff]
        %v1419 = vld [vmem:[%s8 + $0x38] sm:$0xff]
        %v1420 = vld [vmem:[%s8 + $0x40] sm:$0xff]
        %v1421 = vld [vmem:[%s8 + $0x48] sm:$0xff]
        %v1422 = vld [vmem:[%s8 + $0x50] sm:$0xff]
        %v1423 = vld [vmem:[%s8 + $0x58] sm:$0xff]
        %v1424 = vld [vmem:[%s8 + $0x60] sm:$0xff]
        %v1425 = vld [vmem:[%s8 + $0x68] sm:$0xff]
        %v1426 = vld [vmem:[%s8 + $0x70] sm:$0xff]
        %v1427 = vld [vmem:[%s8 + $0x78] sm:$0xff]
        %v1428 = vld [vmem:[%s9] sm:$0x1]
        %v1430 = vlaneseq
        %v1431 = vshrl.u32 %v1430, 7
        %v1432 = vsub.s32 0, %v1431
        %v1433 = vrot.slane %v1428, %v1432
        %1435 = vmatprep.subr.mxu0 0.0
        %1436 = vmatpush1.msra.mxu0 %v1427
        %1437 = vmatprep.subr.mxu0 0.0
        %1438 = vmatpush1.msra.mxu0 %v1426
        %1439 = vmatprep.subr.mxu0 0.0
        %1440 = vmatpush1.msra.mxu0 %v1425
        %1441 = vmatprep.subr.mxu0 0.0
        %1442 = vmatpush1.msra.mxu0 %v1424
        %1443 = vmatprep.subr.mxu0 0.0
        %1444 = vmatpush1.msra.mxu0 %v1423
        %1445 = vmatprep.subr.mxu0 0.0
        %1446 = vmatpush1.msra.mxu0 %v1422
        %1447 = vmatprep.subr.mxu0 0.0
        %1448 = vmatpush1.msra.mxu0 %v1421
        %1449 = vmatprep.subr.mxu0 0.0
        %1450 = vmatpush1.msra.mxu0 %v1420
        %1451 = vmatprep.subr.mxu0 0.0
        %1452 = vmatpush1.msra.mxu0 %v1419
        %1453 = vmatprep.subr.mxu0 0.0
        %1454 = vmatpush1.msra.mxu0 %v1418
        %1455 = vmatprep.subr.mxu0 0.0
        %1456 = vmatpush1.msra.mxu0 %v1417
        %1457 = vmatprep.subr.mxu0 0.0
        %1458 = vmatpush1.msra.mxu0 %v1416
        %1459 = vmatprep.subr.mxu0 0.0
        %1460 = vmatpush1.msra.mxu0 %v1415
        %1461 = vmatprep.subr.mxu0 0.0
        %1462 = vmatpush1.msra.mxu0 %v1414
        %1463 = vmatprep.subr.mxu0 0.0
        %1464 = vmatpush1.msra.mxu0 %v1413
        %1465 = vmatprep.subr.mxu0 0.0
        %1466 = vmatpush1.msra.mxu0 %v1412
        %1467 = vmatprep.subr.mxu0 0.0
        %1468 = vmatpush2.msra.mxu0 0.0
        %1469 = vmatprep.subr.mxu0 0.0
        %1470 = vmatpush2.msra.mxu0 0.0
        %1471 = vmatprep.subr.mxu0 0.0
        %1472 = vmatpush2.msra.mxu0 0.0
        %1473 = vmatprep.subr.mxu0 0.0
        %1474 = vmatpush2.msra.mxu0 0.0
        %1475 = vmatprep.subr.mxu0 0.0
        %1476 = vmatpush2.msra.mxu0 0.0
        %1477 = vmatprep.subr.mxu0 0.0
        %1478 = vmatpush2.msra.mxu0 0.0
        %1479 = vmatprep.subr.mxu0 0.0
        %1480 = vmatpush2.msra.mxu0 0.0
        %1481 = vmatprep.subr.mxu0 0.0
        %1482 = vmatpush2.msra.mxu0 0.0
        %1483 = vmatprep.subr.mxu0 0.0
        %1484 = vmatpush2.msra.mxu0 0.0
        %1485 = vmatprep.subr.mxu0 0.0
        %1486 = vmatpush2.msra.mxu0 0.0
        %1487 = vmatprep.subr.mxu0 0.0
        %1488 = vmatpush2.msra.mxu0 0.0
        %1489 = vmatprep.subr.mxu0 0.0
        %1490 = vmatpush2.msra.mxu0 0.0
        %1491 = vmatprep.subr.mxu0 0.0
        %1492 = vmatpush2.msra.mxu0 0.0
        %1493 = vmatprep.subr.mxu0 0.0
        %1494 = vmatpush2.msra.mxu0 0.0
        %1495 = vmatprep.subr.mxu0 0.0
        %1496 = vmatpush2.msra.mxu0 0.0
        %1497 = vmatprep.subr.mxu0 0.0
        %1498 = vmatpush2.msra.mxu0 0.0
        %1499 = vmatprep.mubr.f32.mxu0 0.0
        %1500 = vmatmul.mubr.f32.gmra.mxu0 %v1411
        %v1501 = vpop.f32.mrf.mxu0
        %v1502 = vadd.f32 %v1433, %v1501
        %v1503 = vpop.f32.mrf.mxu0
        %1504 = vdwg.mxu0
        %v1505 = vadd.f32 %v1502, %v1322
        %v1506 = vld [vmem:[%s10] sm:$0x1]
        %v1507 = vld [vmem:[%s11] sm:$0x1]
        %v1508 = vsel %vm477, %v1505, 0.0
        %1509 = vadd.xlane.f32.xlu0 %v1508
        %v1510 = vpop.xlane.xlu0 %1509
        %v1511 = vrcp.pop 32.0
        %v1512 = vmul.f32 %v1510, %v1511
        %v1513 = vsub.f32 %v1505, %v1512
        %v1514 = vmul.f32 %v1513, %v1513
        %v1515 = vsel %vm477, %v1514, 0.0
        %1516 = vadd.xlane.f32.xlu0 %v1515
        %v1517 = vpop.xlane.xlu0 %1516
        %v1518 = vmul.f32 %v1517, %v1511
        %v1519 = vadd.f32 %v1518, 1e-12
        %v1520 = vrsqrt.pop %v1519
        %v1521 = vmul.f32 %v1513, %v1520
        %v1523 = vlaneseq
        %v1524 = vshrl.u32 %v1523, 7
        %v1525 = vsub.s32 0, %v1524
        %v1526 = vrot.slane %v1506, %v1525
        %v1528 = vmul.f32 %v1521, %v1526
        %v1530 = vlaneseq
        %v1531 = vshrl.u32 %v1530, 7
        %v1532 = vsub.s32 0, %v1531
        %v1533 = vrot.slane %v1507, %v1532
        %v1535 = vadd.f32 %v1528, %v1533
        %s1536 = scalar_lea.vmem %s2, 32
        %v1537 = vld [vmem:[%s1536] sm:$0xff]
        %v1538 = vld [vmem:[%s1536 + $0x8] sm:$0xff]
        %v1539 = vld [vmem:[%s1536 + $0x10] sm:$0xff]
        %v1540 = vld [vmem:[%s1536 + $0x18] sm:$0xff]
        %s1541 = scalar_lea.vmem %s3, 1
        %v1542 = vld [vmem:[%s1541] sm:$0x1]
        %v1544 = vlaneseq
        %v1545 = vshrl.u32 %v1544, 7
        %v1546 = vsub.s32 0, %v1545
        %v1547 = vrot.slane %v1542, %v1546
        %v1550 = vsel %vm477, %v1535, 0
        %1552 = vmatprep.subr.mxu0 0.0
        %1553 = vmatpush1.msra.mxu0 0.0
        %1554 = vmatprep.subr.mxu0 0.0
        %1555 = vmatpush1.msra.mxu0 0.0
        %1556 = vmatprep.subr.mxu0 0.0
        %1557 = vmatpush1.msra.mxu0 0.0
        %1558 = vmatprep.subr.mxu0 0.0
        %1559 = vmatpush1.msra.mxu0 0.0
        %1560 = vmatprep.subr.mxu0 0.0
        %1561 = vmatpush1.msra.mxu0 0.0
        %1562 = vmatprep.subr.mxu0 0.0
        %1563 = vmatpush1.msra.mxu0 0.0
        %1564 = vmatprep.subr.mxu0 0.0
        %1565 = vmatpush1.msra.mxu0 0.0
        %1566 = vmatprep.subr.mxu0 0.0
        %1567 = vmatpush1.msra.mxu0 0.0
        %1568 = vmatprep.subr.mxu0 0.0
        %1569 = vmatpush1.msra.mxu0 0.0
        %1570 = vmatprep.subr.mxu0 0.0
        %1571 = vmatpush1.msra.mxu0 0.0
        %1572 = vmatprep.subr.mxu0 0.0
        %1573 = vmatpush1.msra.mxu0 0.0
        %1574 = vmatprep.subr.mxu0 0.0
        %1575 = vmatpush1.msra.mxu0 0.0
        %1576 = vmatprep.subr.mxu0 0.0
        %1577 = vmatpush1.msra.mxu0 %v1540
        %1578 = vmatprep.subr.mxu0 0.0
        %1579 = vmatpush1.msra.mxu0 %v1539
        %1580 = vmatprep.subr.mxu0 0.0
        %1581 = vmatpush1.msra.mxu0 %v1538
        %1582 = vmatprep.subr.mxu0 0.0
        %1583 = vmatpush1.msra.mxu0 %v1537
        %1584 = vmatprep.subr.mxu0 0.0
        %1585 = vmatpush2.msra.mxu0 0.0
        %1586 = vmatprep.subr.mxu0 0.0
        %1587 = vmatpush2.msra.mxu0 0.0
        %1588 = vmatprep.subr.mxu0 0.0
        %1589 = vmatpush2.msra.mxu0 0.0
        %1590 = vmatprep.subr.mxu0 0.0
        %1591 = vmatpush2.msra.mxu0 0.0
        %1592 = vmatprep.subr.mxu0 0.0
        %1593 = vmatpush2.msra.mxu0 0.0
        %1594 = vmatprep.subr.mxu0 0.0
        %1595 = vmatpush2.msra.mxu0 0.0
        %1596 = vmatprep.subr.mxu0 0.0
        %1597 = vmatpush2.msra.mxu0 0.0
        %1598 = vmatprep.subr.mxu0 0.0
        %1599 = vmatpush2.msra.mxu0 0.0
        %1600 = vmatprep.subr.mxu0 0.0
        %1601 = vmatpush2.msra.mxu0 0.0
        %1602 = vmatprep.subr.mxu0 0.0
        %1603 = vmatpush2.msra.mxu0 0.0
        %1604 = vmatprep.subr.mxu0 0.0
        %1605 = vmatpush2.msra.mxu0 0.0
        %1606 = vmatprep.subr.mxu0 0.0
        %1607 = vmatpush2.msra.mxu0 0.0
        %1608 = vmatprep.subr.mxu0 0.0
        %1609 = vmatpush2.msra.mxu0 0.0
        %1610 = vmatprep.subr.mxu0 0.0
        %1611 = vmatpush2.msra.mxu0 0.0
        %1612 = vmatprep.subr.mxu0 0.0
        %1613 = vmatpush2.msra.mxu0 0.0
        %1614 = vmatprep.subr.mxu0 0.0
        %1615 = vmatpush2.msra.mxu0 0.0
        %1616 = vmatprep.mubr.f32.mxu0 0.0
        %1617 = vmatmul.mubr.f32.gmra.mxu0 %v1550
        %v1618 = vpop.f32.mrf.mxu0
        %v1619 = vadd.f32 %v1547, %v1618
        %v1620 = vpop.f32.mrf.mxu0
        %1621 = vdwg.mxu0
        %1623 = vrot.lane.b32.xlu0 %v1619, 96
        %v1624 = vpop.permute.xlu0 %1623
        %v1625 = vsel %vm554, %v1619, 0
        %v1627 = vsel %vm554, %v1624, 0
        %1629 = vmatprep.subr.mxu0 0.0
        %1630 = vmatpush1.xpose.msra.mxu0 0.0
        %1631 = vmatprep.subr.mxu0 0.0
        %1632 = vmatpush1.xpose.msra.mxu0 0.0
        %1633 = vmatprep.subr.mxu0 0.0
        %1634 = vmatpush1.xpose.msra.mxu0 0.0
        %1635 = vmatprep.subr.mxu0 0.0
        %1636 = vmatpush1.xpose.msra.mxu0 0.0
        %1637 = vmatprep.subr.mxu0 0.0
        %1638 = vmatpush1.xpose.msra.mxu0 0.0
        %1639 = vmatprep.subr.mxu0 0.0
        %1640 = vmatpush1.xpose.msra.mxu0 0.0
        %1641 = vmatprep.subr.mxu0 0.0
        %1642 = vmatpush1.xpose.msra.mxu0 0.0
        %1643 = vmatprep.subr.mxu0 0.0
        %1644 = vmatpush1.xpose.msra.mxu0 0.0
        %1645 = vmatprep.subr.mxu0 0.0
        %1646 = vmatpush1.xpose.msra.mxu0 0.0
        %1647 = vmatprep.subr.mxu0 0.0
        %1648 = vmatpush1.xpose.msra.mxu0 0.0
        %1649 = vmatprep.subr.mxu0 0.0
        %1650 = vmatpush1.xpose.msra.mxu0 0.0
        %1651 = vmatprep.subr.mxu0 0.0
        %1652 = vmatpush1.xpose.msra.mxu0 0.0
        %1653 = vmatprep.subr.mxu0 0.0
        %1654 = vmatpush1.xpose.msra.mxu0 0.0
        %1655 = vmatprep.subr.mxu0 0.0
        %1656 = vmatpush1.xpose.msra.mxu0 0.0
        %1657 = vmatprep.subr.mxu0 0.0
        %1658 = vmatpush1.xpose.msra.mxu0 0.0
        %1659 = vmatprep.subr.mxu0 0.0
        %1660 = vmatpush1.xpose.msra.mxu0 %v1627
        %1661 = vmatprep.subr.mxu0 0.0
        %1662 = vmatpush2.xpose.msra.mxu0 0.0
        %1663 = vmatprep.subr.mxu0 0.0
        %1664 = vmatpush2.xpose.msra.mxu0 0.0
        %1665 = vmatprep.subr.mxu0 0.0
        %1666 = vmatpush2.xpose.msra.mxu0 0.0
        %1667 = vmatprep.subr.mxu0 0.0
        %1668 = vmatpush2.xpose.msra.mxu0 0.0
        %1669 = vmatprep.subr.mxu0 0.0
        %1670 = vmatpush2.xpose.msra.mxu0 0.0
        %1671 = vmatprep.subr.mxu0 0.0
        %1672 = vmatpush2.xpose.msra.mxu0 0.0
        %1673 = vmatprep.subr.mxu0 0.0
        %1674 = vmatpush2.xpose.msra.mxu0 0.0
        %1675 = vmatprep.subr.mxu0 0.0
        %1676 = vmatpush2.xpose.msra.mxu0 0.0
        %1677 = vmatprep.subr.mxu0 0.0
        %1678 = vmatpush2.xpose.msra.mxu0 0.0
        %1679 = vmatprep.subr.mxu0 0.0
        %1680 = vmatpush2.xpose.msra.mxu0 0.0
        %1681 = vmatprep.subr.mxu0 0.0
        %1682 = vmatpush2.xpose.msra.mxu0 0.0
        %1683 = vmatprep.subr.mxu0 0.0
        %1684 = vmatpush2.xpose.msra.mxu0 0.0
        %1685 = vmatprep.subr.mxu0 0.0
        %1686 = vmatpush2.xpose.msra.mxu0 0.0
        %1687 = vmatprep.subr.mxu0 0.0
        %1688 = vmatpush2.xpose.msra.mxu0 0.0
        %1689 = vmatprep.subr.mxu0 0.0
        %1690 = vmatpush2.xpose.msra.mxu0 0.0
        %1691 = vmatprep.subr.mxu0 0.0
        %1692 = vmatpush2.xpose.msra.mxu0 0.0
        %1693 = vmatprep.mubr.f32.mxu0 0.0
        %1694 = vmatmul.mubr.f32.gmra.mxu0 %v1625
        %v1695 = vpop.f32.mrf.mxu0
        %v1696 = vadd.f32 0.0, %v1695
        %v1697 = vpop.f32.mrf.mxu0
        %1698 = vdwg.mxu0
        %v1699 = vsel %vm554, %v1696, -inf
        %1700 = vmax.xlane.f32.xlu0 %v1699
        %v1701 = vpop.xlane.xlu0 %1700
        %v1702 = vsub.f32 %v1696, %v1701
        %v1703 = vmul.f32 %v1702, 1.442695
        %v1704 = vpow.pop %v1703
        %v1705 = vsel %vm554, %v1704, 0.0
        %1706 = vadd.xlane.f32.xlu0 %v1705
        %v1707 = vpop.xlane.xlu0 %1706
        %v1708 = vrcp.pop %v1707
        %v1709 = vmul.f32 %v1704, %v1708
        %1710 = vrot.lane.b32.xlu0 %v1619, 64
        %v1711 = vpop.permute.xlu0 %1710
        %v1714 = vsel %vm554, %v1709, 0
        %1716 = vmatprep.subr.mxu0 0.0
        %1717 = vmatpush1.msra.mxu0 0.0
        %1718 = vmatprep.subr.mxu0 0.0
        %1719 = vmatpush1.msra.mxu0 0.0
        %1720 = vmatprep.subr.mxu0 0.0
        %1721 = vmatpush1.msra.mxu0 0.0
        %1722 = vmatprep.subr.mxu0 0.0
        %1723 = vmatpush1.msra.mxu0 0.0
        %1724 = vmatprep.subr.mxu0 0.0
        %1725 = vmatpush1.msra.mxu0 0.0
        %1726 = vmatprep.subr.mxu0 0.0
        %1727 = vmatpush1.msra.mxu0 0.0
        %1728 = vmatprep.subr.mxu0 0.0
        %1729 = vmatpush1.msra.mxu0 0.0
        %1730 = vmatprep.subr.mxu0 0.0
        %1731 = vmatpush1.msra.mxu0 0.0
        %1732 = vmatprep.subr.mxu0 0.0
        %1733 = vmatpush1.msra.mxu0 0.0
        %1734 = vmatprep.subr.mxu0 0.0
        %1735 = vmatpush1.msra.mxu0 0.0
        %1736 = vmatprep.subr.mxu0 0.0
        %1737 = vmatpush1.msra.mxu0 0.0
        %1738 = vmatprep.subr.mxu0 0.0
        %1739 = vmatpush1.msra.mxu0 0.0
        %1740 = vmatprep.subr.mxu0 0.0
        %1741 = vmatpush1.msra.mxu0 0.0
        %1742 = vmatprep.subr.mxu0 0.0
        %1743 = vmatpush1.msra.mxu0 0.0
        %1744 = vmatprep.subr.mxu0 0.0
        %1745 = vmatpush1.msra.mxu0 0.0
        %1746 = vmatprep.subr.mxu0 0.0
        %1747 = vmatpush1.msra.mxu0 %v1711
        %1748 = vmatprep.subr.mxu0 0.0
        %1749 = vmatpush2.msra.mxu0 0.0
        %1750 = vmatprep.subr.mxu0 0.0
        %1751 = vmatpush2.msra.mxu0 0.0
        %1752 = vmatprep.subr.mxu0 0.0
        %1753 = vmatpush2.msra.mxu0 0.0
        %1754 = vmatprep.subr.mxu0 0.0
        %1755 = vmatpush2.msra.mxu0 0.0
        %1756 = vmatprep.subr.mxu0 0.0
        %1757 = vmatpush2.msra.mxu0 0.0
        %1758 = vmatprep.subr.mxu0 0.0
        %1759 = vmatpush2.msra.mxu0 0.0
        %1760 = vmatprep.subr.mxu0 0.0
        %1761 = vmatpush2.msra.mxu0 0.0
        %1762 = vmatprep.subr.mxu0 0.0
        %1763 = vmatpush2.msra.mxu0 0.0
        %1764 = vmatprep.subr.mxu0 0.0
        %1765 = vmatpush2.msra.mxu0 0.0
        %1766 = vmatprep.subr.mxu0 0.0
        %1767 = vmatpush2.msra.mxu0 0.0
        %1768 = vmatprep.subr.mxu0 0.0
        %1769 = vmatpush2.msra.mxu0 0.0
        %1770 = vmatprep.subr.mxu0 0.0
        %1771 = vmatpush2.msra.mxu0 0.0
        %1772 = vmatprep.subr.mxu0 0.0
        %1773 = vmatpush2.msra.mxu0 0.0
        %1774 = vmatprep.subr.mxu0 0.0
        %1775 = vmatpush2.msra.mxu0 0.0
        %1776 = vmatprep.subr.mxu0 0.0
        %1777 = vmatpush2.msra.mxu0 0.0
        %1778 = vmatprep.subr.mxu0 0.0
        %1779 = vmatpush2.msra.mxu0 0.0
        %1780 = vmatprep.mubr.f32.mxu0 0.0
        %1781 = vmatmul.mubr.f32.gmra.mxu0 %v1714
        %v1782 = vpop.f32.mrf.mxu0
        %v1783 = vadd.f32 0.0, %v1782
        %v1784 = vpop.f32.mrf.mxu0
        %1785 = vdwg.mxu0
        %1786 = vrot.lane.b32.xlu0 %v1619, 120
        %v1787 = vpop.permute.xlu0 %1786
        %1788 = vrot.lane.b32.xlu0 %v1619, 88
        %v1789 = vpop.permute.xlu0 %1788
        %v1790 = vsel %vm554, %v1787, 0
        %v1792 = vsel %vm554, %v1789, 0
        %1794 = vmatprep.subr.mxu0 0.0
        %1795 = vmatpush1.xpose.msra.mxu0 0.0
        %1796 = vmatprep.subr.mxu0 0.0
        %1797 = vmatpush1.xpose.msra.mxu0 0.0
        %1798 = vmatprep.subr.mxu0 0.0
        %1799 = vmatpush1.xpose.msra.mxu0 0.0
        %1800 = vmatprep.subr.mxu0 0.0
        %1801 = vmatpush1.xpose.msra.mxu0 0.0
        %1802 = vmatprep.subr.mxu0 0.0
        %1803 = vmatpush1.xpose.msra.mxu0 0.0
        %1804 = vmatprep.subr.mxu0 0.0
        %1805 = vmatpush1.xpose.msra.mxu0 0.0
        %1806 = vmatprep.subr.mxu0 0.0
        %1807 = vmatpush1.xpose.msra.mxu0 0.0
        %1808 = vmatprep.subr.mxu0 0.0
        %1809 = vmatpush1.xpose.msra.mxu0 0.0
        %1810 = vmatprep.subr.mxu0 0.0
        %1811 = vmatpush1.xpose.msra.mxu0 0.0
        %1812 = vmatprep.subr.mxu0 0.0
        %1813 = vmatpush1.xpose.msra.mxu0 0.0
        %1814 = vmatprep.subr.mxu0 0.0
        %1815 = vmatpush1.xpose.msra.mxu0 0.0
        %1816 = vmatprep.subr.mxu0 0.0
        %1817 = vmatpush1.xpose.msra.mxu0 0.0
        %1818 = vmatprep.subr.mxu0 0.0
        %1819 = vmatpush1.xpose.msra.mxu0 0.0
        %1820 = vmatprep.subr.mxu0 0.0
        %1821 = vmatpush1.xpose.msra.mxu0 0.0
        %1822 = vmatprep.subr.mxu0 0.0
        %1823 = vmatpush1.xpose.msra.mxu0 0.0
        %1824 = vmatprep.subr.mxu0 0.0
        %1825 = vmatpush1.xpose.msra.mxu0 %v1792
        %1826 = vmatprep.subr.mxu0 0.0
        %1827 = vmatpush2.xpose.msra.mxu0 0.0
        %1828 = vmatprep.subr.mxu0 0.0
        %1829 = vmatpush2.xpose.msra.mxu0 0.0
        %1830 = vmatprep.subr.mxu0 0.0
        %1831 = vmatpush2.xpose.msra.mxu0 0.0
        %1832 = vmatprep.subr.mxu0 0.0
        %1833 = vmatpush2.xpose.msra.mxu0 0.0
        %1834 = vmatprep.subr.mxu0 0.0
        %1835 = vmatpush2.xpose.msra.mxu0 0.0
        %1836 = vmatprep.subr.mxu0 0.0
        %1837 = vmatpush2.xpose.msra.mxu0 0.0
        %1838 = vmatprep.subr.mxu0 0.0
        %1839 = vmatpush2.xpose.msra.mxu0 0.0
        %1840 = vmatprep.subr.mxu0 0.0
        %1841 = vmatpush2.xpose.msra.mxu0 0.0
        %1842 = vmatprep.subr.mxu0 0.0
        %1843 = vmatpush2.xpose.msra.mxu0 0.0
        %1844 = vmatprep.subr.mxu0 0.0
        %1845 = vmatpush2.xpose.msra.mxu0 0.0
        %1846 = vmatprep.subr.mxu0 0.0
        %1847 = vmatpush2.xpose.msra.mxu0 0.0
        %1848 = vmatprep.subr.mxu0 0.0
        %1849 = vmatpush2.xpose.msra.mxu0 0.0
        %1850 = vmatprep.subr.mxu0 0.0
        %1851 = vmatpush2.xpose.msra.mxu0 0.0
        %1852 = vmatprep.subr.mxu0 0.0
        %1853 = vmatpush2.xpose.msra.mxu0 0.0
        %1854 = vmatprep.subr.mxu0 0.0
        %1855 = vmatpush2.xpose.msra.mxu0 0.0
        %1856 = vmatprep.subr.mxu0 0.0
        %1857 = vmatpush2.xpose.msra.mxu0 0.0
        %1858 = vmatprep.mubr.f32.mxu0 0.0
        %1859 = vmatmul.mubr.f32.gmra.mxu0 %v1790
        %v1860 = vpop.f32.mrf.mxu0
        %v1861 = vadd.f32 0.0, %v1860
        %v1862 = vpop.f32.mrf.mxu0
        %1863 = vdwg.mxu0
        %v1864 = vsel %vm554, %v1861, -inf
        %1865 = vmax.xlane.f32.xlu0 %v1864
        %v1866 = vpop.xlane.xlu0 %1865
        %v1867 = vsub.f32 %v1861, %v1866
        %v1868 = vmul.f32 %v1867, 1.442695
        %v1869 = vpow.pop %v1868
        %v1870 = vsel %vm554, %v1869, 0.0
        %1871 = vadd.xlane.f32.xlu0 %v1870
        %v1872 = vpop.xlane.xlu0 %1871
        %v1873 = vrcp.pop %v1872
        %v1874 = vmul.f32 %v1869, %v1873
        %1875 = vrot.lane.b32.xlu0 %v1619, 56
        %v1876 = vpop.permute.xlu0 %1875
        %v1879 = vsel %vm554, %v1874, 0
        %1881 = vmatprep.subr.mxu0 0.0
        %1882 = vmatpush1.msra.mxu0 0.0
        %1883 = vmatprep.subr.mxu0 0.0
        %1884 = vmatpush1.msra.mxu0 0.0
        %1885 = vmatprep.subr.mxu0 0.0
        %1886 = vmatpush1.msra.mxu0 0.0
        %1887 = vmatprep.subr.mxu0 0.0
        %1888 = vmatpush1.msra.mxu0 0.0
        %1889 = vmatprep.subr.mxu0 0.0
        %1890 = vmatpush1.msra.mxu0 0.0
        %1891 = vmatprep.subr.mxu0 0.0
        %1892 = vmatpush1.msra.mxu0 0.0
        %1893 = vmatprep.subr.mxu0 0.0
        %1894 = vmatpush1.msra.mxu0 0.0
        %1895 = vmatprep.subr.mxu0 0.0
        %1896 = vmatpush1.msra.mxu0 0.0
        %1897 = vmatprep.subr.mxu0 0.0
        %1898 = vmatpush1.msra.mxu0 0.0
        %1899 = vmatprep.subr.mxu0 0.0
        %1900 = vmatpush1.msra.mxu0 0.0
        %1901 = vmatprep.subr.mxu0 0.0
        %1902 = vmatpush1.msra.mxu0 0.0
        %1903 = vmatprep.subr.mxu0 0.0
        %1904 = vmatpush1.msra.mxu0 0.0
        %1905 = vmatprep.subr.mxu0 0.0
        %1906 = vmatpush1.msra.mxu0 0.0
        %1907 = vmatprep.subr.mxu0 0.0
        %1908 = vmatpush1.msra.mxu0 0.0
        %1909 = vmatprep.subr.mxu0 0.0
        %1910 = vmatpush1.msra.mxu0 0.0
        %1911 = vmatprep.subr.mxu0 0.0
        %1912 = vmatpush1.msra.mxu0 %v1876
        %1913 = vmatprep.subr.mxu0 0.0
        %1914 = vmatpush2.msra.mxu0 0.0
        %1915 = vmatprep.subr.mxu0 0.0
        %1916 = vmatpush2.msra.mxu0 0.0
        %1917 = vmatprep.subr.mxu0 0.0
        %1918 = vmatpush2.msra.mxu0 0.0
        %1919 = vmatprep.subr.mxu0 0.0
        %1920 = vmatpush2.msra.mxu0 0.0
        %1921 = vmatprep.subr.mxu0 0.0
        %1922 = vmatpush2.msra.mxu0 0.0
        %1923 = vmatprep.subr.mxu0 0.0
        %1924 = vmatpush2.msra.mxu0 0.0
        %1925 = vmatprep.subr.mxu0 0.0
        %1926 = vmatpush2.msra.mxu0 0.0
        %1927 = vmatprep.subr.mxu0 0.0
        %1928 = vmatpush2.msra.mxu0 0.0
        %1929 = vmatprep.subr.mxu0 0.0
        %1930 = vmatpush2.msra.mxu0 0.0
        %1931 = vmatprep.subr.mxu0 0.0
        %1932 = vmatpush2.msra.mxu0 0.0
        %1933 = vmatprep.subr.mxu0 0.0
        %1934 = vmatpush2.msra.mxu0 0.0
        %1935 = vmatprep.subr.mxu0 0.0
        %1936 = vmatpush2.msra.mxu0 0.0
        %1937 = vmatprep.subr.mxu0 0.0
        %1938 = vmatpush2.msra.mxu0 0.0
        %1939 = vmatprep.subr.mxu0 0.0
        %1940 = vmatpush2.msra.mxu0 0.0
        %1941 = vmatprep.subr.mxu0 0.0
        %1942 = vmatpush2.msra.mxu0 0.0
        %1943 = vmatprep.subr.mxu0 0.0
        %1944 = vmatpush2.msra.mxu0 0.0
        %1945 = vmatprep.mubr.f32.mxu0 0.0
        %1946 = vmatmul.mubr.f32.gmra.mxu0 %v1879
        %v1947 = vpop.f32.mrf.mxu0
        %v1948 = vadd.f32 0.0, %v1947
        %v1949 = vpop.f32.mrf.mxu0
        %1950 = vdwg.mxu0
        %1951 = vrot.lane.b32.xlu0 %v1619, 112
        %v1952 = vpop.permute.xlu0 %1951
        %1953 = vrot.lane.b32.xlu0 %v1619, 80
        %v1954 = vpop.permute.xlu0 %1953
        %v1955 = vsel %vm554, %v1952, 0
        %v1957 = vsel %vm554, %v1954, 0
        %1959 = vmatprep.subr.mxu0 0.0
        %1960 = vmatpush1.xpose.msra.mxu0 0.0
        %1961 = vmatprep.subr.mxu0 0.0
        %1962 = vmatpush1.xpose.msra.mxu0 0.0
        %1963 = vmatprep.subr.mxu0 0.0
        %1964 = vmatpush1.xpose.msra.mxu0 0.0
        %1965 = vmatprep.subr.mxu0 0.0
        %1966 = vmatpush1.xpose.msra.mxu0 0.0
        %1967 = vmatprep.subr.mxu0 0.0
        %1968 = vmatpush1.xpose.msra.mxu0 0.0
        %1969 = vmatprep.subr.mxu0 0.0
        %1970 = vmatpush1.xpose.msra.mxu0 0.0
        %1971 = vmatprep.subr.mxu0 0.0
        %1972 = vmatpush1.xpose.msra.mxu0 0.0
        %1973 = vmatprep.subr.mxu0 0.0
        %1974 = vmatpush1.xpose.msra.mxu0 0.0
        %1975 = vmatprep.subr.mxu0 0.0
        %1976 = vmatpush1.xpose.msra.mxu0 0.0
        %1977 = vmatprep.subr.mxu0 0.0
        %1978 = vmatpush1.xpose.msra.mxu0 0.0
        %1979 = vmatprep.subr.mxu0 0.0
        %1980 = vmatpush1.xpose.msra.mxu0 0.0
        %1981 = vmatprep.subr.mxu0 0.0
        %1982 = vmatpush1.xpose.msra.mxu0 0.0
        %1983 = vmatprep.subr.mxu0 0.0
        %1984 = vmatpush1.xpose.msra.mxu0 0.0
        %1985 = vmatprep.subr.mxu0 0.0
        %1986 = vmatpush1.xpose.msra.mxu0 0.0
        %1987 = vmatprep.subr.mxu0 0.0
        %1988 = vmatpush1.xpose.msra.mxu0 0.0
        %1989 = vmatprep.subr.mxu0 0.0
        %1990 = vmatpush1.xpose.msra.mxu0 %v1957
        %1991 = vmatprep.subr.mxu0 0.0
        %1992 = vmatpush2.xpose.msra.mxu0 0.0
        %1993 = vmatprep.subr.mxu0 0.0
        %1994 = vmatpush2.xpose.msra.mxu0 0.0
        %1995 = vmatprep.subr.mxu0 0.0
        %1996 = vmatpush2.xpose.msra.mxu0 0.0
        %1997 = vmatprep.subr.mxu0 0.0
        %1998 = vmatpush2.xpose.msra.mxu0 0.0
        %1999 = vmatprep.subr.mxu0 0.0
        %2000 = vmatpush2.xpose.msra.mxu0 0.0
        %2001 = vmatprep.subr.mxu0 0.0
        %2002 = vmatpush2.xpose.msra.mxu0 0.0
        %2003 = vmatprep.subr.mxu0 0.0
        %2004 = vmatpush2.xpose.msra.mxu0 0.0
        %2005 = vmatprep.subr.mxu0 0.0
        %2006 = vmatpush2.xpose.msra.mxu0 0.0
        %2007 = vmatprep.subr.mxu0 0.0
        %2008 = vmatpush2.xpose.msra.mxu0 0.0
        %2009 = vmatprep.subr.mxu0 0.0
        %2010 = vmatpush2.xpose.msra.mxu0 0.0
        %2011 = vmatprep.subr.mxu0 0.0
        %2012 = vmatpush2.xpose.msra.mxu0 0.0
        %2013 = vmatprep.subr.mxu0 0.0
        %2014 = vmatpush2.xpose.msra.mxu0 0.0
        %2015 = vmatprep.subr.mxu0 0.0
        %2016 = vmatpush2.xpose.msra.mxu0 0.0
        %2017 = vmatprep.subr.mxu0 0.0
        %2018 = vmatpush2.xpose.msra.mxu0 0.0
        %2019 = vmatprep.subr.mxu0 0.0
        %2020 = vmatpush2.xpose.msra.mxu0 0.0
        %2021 = vmatprep.subr.mxu0 0.0
        %2022 = vmatpush2.xpose.msra.mxu0 0.0
        %2023 = vmatprep.mubr.f32.mxu0 0.0
        %2024 = vmatmul.mubr.f32.gmra.mxu0 %v1955
        %v2025 = vpop.f32.mrf.mxu0
        %v2026 = vadd.f32 0.0, %v2025
        %v2027 = vpop.f32.mrf.mxu0
        %2028 = vdwg.mxu0
        %v2029 = vsel %vm554, %v2026, -inf
        %2030 = vmax.xlane.f32.xlu0 %v2029
        %v2031 = vpop.xlane.xlu0 %2030
        %v2032 = vsub.f32 %v2026, %v2031
        %v2033 = vmul.f32 %v2032, 1.442695
        %v2034 = vpow.pop %v2033
        %v2035 = vsel %vm554, %v2034, 0.0
        %2036 = vadd.xlane.f32.xlu0 %v2035
        %v2037 = vpop.xlane.xlu0 %2036
        %v2038 = vrcp.pop %v2037
        %v2039 = vmul.f32 %v2034, %v2038
        %2040 = vrot.lane.b32.xlu0 %v1619, 48
        %v2041 = vpop.permute.xlu0 %2040
        %v2044 = vsel %vm554, %v2039, 0
        %2046 = vmatprep.subr.mxu0 0.0
        %2047 = vmatpush1.msra.mxu0 0.0
        %2048 = vmatprep.subr.mxu0 0.0
        %2049 = vmatpush1.msra.mxu0 0.0
        %2050 = vmatprep.subr.mxu0 0.0
        %2051 = vmatpush1.msra.mxu0 0.0
        %2052 = vmatprep.subr.mxu0 0.0
        %2053 = vmatpush1.msra.mxu0 0.0
        %2054 = vmatprep.subr.mxu0 0.0
        %2055 = vmatpush1.msra.mxu0 0.0
        %2056 = vmatprep.subr.mxu0 0.0
        %2057 = vmatpush1.msra.mxu0 0.0
        %2058 = vmatprep.subr.mxu0 0.0
        %2059 = vmatpush1.msra.mxu0 0.0
        %2060 = vmatprep.subr.mxu0 0.0
        %2061 = vmatpush1.msra.mxu0 0.0
        %2062 = vmatprep.subr.mxu0 0.0
        %2063 = vmatpush1.msra.mxu0 0.0
        %2064 = vmatprep.subr.mxu0 0.0
        %2065 = vmatpush1.msra.mxu0 0.0
        %2066 = vmatprep.subr.mxu0 0.0
        %2067 = vmatpush1.msra.mxu0 0.0
        %2068 = vmatprep.subr.mxu0 0.0
        %2069 = vmatpush1.msra.mxu0 0.0
        %2070 = vmatprep.subr.mxu0 0.0
        %2071 = vmatpush1.msra.mxu0 0.0
        %2072 = vmatprep.subr.mxu0 0.0
        %2073 = vmatpush1.msra.mxu0 0.0
        %2074 = vmatprep.subr.mxu0 0.0
        %2075 = vmatpush1.msra.mxu0 0.0
        %2076 = vmatprep.subr.mxu0 0.0
        %2077 = vmatpush1.msra.mxu0 %v2041
        %2078 = vmatprep.subr.mxu0 0.0
        %2079 = vmatpush2.msra.mxu0 0.0
        %2080 = vmatprep.subr.mxu0 0.0
        %2081 = vmatpush2.msra.mxu0 0.0
        %2082 = vmatprep.subr.mxu0 0.0
        %2083 = vmatpush2.msra.mxu0 0.0
        %2084 = vmatprep.subr.mxu0 0.0
        %2085 = vmatpush2.msra.mxu0 0.0
        %2086 = vmatprep.subr.mxu0 0.0
        %2087 = vmatpush2.msra.mxu0 0.0
        %2088 = vmatprep.subr.mxu0 0.0
        %2089 = vmatpush2.msra.mxu0 0.0
        %2090 = vmatprep.subr.mxu0 0.0
        %2091 = vmatpush2.msra.mxu0 0.0
        %2092 = vmatprep.subr.mxu0 0.0
        %2093 = vmatpush2.msra.mxu0 0.0
        %2094 = vmatprep.subr.mxu0 0.0
        %2095 = vmatpush2.msra.mxu0 0.0
        %2096 = vmatprep.subr.mxu0 0.0
        %2097 = vmatpush2.msra.mxu0 0.0
        %2098 = vmatprep.subr.mxu0 0.0
        %2099 = vmatpush2.msra.mxu0 0.0
        %2100 = vmatprep.subr.mxu0 0.0
        %2101 = vmatpush2.msra.mxu0 0.0
        %2102 = vmatprep.subr.mxu0 0.0
        %2103 = vmatpush2.msra.mxu0 0.0
        %2104 = vmatprep.subr.mxu0 0.0
        %2105 = vmatpush2.msra.mxu0 0.0
        %2106 = vmatprep.subr.mxu0 0.0
        %2107 = vmatpush2.msra.mxu0 0.0
        %2108 = vmatprep.subr.mxu0 0.0
        %2109 = vmatpush2.msra.mxu0 0.0
        %2110 = vmatprep.mubr.f32.mxu0 0.0
        %2111 = vmatmul.mubr.f32.gmra.mxu0 %v2044
        %v2112 = vpop.f32.mrf.mxu0
        %v2113 = vadd.f32 0.0, %v2112
        %v2114 = vpop.f32.mrf.mxu0
        %2115 = vdwg.mxu0
        %2116 = vrot.lane.b32.xlu0 %v1619, 104
        %v2117 = vpop.permute.xlu0 %2116
        %2118 = vrot.lane.b32.xlu0 %v1619, 72
        %v2119 = vpop.permute.xlu0 %2118
        %v2120 = vsel %vm554, %v2117, 0
        %v2122 = vsel %vm554, %v2119, 0
        %2124 = vmatprep.subr.mxu0 0.0
        %2125 = vmatpush1.xpose.msra.mxu0 0.0
        %2126 = vmatprep.subr.mxu0 0.0
        %2127 = vmatpush1.xpose.msra.mxu0 0.0
        %2128 = vmatprep.subr.mxu0 0.0
        %2129 = vmatpush1.xpose.msra.mxu0 0.0
        %2130 = vmatprep.subr.mxu0 0.0
        %2131 = vmatpush1.xpose.msra.mxu0 0.0
        %2132 = vmatprep.subr.mxu0 0.0
        %2133 = vmatpush1.xpose.msra.mxu0 0.0
        %2134 = vmatprep.subr.mxu0 0.0
        %2135 = vmatpush1.xpose.msra.mxu0 0.0
        %2136 = vmatprep.subr.mxu0 0.0
        %2137 = vmatpush1.xpose.msra.mxu0 0.0
        %2138 = vmatprep.subr.mxu0 0.0
        %2139 = vmatpush1.xpose.msra.mxu0 0.0
        %2140 = vmatprep.subr.mxu0 0.0
        %2141 = vmatpush1.xpose.msra.mxu0 0.0
        %2142 = vmatprep.subr.mxu0 0.0
        %2143 = vmatpush1.xpose.msra.mxu0 0.0
        %2144 = vmatprep.subr.mxu0 0.0
        %2145 = vmatpush1.xpose.msra.mxu0 0.0
        %2146 = vmatprep.subr.mxu0 0.0
        %2147 = vmatpush1.xpose.msra.mxu0 0.0
        %2148 = vmatprep.subr.mxu0 0.0
        %2149 = vmatpush1.xpose.msra.mxu0 0.0
        %2150 = vmatprep.subr.mxu0 0.0
        %2151 = vmatpush1.xpose.msra.mxu0 0.0
        %2152 = vmatprep.subr.mxu0 0.0
        %2153 = vmatpush1.xpose.msra.mxu0 0.0
        %2154 = vmatprep.subr.mxu0 0.0
        %2155 = vmatpush1.xpose.msra.mxu0 %v2122
        %2156 = vmatprep.subr.mxu0 0.0
        %2157 = vmatpush2.xpose.msra.mxu0 0.0
        %2158 = vmatprep.subr.mxu0 0.0
        %2159 = vmatpush2.xpose.msra.mxu0 0.0
        %2160 = vmatprep.subr.mxu0 0.0
        %2161 = vmatpush2.xpose.msra.mxu0 0.0
        %2162 = vmatprep.subr.mxu0 0.0
        %2163 = vmatpush2.xpose.msra.mxu0 0.0
        %2164 = vmatprep.subr.mxu0 0.0
        %2165 = vmatpush2.xpose.msra.mxu0 0.0
        %2166 = vmatprep.subr.mxu0 0.0
        %2167 = vmatpush2.xpose.msra.mxu0 0.0
        %2168 = vmatprep.subr.mxu0 0.0
        %2169 = vmatpush2.xpose.msra.mxu0 0.0
        %2170 = vmatprep.subr.mxu0 0.0
        %2171 = vmatpush2.xpose.msra.mxu0 0.0
        %2172 = vmatprep.subr.mxu0 0.0
        %2173 = vmatpush2.xpose.msra.mxu0 0.0
        %2174 = vmatprep.subr.mxu0 0.0
        %2175 = vmatpush2.xpose.msra.mxu0 0.0
        %2176 = vmatprep.subr.mxu0 0.0
        %2177 = vmatpush2.xpose.msra.mxu0 0.0
        %2178 = vmatprep.subr.mxu0 0.0
        %2179 = vmatpush2.xpose.msra.mxu0 0.0
        %2180 = vmatprep.subr.mxu0 0.0
        %2181 = vmatpush2.xpose.msra.mxu0 0.0
        %2182 = vmatprep.subr.mxu0 0.0
        %2183 = vmatpush2.xpose.msra.mxu0 0.0
        %2184 = vmatprep.subr.mxu0 0.0
        %2185 = vmatpush2.xpose.msra.mxu0 0.0
        %2186 = vmatprep.subr.mxu0 0.0
        %2187 = vmatpush2.xpose.msra.mxu0 0.0
        %2188 = vmatprep.mubr.f32.mxu0 0.0
        %2189 = vmatmul.mubr.f32.gmra.mxu0 %v2120
        %v2190 = vpop.f32.mrf.mxu0
        %v2191 = vadd.f32 0.0, %v2190
        %v2192 = vpop.f32.mrf.mxu0
        %2193 = vdwg.mxu0
        %v2194 = vsel %vm554, %v2191, -inf
        %2195 = vmax.xlane.f32.xlu0 %v2194
        %v2196 = vpop.xlane.xlu0 %2195
        %v2197 = vsub.f32 %v2191, %v2196
        %v2198 = vmul.f32 %v2197, 1.442695
        %v2199 = vpow.pop %v2198
        %v2200 = vsel %vm554, %v2199, 0.0
        %2201 = vadd.xlane.f32.xlu0 %v2200
        %v2202 = vpop.xlane.xlu0 %2201
        %v2203 = vrcp.pop %v2202
        %v2204 = vmul.f32 %v2199, %v2203
        %2205 = vrot.lane.b32.xlu0 %v1619, 40
        %v2206 = vpop.permute.xlu0 %2205
        %v2209 = vsel %vm554, %v2204, 0
        %2211 = vmatprep.subr.mxu0 0.0
        %2212 = vmatpush1.msra.mxu0 0.0
        %2213 = vmatprep.subr.mxu0 0.0
        %2214 = vmatpush1.msra.mxu0 0.0
        %2215 = vmatprep.subr.mxu0 0.0
        %2216 = vmatpush1.msra.mxu0 0.0
        %2217 = vmatprep.subr.mxu0 0.0
        %2218 = vmatpush1.msra.mxu0 0.0
        %2219 = vmatprep.subr.mxu0 0.0
        %2220 = vmatpush1.msra.mxu0 0.0
        %2221 = vmatprep.subr.mxu0 0.0
        %2222 = vmatpush1.msra.mxu0 0.0
        %2223 = vmatprep.subr.mxu0 0.0
        %2224 = vmatpush1.msra.mxu0 0.0
        %2225 = vmatprep.subr.mxu0 0.0
        %2226 = vmatpush1.msra.mxu0 0.0
        %2227 = vmatprep.subr.mxu0 0.0
        %2228 = vmatpush1.msra.mxu0 0.0
        %2229 = vmatprep.subr.mxu0 0.0
        %2230 = vmatpush1.msra.mxu0 0.0
        %2231 = vmatprep.subr.mxu0 0.0
        %2232 = vmatpush1.msra.mxu0 0.0
        %2233 = vmatprep.subr.mxu0 0.0
        %2234 = vmatpush1.msra.mxu0 0.0
        %2235 = vmatprep.subr.mxu0 0.0
        %2236 = vmatpush1.msra.mxu0 0.0
        %2237 = vmatprep.subr.mxu0 0.0
        %2238 = vmatpush1.msra.mxu0 0.0
        %2239 = vmatprep.subr.mxu0 0.0
        %2240 = vmatpush1.msra.mxu0 0.0
        %2241 = vmatprep.subr.mxu0 0.0
        %2242 = vmatpush1.msra.mxu0 %v2206
        %2243 = vmatprep.subr.mxu0 0.0
        %2244 = vmatpush2.msra.mxu0 0.0
        %2245 = vmatprep.subr.mxu0 0.0
        %2246 = vmatpush2.msra.mxu0 0.0
        %2247 = vmatprep.subr.mxu0 0.0
        %2248 = vmatpush2.msra.mxu0 0.0
        %2249 = vmatprep.subr.mxu0 0.0
        %2250 = vmatpush2.msra.mxu0 0.0
        %2251 = vmatprep.subr.mxu0 0.0
        %2252 = vmatpush2.msra.mxu0 0.0
        %2253 = vmatprep.subr.mxu0 0.0
        %2254 = vmatpush2.msra.mxu0 0.0
        %2255 = vmatprep.subr.mxu0 0.0
        %2256 = vmatpush2.msra.mxu0 0.0
        %2257 = vmatprep.subr.mxu0 0.0
        %2258 = vmatpush2.msra.mxu0 0.0
        %2259 = vmatprep.subr.mxu0 0.0
        %2260 = vmatpush2.msra.mxu0 0.0
        %2261 = vmatprep.subr.mxu0 0.0
        %2262 = vmatpush2.msra.mxu0 0.0
        %2263 = vmatprep.subr.mxu0 0.0
        %2264 = vmatpush2.msra.mxu0 0.0
        %2265 = vmatprep.subr.mxu0 0.0
        %2266 = vmatpush2.msra.mxu0 0.0
        %2267 = vmatprep.subr.mxu0 0.0
        %2268 = vmatpush2.msra.mxu0 0.0
        %2269 = vmatprep.subr.mxu0 0.0
        %2270 = vmatpush2.msra.mxu0 0.0
        %2271 = vmatprep.subr.mxu0 0.0
        %2272 = vmatpush2.msra.mxu0 0.0
        %2273 = vmatprep.subr.mxu0 0.0
        %2274 = vmatpush2.msra.mxu0 0.0
        %2275 = vmatprep.mubr.f32.mxu0 0.0
        %2276 = vmatmul.mubr.f32.gmra.mxu0 %v2209
        %v2277 = vpop.f32.mrf.mxu0
        %v2278 = vadd.f32 0.0, %v2277
        %v2279 = vpop.f32.mrf.mxu0
        %2280 = vdwg.mxu0
        %2282 = vrot.lane.b32.xlu0 %v1948, 8
        %v2283 = vpop.permute.xlu0 %2282
        %2286 = vrot.lane.b32.xlu0 %v2113, 16
        %v2287 = vpop.permute.xlu0 %2286
        %2290 = vrot.lane.b32.xlu0 %v2278, 24
        %v2291 = vpop.permute.xlu0 %2290
        %v2293 = vsel %vm554, %v1783, %v2283
        %v2294 = vsel %vm1224, %v2293, %v2287
        %v2295 = vsel %vm1226, %v2294, %v2291
        %s2296 = scalar_lea.vmem %s4, 32
        %v2297 = vld [vmem:[%s2296] sm:$0xff]
        %v2298 = vld [vmem:[%s2296 + $0x8] sm:$0xff]
        %v2299 = vld [vmem:[%s2296 + $0x10] sm:$0xff]
        %v2300 = vld [vmem:[%s2296 + $0x18] sm:$0xff]
        %s2301 = scalar_lea.vmem %s5, 1
        %v2302 = vld [vmem:[%s2301] sm:$0x1]
        %v2304 = vlaneseq
        %v2305 = vshrl.u32 %v2304, 7
        %v2306 = vsub.s32 0, %v2305
        %v2307 = vrot.slane %v2302, %v2306
        %v2310 = vsel %vm477, %v2295, 0
        %2312 = vmatprep.subr.mxu0 0.0
        %2313 = vmatpush1.msra.mxu0 0.0
        %2314 = vmatprep.subr.mxu0 0.0
        %2315 = vmatpush1.msra.mxu0 0.0
        %2316 = vmatprep.subr.mxu0 0.0
        %2317 = vmatpush1.msra.mxu0 0.0
        %2318 = vmatprep.subr.mxu0 0.0
        %2319 = vmatpush1.msra.mxu0 0.0
        %2320 = vmatprep.subr.mxu0 0.0
        %2321 = vmatpush1.msra.mxu0 0.0
        %2322 = vmatprep.subr.mxu0 0.0
        %2323 = vmatpush1.msra.mxu0 0.0
        %2324 = vmatprep.subr.mxu0 0.0
        %2325 = vmatpush1.msra.mxu0 0.0
        %2326 = vmatprep.subr.mxu0 0.0
        %2327 = vmatpush1.msra.mxu0 0.0
        %2328 = vmatprep.subr.mxu0 0.0
        %2329 = vmatpush1.msra.mxu0 0.0
        %2330 = vmatprep.subr.mxu0 0.0
        %2331 = vmatpush1.msra.mxu0 0.0
        %2332 = vmatprep.subr.mxu0 0.0
        %2333 = vmatpush1.msra.mxu0 0.0
        %2334 = vmatprep.subr.mxu0 0.0
        %2335 = vmatpush1.msra.mxu0 0.0
        %2336 = vmatprep.subr.mxu0 0.0
        %2337 = vmatpush1.msra.mxu0 %v2300
        %2338 = vmatprep.subr.mxu0 0.0
        %2339 = vmatpush1.msra.mxu0 %v2299
        %2340 = vmatprep.subr.mxu0 0.0
        %2341 = vmatpush1.msra.mxu0 %v2298
        %2342 = vmatprep.subr.mxu0 0.0
        %2343 = vmatpush1.msra.mxu0 %v2297
        %2344 = vmatprep.subr.mxu0 0.0
        %2345 = vmatpush2.msra.mxu0 0.0
        %2346 = vmatprep.subr.mxu0 0.0
        %2347 = vmatpush2.msra.mxu0 0.0
        %2348 = vmatprep.subr.mxu0 0.0
        %2349 = vmatpush2.msra.mxu0 0.0
        %2350 = vmatprep.subr.mxu0 0.0
        %2351 = vmatpush2.msra.mxu0 0.0
        %2352 = vmatprep.subr.mxu0 0.0
        %2353 = vmatpush2.msra.mxu0 0.0
        %2354 = vmatprep.subr.mxu0 0.0
        %2355 = vmatpush2.msra.mxu0 0.0
        %2356 = vmatprep.subr.mxu0 0.0
        %2357 = vmatpush2.msra.mxu0 0.0
        %2358 = vmatprep.subr.mxu0 0.0
        %2359 = vmatpush2.msra.mxu0 0.0
        %2360 = vmatprep.subr.mxu0 0.0
        %2361 = vmatpush2.msra.mxu0 0.0
        %2362 = vmatprep.subr.mxu0 0.0
        %2363 = vmatpush2.msra.mxu0 0.0
        %2364 = vmatprep.subr.mxu0 0.0
        %2365 = vmatpush2.msra.mxu0 0.0
        %2366 = vmatprep.subr.mxu0 0.0
        %2367 = vmatpush2.msra.mxu0 0.0
        %2368 = vmatprep.subr.mxu0 0.0
        %2369 = vmatpush2.msra.mxu0 0.0
        %2370 = vmatprep.subr.mxu0 0.0
        %2371 = vmatpush2.msra.mxu0 0.0
        %2372 = vmatprep.subr.mxu0 0.0
        %2373 = vmatpush2.msra.mxu0 0.0
        %2374 = vmatprep.subr.mxu0 0.0
        %2375 = vmatpush2.msra.mxu0 0.0
        %2376 = vmatprep.mubr.f32.mxu0 0.0
        %2377 = vmatmul.mubr.f32.gmra.mxu0 %v2310
        %v2378 = vpop.f32.mrf.mxu0
        %v2379 = vadd.f32 %v2307, %v2378
        %v2380 = vpop.f32.mrf.mxu0
        %2381 = vdwg.mxu0
        %v2382 = vmul.f32 %v1321, 0.9
        %v2383 = vsel %vm477, %v2379, 0.0
        %v2384 = vrot.slane %v2383, 4
        %v2385 = vadd.f32 %v2383, %v2384
        %v2386 = vrot.slane %v2385, 2
        %v2387 = vadd.f32 %v2385, %v2386
        %v2388 = vrot.slane %v2387, 1
        %v2389 = vadd.f32 %v2387, %v2388
        %v2390 = vmul.f32 %v2389, %v1319
        %v2391 = vadd.f32 %v2382, %v2390
        %v2392 = vadd.f32 %v2379, %v2391
        %s2393 = scalar_lea.vmem %s6, 32
        %v2394 = vld [vmem:[%s2393] sm:$0xff]
        %v2395 = vld [vmem:[%s2393 + $0x8] sm:$0xff]
        %v2396 = vld [vmem:[%s2393 + $0x10] sm:$0xff]
        %v2397 = vld [vmem:[%s2393 + $0x18] sm:$0xff]
        %s2398 = scalar_lea.vmem %s7, 1
        %v2399 = vld [vmem:[%s2398] sm:$0x1]
        %v2401 = vlaneseq
        %v2402 = vshrl.u32 %v2401, 7
        %v2403 = vsub.s32 0, %v2402
        %v2404 = vrot.slane %v2399, %v2403
        %v2407 = vsel %vm477, %v2392, 0
        %2409 = vmatprep.subr.mxu0 0.0
        %2410 = vmatpush1.msra.mxu0 0.0
        %2411 = vmatprep.subr.mxu0 0.0
        %2412 = vmatpush1.msra.mxu0 0.0
        %2413 = vmatprep.subr.mxu0 0.0
        %2414 = vmatpush1.msra.mxu0 0.0
        %2415 = vmatprep.subr.mxu0 0.0
        %2416 = vmatpush1.msra.mxu0 0.0
        %2417 = vmatprep.subr.mxu0 0.0
        %2418 = vmatpush1.msra.mxu0 0.0
        %2419 = vmatprep.subr.mxu0 0.0
        %2420 = vmatpush1.msra.mxu0 0.0
        %2421 = vmatprep.subr.mxu0 0.0
        %2422 = vmatpush1.msra.mxu0 0.0
        %2423 = vmatprep.subr.mxu0 0.0
        %2424 = vmatpush1.msra.mxu0 0.0
        %2425 = vmatprep.subr.mxu0 0.0
        %2426 = vmatpush1.msra.mxu0 0.0
        %2427 = vmatprep.subr.mxu0 0.0
        %2428 = vmatpush1.msra.mxu0 0.0
        %2429 = vmatprep.subr.mxu0 0.0
        %2430 = vmatpush1.msra.mxu0 0.0
        %2431 = vmatprep.subr.mxu0 0.0
        %2432 = vmatpush1.msra.mxu0 0.0
        %2433 = vmatprep.subr.mxu0 0.0
        %2434 = vmatpush1.msra.mxu0 %v2397
        %2435 = vmatprep.subr.mxu0 0.0
        %2436 = vmatpush1.msra.mxu0 %v2396
        %2437 = vmatprep.subr.mxu0 0.0
        %2438 = vmatpush1.msra.mxu0 %v2395
        %2439 = vmatprep.subr.mxu0 0.0
        %2440 = vmatpush1.msra.mxu0 %v2394
        %2441 = vmatprep.subr.mxu0 0.0
        %2442 = vmatpush2.msra.mxu0 0.0
        %2443 = vmatprep.subr.mxu0 0.0
        %2444 = vmatpush2.msra.mxu0 0.0
        %2445 = vmatprep.subr.mxu0 0.0
        %2446 = vmatpush2.msra.mxu0 0.0
        %2447 = vmatprep.subr.mxu0 0.0
        %2448 = vmatpush2.msra.mxu0 0.0
        %2449 = vmatprep.subr.mxu0 0.0
        %2450 = vmatpush2.msra.mxu0 0.0
        %2451 = vmatprep.subr.mxu0 0.0
        %2452 = vmatpush2.msra.mxu0 0.0
        %2453 = vmatprep.subr.mxu0 0.0
        %2454 = vmatpush2.msra.mxu0 0.0
        %2455 = vmatprep.subr.mxu0 0.0
        %2456 = vmatpush2.msra.mxu0 0.0
        %2457 = vmatprep.subr.mxu0 0.0
        %2458 = vmatpush2.msra.mxu0 0.0
        %2459 = vmatprep.subr.mxu0 0.0
        %2460 = vmatpush2.msra.mxu0 0.0
        %2461 = vmatprep.subr.mxu0 0.0
        %2462 = vmatpush2.msra.mxu0 0.0
        %2463 = vmatprep.subr.mxu0 0.0
        %2464 = vmatpush2.msra.mxu0 0.0
        %2465 = vmatprep.subr.mxu0 0.0
        %2466 = vmatpush2.msra.mxu0 0.0
        %2467 = vmatprep.subr.mxu0 0.0
        %2468 = vmatpush2.msra.mxu0 0.0
        %2469 = vmatprep.subr.mxu0 0.0
        %2470 = vmatpush2.msra.mxu0 0.0
        %2471 = vmatprep.subr.mxu0 0.0
        %2472 = vmatpush2.msra.mxu0 0.0
        %2473 = vmatprep.mubr.f32.mxu0 0.0
        %2474 = vmatmul.mubr.f32.gmra.mxu0 %v2407
        %v2475 = vpop.f32.mrf.mxu0
        %v2476 = vadd.f32 %v2404, %v2475
        %v2477 = vpop.f32.mrf.mxu0
        %2478 = vdwg.mxu0
        %v2479 = vmul.f32 %v2476, 0.5
        %v2480 = vmul.f32 %v2476, 0.70710677
        %v2481 = verf.f32.pop %v2480
        %v2482 = vadd.f32 %v2481, 1.0
        %v2483 = vmul.f32 %v2479, %v2482
        %s2484 = scalar_lea.vmem %s8, 128
        %v2485 = vld [vmem:[%s2484] sm:$0xff]
        %v2486 = vld [vmem:[%s2484 + $0x8] sm:$0xff]
        %v2487 = vld [vmem:[%s2484 + $0x10] sm:$0xff]
        %v2488 = vld [vmem:[%s2484 + $0x18] sm:$0xff]
        %v2489 = vld [vmem:[%s2484 + $0x20] sm:$0xff]
        %v2490 = vld [vmem:[%s2484 + $0x28] sm:$0xff]
        %v2491 = vld [vmem:[%s2484 + $0x30] sm:$0xff]
        %v2492 = vld [vmem:[%s2484 + $0x38] sm:$0xff]
        %v2493 = vld [vmem:[%s2484 + $0x40] sm:$0xff]
        %v2494 = vld [vmem:[%s2484 + $0x48] sm:$0xff]
        %v2495 = vld [vmem:[%s2484 + $0x50] sm:$0xff]
        %v2496 = vld [vmem:[%s2484 + $0x58] sm:$0xff]
        %v2497 = vld [vmem:[%s2484 + $0x60] sm:$0xff]
        %v2498 = vld [vmem:[%s2484 + $0x68] sm:$0xff]
        %v2499 = vld [vmem:[%s2484 + $0x70] sm:$0xff]
        %v2500 = vld [vmem:[%s2484 + $0x78] sm:$0xff]
        %s2501 = scalar_lea.vmem %s9, 1
        %v2502 = vld [vmem:[%s2501] sm:$0x1]
        %v2504 = vlaneseq
        %v2505 = vshrl.u32 %v2504, 7
        %v2506 = vsub.s32 0, %v2505
        %v2507 = vrot.slane %v2502, %v2506
        %2509 = vmatprep.subr.mxu0 0.0
        %2510 = vmatpush1.msra.mxu0 %v2500
        %2511 = vmatprep.subr.mxu0 0.0
        %2512 = vmatpush1.msra.mxu0 %v2499
        %2513 = vmatprep.subr.mxu0 0.0
        %2514 = vmatpush1.msra.mxu0 %v2498
        %2515 = vmatprep.subr.mxu0 0.0
        %2516 = vmatpush1.msra.mxu0 %v2497
        %2517 = vmatprep.subr.mxu0 0.0
        %2518 = vmatpush1.msra.mxu0 %v2496
        %2519 = vmatprep.subr.mxu0 0.0
        %2520 = vmatpush1.msra.mxu0 %v2495
        %2521 = vmatprep.subr.mxu0 0.0
        %2522 = vmatpush1.msra.mxu0 %v2494
        %2523 = vmatprep.subr.mxu0 0.0
        %2524 = vmatpush1.msra.mxu0 %v2493
        %2525 = vmatprep.subr.mxu0 0.0
        %2526 = vmatpush1.msra.mxu0 %v2492
        %2527 = vmatprep.subr.mxu0 0.0
        %2528 = vmatpush1.msra.mxu0 %v2491
        %2529 = vmatprep.subr.mxu0 0.0
        %2530 = vmatpush1.msra.mxu0 %v2490
        %2531 = vmatprep.subr.mxu0 0.0
        %2532 = vmatpush1.msra.mxu0 %v2489
        %2533 = vmatprep.subr.mxu0 0.0
        %2534 = vmatpush1.msra.mxu0 %v2488
        %2535 = vmatprep.subr.mxu0 0.0
        %2536 = vmatpush1.msra.mxu0 %v2487
        %2537 = vmatprep.subr.mxu0 0.0
        %2538 = vmatpush1.msra.mxu0 %v2486
        %2539 = vmatprep.subr.mxu0 0.0
        %2540 = vmatpush1.msra.mxu0 %v2485
        %2541 = vmatprep.subr.mxu0 0.0
        %2542 = vmatpush2.msra.mxu0 0.0
        %2543 = vmatprep.subr.mxu0 0.0
        %2544 = vmatpush2.msra.mxu0 0.0
        %2545 = vmatprep.subr.mxu0 0.0
        %2546 = vmatpush2.msra.mxu0 0.0
        %2547 = vmatprep.subr.mxu0 0.0
        %2548 = vmatpush2.msra.mxu0 0.0
        %2549 = vmatprep.subr.mxu0 0.0
        %2550 = vmatpush2.msra.mxu0 0.0
        %2551 = vmatprep.subr.mxu0 0.0
        %2552 = vmatpush2.msra.mxu0 0.0
        %2553 = vmatprep.subr.mxu0 0.0
        %2554 = vmatpush2.msra.mxu0 0.0
        %2555 = vmatprep.subr.mxu0 0.0
        %2556 = vmatpush2.msra.mxu0 0.0
        %2557 = vmatprep.subr.mxu0 0.0
        %2558 = vmatpush2.msra.mxu0 0.0
        %2559 = vmatprep.subr.mxu0 0.0
        %2560 = vmatpush2.msra.mxu0 0.0
        %2561 = vmatprep.subr.mxu0 0.0
        %2562 = vmatpush2.msra.mxu0 0.0
        %2563 = vmatprep.subr.mxu0 0.0
        %2564 = vmatpush2.msra.mxu0 0.0
        %2565 = vmatprep.subr.mxu0 0.0
        %2566 = vmatpush2.msra.mxu0 0.0
        %2567 = vmatprep.subr.mxu0 0.0
        %2568 = vmatpush2.msra.mxu0 0.0
        %2569 = vmatprep.subr.mxu0 0.0
        %2570 = vmatpush2.msra.mxu0 0.0
        %2571 = vmatprep.subr.mxu0 0.0
        %2572 = vmatpush2.msra.mxu0 0.0
        %2573 = vmatprep.mubr.f32.mxu0 0.0
        %2574 = vmatmul.mubr.f32.gmra.mxu0 %v2483
        %v2575 = vpop.f32.mrf.mxu0
        %v2576 = vadd.f32 %v2507, %v2575
        %v2577 = vpop.f32.mrf.mxu0
        %2578 = vdwg.mxu0
        %v2579 = vadd.f32 %v2576, %v2392
        %s2580 = scalar_lea.vmem %s10, 1
        %v2581 = vld [vmem:[%s2580] sm:$0x1]
        %s2582 = scalar_lea.vmem %s11, 1
        %v2583 = vld [vmem:[%s2582] sm:$0x1]
        %v2584 = vsel %vm477, %v2579, 0.0
        %2585 = vadd.xlane.f32.xlu0 %v2584
        %v2586 = vpop.xlane.xlu0 %2585
        %v2587 = vmul.f32 %v2586, %v1511
        %v2588 = vsub.f32 %v2579, %v2587
        %v2589 = vmul.f32 %v2588, %v2588
        %v2590 = vsel %vm477, %v2589, 0.0
        %2591 = vadd.xlane.f32.xlu0 %v2590
        %v2592 = vpop.xlane.xlu0 %2591
        %v2593 = vmul.f32 %v2592, %v1511
        %v2594 = vadd.f32 %v2593, 1e-12
        %v2595 = vrsqrt.pop %v2594
        %v2596 = vmul.f32 %v2588, %v2595
        %v2598 = vlaneseq
        %v2599 = vshrl.u32 %v2598, 7
        %v2600 = vsub.s32 0, %v2599
        %v2601 = vrot.slane %v2581, %v2600
        %v2603 = vmul.f32 %v2596, %v2601
        %v2605 = vlaneseq
        %v2606 = vshrl.u32 %v2605, 7
        %v2607 = vsub.s32 0, %v2606
        %v2608 = vrot.slane %v2583, %v2607
        %v2610 = vadd.f32 %v2603, %v2608
        %v2611 = vld [vmem:[%s12] sm:$0x1]
        %v2612 = vld [vmem:[%s13] sm:$0x1]
        %v2613 = vsel %vm477, %v2610, 0.0
        %2614 = vadd.xlane.f32.xlu0 %v2613
        %v2615 = vpop.xlane.xlu0 %2614
        %v2616 = vmul.f32 %v2615, %v1511
        %v2617 = vsub.f32 %v2610, %v2616
        %v2618 = vmul.f32 %v2617, %v2617
        %v2619 = vsel %vm477, %v2618, 0.0
        %2620 = vadd.xlane.f32.xlu0 %v2619
        %v2621 = vpop.xlane.xlu0 %2620
        %v2622 = vmul.f32 %v2621, %v1511
        %v2623 = vadd.f32 %v2622, 1e-12
        %v2624 = vrsqrt.pop %v2623
        %v2625 = vmul.f32 %v2617, %v2624
        %v2627 = vlaneseq
        %v2628 = vshrl.u32 %v2627, 7
        %v2629 = vsub.s32 0, %v2628
        %v2630 = vrot.slane %v2611, %v2629
        %v2632 = vmul.f32 %v2625, %v2630
        %v2634 = vlaneseq
        %v2635 = vshrl.u32 %v2634, 7
        %v2636 = vsub.s32 0, %v2635
        %v2637 = vrot.slane %v2612, %v2636
        %v2639 = vadd.f32 %v2632, %v2637
        %2640 = vst.msk [vmem:[%s458] sm:$0xff] %vm477, %v2639
        %s2641 = sand.u32 %s335, 1
        %s2642 = scalar_lea.sflag [#allocation3], %s2641
        %s2643 = sand.u32 %s335, 1
        %s2644 = smul.addr %s2643, 8
        %s2645 = scalar_lea.vmem [#allocation2], %s2644
        // Predicated region
        $region77: #{dala_forward.1} parent=75 // pred_check
          %p2646 = pneg %p345
        $region78: #{dala_forward.1} parent=75 // pred_check_branch
          %2648 = sbr.rel (%p2646) target = $region80
        $region79: #{dala_forward.1} parent=75 // pred_region
          %s2650 = ssub.s32 128, 128
          %2651 = vsyncadd %s2642, %s2650
          %s2652 = smul.addr %s28, 128
          %s2653 = scalar_lea.hbm %s14, %s2652
          %s2655 = sshll.u32 %s2645, 4
          %s2656 = int_to_ptr.vmem [resolvable:$true] %s2655
          %2658 = dma.vmem_to_hbm [thread:$0]  %s2656, 128, %s2653, %s2642
        $region80: #{dala_forward.1} parent=75 // pred_fallthru
          _
      $region76: #{dala_forward.1} parent=5 // pred_fallthru
        _
      %p2659 = scmp.le.s32.totalorder 2, %s23
      // Predicated region
      $region81: #{dala_forward.1} parent=5 // pred_check
        %p2660 = pneg %p2659
      $region82: #{dala_forward.1} parent=5 // pred_check_branch
        %2662 = sbr.rel (%p2660) target = $region84
      $region83: #{dala_forward.1} parent=5 // pred_region
        %s2663 = ssub.s32 %s23, 2
        // Predicated region
        $region85: #{dala_forward.1} parent=83 // pred_check
          %p2664 = pneg %p351
        $region86: #{dala_forward.1} parent=83 // pred_check_branch
          %2666 = sbr.rel (%p2664) target = $region88
        $region87: #{dala_forward.1} parent=83 // pred_region
          %s2667 = sand.u32 %s336, 1
          %s2668 = scalar_lea.sflag [#allocation3], %s2667
          %s2669 = sand.u32 %s336, 1
          %s2670 = smul.addr %s2669, 8
          %s2671 = scalar_lea.vmem [#allocation2], %s2670
          %2672 = dma.done %s2668, 128
        $region88: #{dala_forward.1} parent=83 // pred_fallthru
          _
      $region84: #{dala_forward.1} parent=5 // pred_fallthru
        _
    $region6: #{dala_forward.1} parent=1 // loop_footer
      %s27 = sadd.s32 1, %s23
    $region7: #{dala_forward.1} parent=1 // loop_footer_branch
      %22 = sbr.rel target = $region3
    $region8: #{dala_forward.1} parent=1 // loop_exit
      _
    %2673 = vsyncpa [#allocation3], 1
    %s2674 = scalar_lea.sflag [#allocation3], 1
    %2675 = vsyncpa %s2674, 1

</llo_original>
